<compile_context>
chip_gen: v6e
topology: v6e:2x2x1
jax: 0.10.0
libtpu: 0.0.40
codegen_flags: <defaults>
</compile_context>

<pallas_src>
import jax
import jax.numpy as jnp
from jax import lax
from jax.experimental import pallas as pl
from jax.experimental.pallas import tpu as pltpu

LANE = 128


def _round_up(x, m):
    return (x + m - 1) // m * m


# --------------------------- hardware-aware config -------------------------- #

def _detect_vmem_bytes():
    try:
        return int(pltpu.get_tpu_info().vmem_capacity_bytes)
    except Exception:
        # Conservative default: behave like a small-VMEM, multi-core part.
        return 64 * 1024 * 1024


_VMEM_BYTES = _detect_vmem_bytes()
_BIG_VMEM = _VMEM_BYTES >= 100 * 1024 * 1024          # v5e / v6e: 128 MiB, 1 TC
_SPLIT_FOR_MEGACORE = not _BIG_VMEM                    # v7x-class: 64 MiB, 2 TCs
_TM_CAP = 4096 if _BIG_VMEM else 1024
_VMEM_LIMIT = (40 if _BIG_VMEM else 20) * 1024 * 1024

_COMPILER_PARAMS = pltpu.CompilerParams(
    dimension_semantics=("parallel",),
    vmem_limit_bytes=_VMEM_LIMIT,
)


# ------------------------------- Pallas kernel ------------------------------ #

def _matmul_kernel(a_ref, w_ref, y_ref):
    """bf16 x bf16 matmul tile on the MXU, f32 accumulation, bf16 store."""
    y_ref[...] = jnp.dot(
        a_ref[...], w_ref[...], preferred_element_type=jnp.float32
    ).astype(y_ref.dtype)


def _tile_m(m):
    """Biggest M tile that fits VMEM; on 2-TC parts force >= 2 grid steps."""
    mpad = _round_up(m, 8)
    tm = min(_TM_CAP, mpad)
    if _SPLIT_FOR_MEGACORE and mpad >= 16:
        tm = min(tm, _round_up(pl.cdiv(mpad, 2), 8))
    return tm


def _pad_rows(x, tm):
    m = x.shape[0]
    mpad = _round_up(m, tm)
    if mpad != m:
        x = jnp.pad(x, ((0, mpad - m), (0, 0)))
    return x


def pallas_matmul(a, w_mat):
    """a:(M,K) bf16, w_mat:(K,C) bf16  ->  (M,C) bf16 (f32 MXU accumulation)."""
    M, K = a.shape
    C = w_mat.shape[1]
    tm = _tile_m(M)
    a = _pad_rows(a, tm)
    Mpad = a.shape[0]
    nt = Mpad // tm
    cost = pl.CostEstimate(
        flops=2 * Mpad * K * C,
        transcendentals=0,
        bytes_accessed=Mpad * K * 2 + K * C * 2 + Mpad * C * 2,
    )
    out = pl.pallas_call(
        _matmul_kernel,
        out_shape=jax.ShapeDtypeStruct((Mpad, C), jnp.bfloat16),
        grid_spec=pltpu.PrefetchScalarGridSpec(
            num_scalar_prefetch=0,
            grid=(nt,),
            in_specs=[
                pl.BlockSpec((tm, K), lambda i: (i, 0)),
                # Constant block index -> Pallas keeps the weight resident;
                # no per-step re-DMA.
                pl.BlockSpec((K, C), lambda i: (0, 0)),
            ],
            out_specs=pl.BlockSpec((tm, C), lambda i: (i, 0)),
        ),
        compiler_params=_COMPILER_PARAMS,
        cost_estimate=cost,
    )(a, w_mat)
    return out[:M]


# ------------------------------- JAX glue ----------------------------------- #

def conv_transpose_direct(x_nhwc, w_pt, k, stride, padding):
    """Direct ConvTranspose2d: Pallas matmul + col2im overlap-add.

    x_nhwc : (N, H, W, Cin) f32 activation
    w_pt   : PyTorch ConvTranspose2d weight layout (Cin, Cout, kH, kW)
    returns (N, Hout, Wout, Cout) f32 pre-activation (no bias).
    """
    N, H, W, Cin = x_nhwc.shape
    Cout = w_pt.shape[1]
    C = k * k * Cout
    Cpad = _round_up(C, LANE)

    # (Cin, Cout, kh, kw) -> (Cin, kh, kw, Cout) -> (Cin, k*k*Cout); pad lanes.
    w_mat = jnp.transpose(w_pt, (0, 2, 3, 1)).reshape(Cin, C)
    if Cpad != C:
        w_mat = jnp.pad(w_mat, ((0, 0), (0, Cpad - C)))
    w_mat = w_mat.astype(jnp.bfloat16)

    x_flat = x_nhwc.reshape(N * H * W, Cin).astype(jnp.bfloat16)
    y = pallas_matmul(x_flat, w_mat)                       # (M, Cpad) bf16
    y = y[:, :C].astype(jnp.float32).reshape(N, H, W, k, k, Cout)

    # col2im overlap-add: tap (kh, kw) of input (ih, iw) lands at dilated
    # output position (ih*stride + kh, iw*stride + kw); crop `padding` after.
    # TODO(synk): overlap-add stays in XLA glue; an in-kernel version needs
    # overlapping output tiles across grid steps (revisit if glue dominates).
    Hd = (H - 1) * stride + k
    Wd = (W - 1) * stride + k
    out = jnp.zeros((N, Hd, Wd, Cout), jnp.float32)
    for kh in range(k):
        for kw in range(k):
            out = out.at[
                :,
                kh:kh + (H - 1) * stride + 1:stride,
                kw:kw + (W - 1) * stride + 1:stride,
                :,
            ].add(y[:, :, :, kh, kw, :])
    Hout = Hd - 2 * padding
    Wout = Wd - 2 * padding
    return out[:, padding:padding + Hout, padding:padding + Wout, :]


def generator_forward(x_nchw, params, img_channels):
    x = jnp.transpose(x_nchw, (0, 2, 3, 1)).astype(jnp.float32)   # NCHW -> NHWC
    block_cfgs = [(1, 0), (2, 1), (2, 1), (2, 1)]     # (stride, padding) per block

    for idx, (stride, padding) in enumerate(block_cfgs):
        w, gamma, beta = params[f"block{idx}"]
        out = conv_transpose_direct(x, w, 4, stride, padding)
        # BatchNorm2d (training mode, biased batch stats; two-pass variance)
        # + ReLU.  Elementwise epilogue fuses with the next layer's producer.
        mean = jnp.mean(out, axis=(0, 1, 2))
        var = jnp.mean(jnp.square(out - mean), axis=(0, 1, 2))
        scale = gamma * lax.rsqrt(var + 1e-5)
        shift = beta - mean * scale
        x = jnp.maximum(out * scale + shift, 0.0)

    # Final ConvTranspose2d (with bias) + Tanh, applied on real channels only.
    w, b = params["final"]
    out = conv_transpose_direct(x, w, 4, 2, 1)
    img = jnp.tanh(out + b)
    return jnp.transpose(img, (0, 3, 1, 2))           # NHWC -> NCHW


def init_params(key, z_dim, hidden_dim, img_channels):
    """Deterministic DCGAN-style init (~N(0, 0.02)); BN gamma=1, beta=0."""
    dims = [(z_dim, hidden_dim * 8),
            (hidden_dim * 8, hidden_dim * 4),
            (hidden_dim * 4, hidden_dim * 2),
            (hidden_dim * 2, hidden_dim)]
    params = {}
    for idx, (cin, cout) in enumerate(dims):
        key, k1 = jax.random.split(key)
        w = 0.02 * jax.random.normal(k1, (cin, cout, 4, 4), jnp.float32)
        params[f"block{idx}"] = (w,
                                 jnp.ones((cout,), jnp.float32),
                                 jnp.zeros((cout,), jnp.float32))
    key, k1, k2 = jax.random.split(key, 3)
    wf = 0.02 * jax.random.normal(k1, (hidden_dim, img_channels, 4, 4), jnp.float32)
    bf = 0.02 * jax.random.normal(k2, (img_channels,), jnp.float32)
    params["final"] = (wf, bf)
    return params


if __name__ == "__main__":
    Z_DIM, HIDDEN_DIM, IMG_CHANNELS = 16, 8, 3
    BATCH = 2

    key = jax.random.PRNGKey(0)
    key, kz = jax.random.split(key)
    params = init_params(key, Z_DIM, HIDDEN_DIM, IMG_CHANNELS)

    # DCGAN generator input: noise of shape (N, z_dim, 1, 1), NCHW.
    z = jax.random.normal(kz, (BATCH, Z_DIM, 1, 1), jnp.float32)

    fwd = jax.jit(lambda x: generator_forward(x, params, IMG_CHANNELS))
    out = fwd(z)
    jax.block_until_ready(out)

    assert out.shape == (BATCH, IMG_CHANNELS, 64, 64), out.shape
    assert bool(jnp.all(jnp.isfinite(out)))
    assert bool(jnp.all(jnp.abs(out) <= 1.0 + 1e-6))  # tanh range
    print("KERNEL_OK")
</pallas_src>

<mosaic_0001>
module attributes {stable_mosaic.version = 11 : i64} {
  func.func @_matmul_kernel(%arg0: i32, %arg1: memref<8x16xbf16, #tpu.memory_space<vmem>>, %arg2: memref<16x1024xbf16, #tpu.memory_space<vmem>>, %arg3: memref<8x1024xbf16, #tpu.memory_space<vmem>>) attributes {dimension_semantics = [#tpu.dimension_semantics<parallel>], iteration_bounds = array<i64: 1>, scalar_prefetch = 0 : i64, scratch_operands = 0 : i64, tpu.core_type = #tpu.core_type<tc>, window_params = [{transform_indices = @transform_0, window_bounds = array<i64: 8, 16>}, {pipeline_mode = #tpu.pipeline_mode<synchronous>, transform_indices = @transform_1, window_bounds = array<i64: 16, 1024>}, {transform_indices = @transform_2, window_bounds = array<i64: 8, 1024>}]} {
    %c0 = arith.constant 0 : index
    %c0_0 = arith.constant 0 : index
    %0 = vector.load %arg1[%c0, %c0_0] : memref<8x16xbf16, #tpu.memory_space<vmem>>, vector<8x16xbf16>
    %c0_1 = arith.constant 0 : index
    %c0_2 = arith.constant 0 : index
    %1 = vector.load %arg2[%c0_1, %c0_2] : memref<16x1024xbf16, #tpu.memory_space<vmem>>, vector<16x1024xbf16>
    %cst = arith.constant dense<0.000000e+00> : vector<8x1024xf32>
    %2 = tpu.matmul %0, %1, %cst {dimension_numbers = #tpu.dot_dimension_numbers<[1], [0], [0], [1], [0, 0, 1, 1], [], []>} : vector<8x16xbf16>, vector<16x1024xbf16>, vector<8x1024xf32> -> vector<8x1024xf32>
    %3 = arith.truncf %2 : vector<8x1024xf32> to vector<8x1024xbf16>
    %c0_3 = arith.constant 0 : index
    %c0_4 = arith.constant 0 : index
    %4 = vector.load %arg3[%c0_3, %c0_4] : memref<8x1024xbf16, #tpu.memory_space<vmem>>, vector<8x1024xbf16>
    tpu.vector_store %arg3[%c0_3, %c0_4], %3 {strides = array<i32>} : memref<8x1024xbf16, #tpu.memory_space<vmem>>, vector<8x1024xbf16>,
    return
  }
  func.func @transform_0(%arg0: i32) -> (i32, i32) {
    %c0_i32 = arith.constant 0 : i32
    %c0_i32_0 = arith.constant 0 : i32
    return %arg0, %c0_i32 : i32, i32
  }
  func.func @transform_1(%arg0: i32) -> (i32, i32) {
    %c0_i32 = arith.constant 0 : i32
    %c0_i32_0 = arith.constant 0 : i32
    %c0_i32_1 = arith.constant 0 : i32
    return %c0_i32, %c0_i32_0 : i32, i32
  }
  func.func @transform_2(%arg0: i32) -> (i32, i32) {
    %c0_i32 = arith.constant 0 : i32
    %c0_i32_0 = arith.constant 0 : i32
    return %arg0, %c0_i32 : i32, i32
  }
}

module attributes {stable_mosaic.version = 11 : i64} {
  func.func @_matmul_kernel(%arg0: i32, %arg1: memref<16x64xbf16, #tpu.memory_space<vmem>>, %arg2: memref<64x512xbf16, #tpu.memory_space<vmem>>, %arg3: memref<16x512xbf16, #tpu.memory_space<vmem>>) attributes {dimension_semantics = [#tpu.dimension_semantics<parallel>], iteration_bounds = array<i64: 2>, scalar_prefetch = 0 : i64, scratch_operands = 0 : i64, tpu.core_type = #tpu.core_type<tc>, window_params = [{transform_indices = @transform_0, window_bounds = array<i64: 16, 64>}, {pipeline_mode = #tpu.pipeline_mode<synchronous>, transform_indices = @transform_1, window_bounds = array<i64: 64, 512>}, {transform_indices = @transform_2, window_bounds = array<i64: 16, 512>}]} {
    %c0 = arith.constant 0 : index
    %c0_0 = arith.constant 0 : index
    %0 = vector.load %arg1[%c0, %c0_0] : memref<16x64xbf16, #tpu.memory_space<vmem>>, vector<16x64xbf16>
    %c0_1 = arith.constant 0 : index
    %c0_2 = arith.constant 0 : index
    %1 = vector.load %arg2[%c0_1, %c0_2] : memref<64x512xbf16, #tpu.memory_space<vmem>>, vector<64x512xbf16>
    %cst = arith.constant dense<0.000000e+00> : vector<16x512xf32>
    %2 = tpu.matmul %0, %1, %cst {dimension_numbers = #tpu.dot_dimension_numbers<[1], [0], [0], [1], [0, 0, 1, 1], [], []>} : vector<16x64xbf16>, vector<64x512xbf16>, vector<16x512xf32> -> vector<16x512xf32>
    %3 = arith.truncf %2 : vector<16x512xf32> to vector<16x512xbf16>
    %c0_3 = arith.constant 0 : index
    %c0_4 = arith.constant 0 : index
    %4 = vector.load %arg3[%c0_3, %c0_4] : memref<16x512xbf16, #tpu.memory_space<vmem>>, vector<16x512xbf16>
    tpu.vector_store %arg3[%c0_3, %c0_4], %3 {strides = array<i32>} : memref<16x512xbf16, #tpu.memory_space<vmem>>, vector<16x512xbf16>,
    return
  }
  func.func @transform_0(%arg0: i32) -> (i32, i32) {
    %c0_i32 = arith.constant 0 : i32
    %c0_i32_0 = arith.constant 0 : i32
    return %arg0, %c0_i32 : i32, i32
  }
  func.func @transform_1(%arg0: i32) -> (i32, i32) {
    %c0_i32 = arith.constant 0 : i32
    %c0_i32_0 = arith.constant 0 : i32
    %c0_i32_1 = arith.constant 0 : i32
    return %c0_i32, %c0_i32_0 : i32, i32
  }
  func.func @transform_2(%arg0: i32) -> (i32, i32) {
    %c0_i32 = arith.constant 0 : i32
    %c0_i32_0 = arith.constant 0 : i32
    return %arg0, %c0_i32 : i32, i32
  }
}

module attributes {stable_mosaic.version = 11 : i64} {
  func.func @_matmul_kernel(%arg0: i32, %arg1: memref<64x32xbf16, #tpu.memory_space<vmem>>, %arg2: memref<32x256xbf16, #tpu.memory_space<vmem>>, %arg3: memref<64x256xbf16, #tpu.memory_space<vmem>>) attributes {dimension_semantics = [#tpu.dimension_semantics<parallel>], iteration_bounds = array<i64: 2>, scalar_prefetch = 0 : i64, scratch_operands = 0 : i64, tpu.core_type = #tpu.core_type<tc>, window_params = [{transform_indices = @transform_0, window_bounds = array<i64: 64, 32>}, {pipeline_mode = #tpu.pipeline_mode<synchronous>, transform_indices = @transform_1, window_bounds = array<i64: 32, 256>}, {transform_indices = @transform_2, window_bounds = array<i64: 64, 256>}]} {
    %c0 = arith.constant 0 : index
    %c0_0 = arith.constant 0 : index
    %0 = vector.load %arg1[%c0, %c0_0] : memref<64x32xbf16, #tpu.memory_space<vmem>>, vector<64x32xbf16>
    %c0_1 = arith.constant 0 : index
    %c0_2 = arith.constant 0 : index
    %1 = vector.load %arg2[%c0_1, %c0_2] : memref<32x256xbf16, #tpu.memory_space<vmem>>, vector<32x256xbf16>
    %cst = arith.constant dense<0.000000e+00> : vector<64x256xf32>
    %2 = tpu.matmul %0, %1, %cst {dimension_numbers = #tpu.dot_dimension_numbers<[1], [0], [0], [1], [0, 0, 1, 1], [], []>} : vector<64x32xbf16>, vector<32x256xbf16>, vector<64x256xf32> -> vector<64x256xf32>
    %3 = arith.truncf %2 : vector<64x256xf32> to vector<64x256xbf16>
    %c0_3 = arith.constant 0 : index
    %c0_4 = arith.constant 0 : index
    %4 = vector.load %arg3[%c0_3, %c0_4] : memref<64x256xbf16, #tpu.memory_space<vmem>>, vector<64x256xbf16>
    tpu.vector_store %arg3[%c0_3, %c0_4], %3 {strides = array<i32>} : memref<64x256xbf16, #tpu.memory_space<vmem>>, vector<64x256xbf16>,
    return
  }
  func.func @transform_0(%arg0: i32) -> (i32, i32) {
    %c0_i32 = arith.constant 0 : i32
    %c0_i32_0 = arith.constant 0 : i32
    return %arg0, %c0_i32 : i32, i32
  }
  func.func @transform_1(%arg0: i32) -> (i32, i32) {
    %c0_i32 = arith.constant 0 : i32
    %c0_i32_0 = arith.constant 0 : i32
    %c0_i32_1 = arith.constant 0 : i32
    return %c0_i32, %c0_i32_0 : i32, i32
  }
  func.func @transform_2(%arg0: i32) -> (i32, i32) {
    %c0_i32 = arith.constant 0 : i32
    %c0_i32_0 = arith.constant 0 : i32
    return %arg0, %c0_i32 : i32, i32
  }
}

module attributes {stable_mosaic.version = 11 : i64} {
  func.func @_matmul_kernel(%arg0: i32, %arg1: memref<256x16xbf16, #tpu.memory_space<vmem>>, %arg2: memref<16x128xbf16, #tpu.memory_space<vmem>>, %arg3: memref<256x128xbf16, #tpu.memory_space<vmem>>) attributes {dimension_semantics = [#tpu.dimension_semantics<parallel>], iteration_bounds = array<i64: 2>, scalar_prefetch = 0 : i64, scratch_operands = 0 : i64, tpu.core_type = #tpu.core_type<tc>, window_params = [{transform_indices = @transform_0, window_bounds = array<i64: 256, 16>}, {pipeline_mode = #tpu.pipeline_mode<synchronous>, transform_indices = @transform_1, window_bounds = array<i64: 16, 128>}, {transform_indices = @transform_2, window_bounds = array<i64: 256, 128>}]} {
    %c0 = arith.constant 0 : index
    %c0_0 = arith.constant 0 : index
    %0 = vector.load %arg1[%c0, %c0_0] : memref<256x16xbf16, #tpu.memory_space<vmem>>, vector<256x16xbf16>
    %c0_1 = arith.constant 0 : index
    %c0_2 = arith.constant 0 : index
    %1 = vector.load %arg2[%c0_1, %c0_2] : memref<16x128xbf16, #tpu.memory_space<vmem>>, vector<16x128xbf16>
    %cst = arith.constant dense<0.000000e+00> : vector<256x128xf32>
    %2 = tpu.matmul %0, %1, %cst {dimension_numbers = #tpu.dot_dimension_numbers<[1], [0], [0], [1], [0, 0, 1, 1], [], []>} : vector<256x16xbf16>, vector<16x128xbf16>, vector<256x128xf32> -> vector<256x128xf32>
    %3 = arith.truncf %2 : vector<256x128xf32> to vector<256x128xbf16>
    %c0_3 = arith.constant 0 : index
    %c0_4 = arith.constant 0 : index
    %4 = vector.load %arg3[%c0_3, %c0_4] : memref<256x128xbf16, #tpu.memory_space<vmem>>, vector<256x128xbf16>
    tpu.vector_store %arg3[%c0_3, %c0_4], %3 {strides = array<i32>} : memref<256x128xbf16, #tpu.memory_space<vmem>>, vector<256x128xbf16>,
    return
  }
  func.func @transform_0(%arg0: i32) -> (i32, i32) {
    %c0_i32 = arith.constant 0 : i32
    %c0_i32_0 = arith.constant 0 : i32
    return %arg0, %c0_i32 : i32, i32
  }
  func.func @transform_1(%arg0: i32) -> (i32, i32) {
    %c0_i32 = arith.constant 0 : i32
    %c0_i32_0 = arith.constant 0 : i32
    %c0_i32_1 = arith.constant 0 : i32
    return %c0_i32, %c0_i32_0 : i32, i32
  }
  func.func @transform_2(%arg0: i32) -> (i32, i32) {
    %c0_i32 = arith.constant 0 : i32
    %c0_i32_0 = arith.constant 0 : i32
    return %arg0, %c0_i32 : i32, i32
  }
}

module attributes {stable_mosaic.version = 11 : i64} {
  func.func @_matmul_kernel(%arg0: i32, %arg1: memref<1024x8xbf16, #tpu.memory_space<vmem>>, %arg2: memref<8x128xbf16, #tpu.memory_space<vmem>>, %arg3: memref<1024x128xbf16, #tpu.memory_space<vmem>>) attributes {dimension_semantics = [#tpu.dimension_semantics<parallel>], iteration_bounds = array<i64: 2>, scalar_prefetch = 0 : i64, scratch_operands = 0 : i64, tpu.core_type = #tpu.core_type<tc>, window_params = [{transform_indices = @transform_0, window_bounds = array<i64: 1024, 8>}, {pipeline_mode = #tpu.pipeline_mode<synchronous>, transform_indices = @transform_1, window_bounds = array<i64: 8, 128>}, {transform_indices = @transform_2, window_bounds = array<i64: 1024, 128>}]} {
    %c0 = arith.constant 0 : index
    %c0_0 = arith.constant 0 : index
    %0 = vector.load %arg1[%c0, %c0_0] : memref<1024x8xbf16, #tpu.memory_space<vmem>>, vector<1024x8xbf16>
    %c0_1 = arith.constant 0 : index
    %c0_2 = arith.constant 0 : index
    %1 = vector.load %arg2[%c0_1, %c0_2] : memref<8x128xbf16, #tpu.memory_space<vmem>>, vector<8x128xbf16>
    %cst = arith.constant dense<0.000000e+00> : vector<1024x128xf32>
    %2 = tpu.matmul %0, %1, %cst {dimension_numbers = #tpu.dot_dimension_numbers<[1], [0], [0], [1], [0, 0, 1, 1], [], []>} : vector<1024x8xbf16>, vector<8x128xbf16>, vector<1024x128xf32> -> vector<1024x128xf32>
    %3 = arith.truncf %2 : vector<1024x128xf32> to vector<1024x128xbf16>
    %c0_3 = arith.constant 0 : index
    %c0_4 = arith.constant 0 : index
    %4 = vector.load %arg3[%c0_3, %c0_4] : memref<1024x128xbf16, #tpu.memory_space<vmem>>, vector<1024x128xbf16>
    tpu.vector_store %arg3[%c0_3, %c0_4], %3 {strides = array<i32>} : memref<1024x128xbf16, #tpu.memory_space<vmem>>, vector<1024x128xbf16>,
    return
  }
  func.func @transform_0(%arg0: i32) -> (i32, i32) {
    %c0_i32 = arith.constant 0 : i32
    %c0_i32_0 = arith.constant 0 : i32
    return %arg0, %c0_i32 : i32, i32
  }
  func.func @transform_1(%arg0: i32) -> (i32, i32) {
    %c0_i32 = arith.constant 0 : i32
    %c0_i32_0 = arith.constant 0 : i32
    %c0_i32_1 = arith.constant 0 : i32
    return %c0_i32, %c0_i32_0 : i32, i32
  }
  func.func @transform_2(%arg0: i32) -> (i32, i32) {
    %c0_i32 = arith.constant 0 : i32
    %c0_i32_0 = arith.constant 0 : i32
    return %arg0, %c0_i32 : i32, i32
  }
}

</mosaic_0001>

<llo_original>
// kernel: _lambda_.5
$region0: #{_lambda_.5}
  #allocation0 [shape = 'u32[]', space=smem, size = 0x4, offset = 0x4, fixed_abs, tag = 'smem constant byte address 0x4 - core index']
  #allocation1 [shape = 'u32[144,128]{1,0:T(1,128)}', space=vmem, size = 0x12000, scoped, tag = 'internal scratch']
  %s0 = inlined_call_operand.vmem [shape: bf16[8,16], index: 0, kind: input, shape index: {}]
  %s1 = inlined_call_operand.hbm [shape: bf16[16,1024], index: 1, kind: input, shape index: {}]
  %s2 = inlined_call_operand.vmem [shape: bf16[8,1024], index: 2, kind: output, shape index: {}]
  %s3 = sld [smem:[#allocation0]]
  $region22: #{_lambda_.5} parent=0
    _
  %s5 = ssub.s32 1, %s3
  %s6 = scalar_select 0, %s5, %s3
  $region1: #{_lambda_.5} parent=0
    #allocation2 [shape = 'u8[32768]{0}', space=vmem, size = 0x8000, scoped, tag = 'input window, operand 1, single buffered']
    #allocation3 [shape = 's32[1]{0}', space=sflag, size = 0x4, scoped, tag = 'scoped memory for _lambda_.5']
    %7 = vsyncpa [#allocation3], 0
    // Predicated region
    $region2: #{_lambda_.5} parent=1 // pred_check
      _
    $region3: #{_lambda_.5} parent=1 // pred_check_branch
      %9 = sbr.rel (0) target = $region5
    $region4: #{_lambda_.5} parent=1 // pred_region
      _
    $region5: #{_lambda_.5} parent=1 // pred_fallthru
      _
    // Predicated region
    $region6: #{_lambda_.5} parent=1 // pred_check
      _
    $region7: #{_lambda_.5} parent=1 // pred_check_branch
      %11 = sbr.rel (0) target = $region9
    $region8: #{_lambda_.5} parent=1 // pred_region
      %s13 = ssub.s32 1024, 1024
      %14 = vsyncadd [#allocation3], %s13
      %s15 = sshll.u32 [#allocation2], 4
      %s16 = int_to_ptr.vmem [resolvable:$true] %s15
      %21 = dma.hbm_to_vmem [thread:$0]  %s1, 1024, %s16, [#allocation3], 512, 512, 32
    $region9: #{_lambda_.5} parent=1 // pred_fallthru
      _
    // Predicated region
    $region10: #{_lambda_.5} parent=1 // pred_check
      _
    $region11: #{_lambda_.5} parent=1 // pred_check_branch
      %23 = sbr.rel (0) target = $region13
    $region12: #{_lambda_.5} parent=1 // pred_region
      %24 = dma.done [#allocation3], 1024
    $region13: #{_lambda_.5} parent=1 // pred_fallthru
      _
    %v26 = vld [vmem:[%s0] sm:$0xf]
    %v27 = vld [vmem:[#allocation2] sm:$0xff]
    %v28 = vld [vmem:[#allocation2 + $0x8] sm:$0xff]
    %v29 = vld [vmem:[#allocation2 + $0x10] sm:$0xff]
    %v30 = vld [vmem:[#allocation2 + $0x18] sm:$0xff]
    %v31 = vld [vmem:[#allocation2 + $0x20] sm:$0xff]
    %v32 = vld [vmem:[#allocation2 + $0x28] sm:$0xff]
    %v33 = vld [vmem:[#allocation2 + $0x30] sm:$0xff]
    %v34 = vld [vmem:[#allocation2 + $0x38] sm:$0xff]
    %v43 = vunpack.c.l.b16 %v27
    %v44 = vunpack.c.h.b16 %v27
    %v45 = vunpack.c.l.b16 %v28
    %v46 = vunpack.c.h.b16 %v28
    %v47 = vunpack.c.l.b16 %v29
    %v48 = vunpack.c.h.b16 %v29
    %v49 = vunpack.c.l.b16 %v30
    %v50 = vunpack.c.h.b16 %v30
    %v51 = vunpack.c.l.b16 %v31
    %v52 = vunpack.c.h.b16 %v31
    %v53 = vunpack.c.l.b16 %v32
    %v54 = vunpack.c.h.b16 %v32
    %v55 = vunpack.c.l.b16 %v33
    %v56 = vunpack.c.h.b16 %v33
    %v57 = vunpack.c.l.b16 %v34
    %v58 = vunpack.c.h.b16 %v34
    %v59 = vpack.c.b16 %v51, %v43
    %v60 = vpack.c.b16 %v52, %v44
    %v61 = vpack.c.b16 %v53, %v45
    %v62 = vpack.c.b16 %v54, %v46
    %v63 = vpack.c.b16 %v55, %v47
    %v64 = vpack.c.b16 %v56, %v48
    %v65 = vpack.c.b16 %v57, %v49
    %v66 = vpack.c.b16 %v58, %v50
    %vm75 = vcmask 130048
    %v77 = vsel %vm75, %v26, 0
    %79 = vmatprep.subr.bf16.mxu0 0
    %80 = vmatpush1.bf16.msra.mxu0 0
    %81 = vmatprep.subr.bf16.mxu0 0
    %82 = vmatpush1.bf16.msra.mxu0 0
    %83 = vmatprep.subr.bf16.mxu0 0
    %84 = vmatpush1.bf16.msra.mxu0 0
    %85 = vmatprep.subr.bf16.mxu0 0
    %86 = vmatpush1.bf16.msra.mxu0 0
    %87 = vmatprep.subr.bf16.mxu0 0
    %88 = vmatpush1.bf16.msra.mxu0 0
    %89 = vmatprep.subr.bf16.mxu0 0
    %90 = vmatpush1.bf16.msra.mxu0 0
    %91 = vmatprep.subr.bf16.mxu0 0
    %92 = vmatpush1.bf16.msra.mxu0 0
    %93 = vmatprep.subr.bf16.mxu0 %v60
    %94 = vmatpush1.bf16.msra.mxu0 %v59
    %95 = vmatprep.subr.bf16.mxu0 0
    %96 = vmatpush2.bf16.msra.mxu0 0
    %97 = vmatprep.subr.bf16.mxu0 0
    %98 = vmatpush2.bf16.msra.mxu0 0
    %99 = vmatprep.subr.bf16.mxu0 0
    %100 = vmatpush2.bf16.msra.mxu0 0
    %101 = vmatprep.subr.bf16.mxu0 0
    %102 = vmatpush2.bf16.msra.mxu0 0
    %103 = vmatprep.subr.bf16.mxu0 0
    %104 = vmatpush2.bf16.msra.mxu0 0
    %105 = vmatprep.subr.bf16.mxu0 0
    %106 = vmatpush2.bf16.msra.mxu0 0
    %107 = vmatprep.subr.bf16.mxu0 0
    %108 = vmatpush2.bf16.msra.mxu0 0
    %109 = vmatprep.subr.bf16.mxu0 0
    %110 = vmatpush2.bf16.msra.mxu0 0
    %111 = vmatprep.mubr.bf16.mxu0 0
    %112 = vmatmul.mubr.bf16.gmra.mxu0 %v77
    %v113 = vpop.f32.mrf.mxu0
    %v114 = vadd.f32 0.0, %v113
    %v115 = vpop.f32.mrf.mxu0
    %v116 = vadd.f32 0.0, %v115
    %v117 = vpop.f32.mrf.mxu0
    %v118 = vpop.f32.mrf.mxu0
    %119 = vdwg.mxu0
    %120 = vmatprep.subr.bf16.mxu0 0
    %121 = vmatpush1.bf16.msra.mxu0 0
    %122 = vmatprep.subr.bf16.mxu0 0
    %123 = vmatpush1.bf16.msra.mxu0 0
    %124 = vmatprep.subr.bf16.mxu0 0
    %125 = vmatpush1.bf16.msra.mxu0 0
    %126 = vmatprep.subr.bf16.mxu0 0
    %127 = vmatpush1.bf16.msra.mxu0 0
    %128 = vmatprep.subr.bf16.mxu0 0
    %129 = vmatpush1.bf16.msra.mxu0 0
    %130 = vmatprep.subr.bf16.mxu0 0
    %131 = vmatpush1.bf16.msra.mxu0 0
    %132 = vmatprep.subr.bf16.mxu0 0
    %133 = vmatpush1.bf16.msra.mxu0 0
    %134 = vmatprep.subr.bf16.mxu0 %v62
    %135 = vmatpush1.bf16.msra.mxu0 %v61
    %136 = vmatprep.subr.bf16.mxu0 0
    %137 = vmatpush2.bf16.msra.mxu0 0
    %138 = vmatprep.subr.bf16.mxu0 0
    %139 = vmatpush2.bf16.msra.mxu0 0
    %140 = vmatprep.subr.bf16.mxu0 0
    %141 = vmatpush2.bf16.msra.mxu0 0
    %142 = vmatprep.subr.bf16.mxu0 0
    %143 = vmatpush2.bf16.msra.mxu0 0
    %144 = vmatprep.subr.bf16.mxu0 0
    %145 = vmatpush2.bf16.msra.mxu0 0
    %146 = vmatprep.subr.bf16.mxu0 0
    %147 = vmatpush2.bf16.msra.mxu0 0
    %148 = vmatprep.subr.bf16.mxu0 0
    %149 = vmatpush2.bf16.msra.mxu0 0
    %150 = vmatprep.subr.bf16.mxu0 0
    %151 = vmatpush2.bf16.msra.mxu0 0
    %152 = vmatprep.mubr.bf16.mxu0 0
    %153 = vmatmul.mubr.bf16.gmra.mxu0 %v77
    %v154 = vpop.f32.mrf.mxu0
    %v155 = vadd.f32 0.0, %v154
    %v156 = vpop.f32.mrf.mxu0
    %v157 = vadd.f32 0.0, %v156
    %v158 = vpop.f32.mrf.mxu0
    %v159 = vpop.f32.mrf.mxu0
    %160 = vdwg.mxu0
    %161 = vmatprep.subr.bf16.mxu0 0
    %162 = vmatpush1.bf16.msra.mxu0 0
    %163 = vmatprep.subr.bf16.mxu0 0
    %164 = vmatpush1.bf16.msra.mxu0 0
    %165 = vmatprep.subr.bf16.mxu0 0
    %166 = vmatpush1.bf16.msra.mxu0 0
    %167 = vmatprep.subr.bf16.mxu0 0
    %168 = vmatpush1.bf16.msra.mxu0 0
    %169 = vmatprep.subr.bf16.mxu0 0
    %170 = vmatpush1.bf16.msra.mxu0 0
    %171 = vmatprep.subr.bf16.mxu0 0
    %172 = vmatpush1.bf16.msra.mxu0 0
    %173 = vmatprep.subr.bf16.mxu0 0
    %174 = vmatpush1.bf16.msra.mxu0 0
    %175 = vmatprep.subr.bf16.mxu0 %v64
    %176 = vmatpush1.bf16.msra.mxu0 %v63
    %177 = vmatprep.subr.bf16.mxu0 0
    %178 = vmatpush2.bf16.msra.mxu0 0
    %179 = vmatprep.subr.bf16.mxu0 0
    %180 = vmatpush2.bf16.msra.mxu0 0
    %181 = vmatprep.subr.bf16.mxu0 0
    %182 = vmatpush2.bf16.msra.mxu0 0
    %183 = vmatprep.subr.bf16.mxu0 0
    %184 = vmatpush2.bf16.msra.mxu0 0
    %185 = vmatprep.subr.bf16.mxu0 0
    %186 = vmatpush2.bf16.msra.mxu0 0
    %187 = vmatprep.subr.bf16.mxu0 0
    %188 = vmatpush2.bf16.msra.mxu0 0
    %189 = vmatprep.subr.bf16.mxu0 0
    %190 = vmatpush2.bf16.msra.mxu0 0
    %191 = vmatprep.subr.bf16.mxu0 0
    %192 = vmatpush2.bf16.msra.mxu0 0
    %193 = vmatprep.mubr.bf16.mxu0 0
    %194 = vmatmul.mubr.bf16.gmra.mxu0 %v77
    %v195 = vpop.f32.mrf.mxu0
    %v196 = vadd.f32 0.0, %v195
    %v197 = vpop.f32.mrf.mxu0
    %v198 = vadd.f32 0.0, %v197
    %v199 = vpop.f32.mrf.mxu0
    %v200 = vpop.f32.mrf.mxu0
    %201 = vdwg.mxu0
    %202 = vmatprep.subr.bf16.mxu0 0
    %203 = vmatpush1.bf16.msra.mxu0 0
    %204 = vmatprep.subr.bf16.mxu0 0
    %205 = vmatpush1.bf16.msra.mxu0 0
    %206 = vmatprep.subr.bf16.mxu0 0
    %207 = vmatpush1.bf16.msra.mxu0 0
    %208 = vmatprep.subr.bf16.mxu0 0
    %209 = vmatpush1.bf16.msra.mxu0 0
    %210 = vmatprep.subr.bf16.mxu0 0
    %211 = vmatpush1.bf16.msra.mxu0 0
    %212 = vmatprep.subr.bf16.mxu0 0
    %213 = vmatpush1.bf16.msra.mxu0 0
    %214 = vmatprep.subr.bf16.mxu0 0
    %215 = vmatpush1.bf16.msra.mxu0 0
    %216 = vmatprep.subr.bf16.mxu0 %v66
    %217 = vmatpush1.bf16.msra.mxu0 %v65
    %218 = vmatprep.subr.bf16.mxu0 0
    %219 = vmatpush2.bf16.msra.mxu0 0
    %220 = vmatprep.subr.bf16.mxu0 0
    %221 = vmatpush2.bf16.msra.mxu0 0
    %222 = vmatprep.subr.bf16.mxu0 0
    %223 = vmatpush2.bf16.msra.mxu0 0
    %224 = vmatprep.subr.bf16.mxu0 0
    %225 = vmatpush2.bf16.msra.mxu0 0
    %226 = vmatprep.subr.bf16.mxu0 0
    %227 = vmatpush2.bf16.msra.mxu0 0
    %228 = vmatprep.subr.bf16.mxu0 0
    %229 = vmatpush2.bf16.msra.mxu0 0
    %230 = vmatprep.subr.bf16.mxu0 0
    %231 = vmatpush2.bf16.msra.mxu0 0
    %232 = vmatprep.subr.bf16.mxu0 0
    %233 = vmatpush2.bf16.msra.mxu0 0
    %234 = vmatprep.mubr.bf16.mxu0 0
    %235 = vmatmul.mubr.bf16.gmra.mxu0 %v77
    %v236 = vpop.f32.mrf.mxu0
    %v237 = vadd.f32 0.0, %v236
    %v238 = vpop.f32.mrf.mxu0
    %v239 = vadd.f32 0.0, %v238
    %v240 = vpop.f32.mrf.mxu0
    %v241 = vpop.f32.mrf.mxu0
    %242 = vdwg.mxu0
    %v243 = vpack.c.bf16 %v114, %v114
    %v244 = vpack.c.bf16 %v116, %v116
    %v245 = vpack.c.bf16 %v155, %v155
    %v246 = vpack.c.bf16 %v157, %v157
    %v247 = vpack.c.bf16 %v196, %v196
    %v248 = vpack.c.bf16 %v198, %v198
    %v249 = vpack.c.bf16 %v237, %v237
    %v250 = vpack.c.bf16 %v239, %v239
    %v259 = vunpack.c.l.b16 %v243
    %v260 = vunpack.c.l.b16 %v244
    %v261 = vunpack.c.l.b16 %v245
    %v262 = vunpack.c.l.b16 %v246
    %v263 = vunpack.c.l.b16 %v247
    %v264 = vunpack.c.l.b16 %v248
    %v265 = vunpack.c.l.b16 %v249
    %v266 = vunpack.c.l.b16 %v250
    %v267 = vpack.c.b16 %v260, %v259
    %v268 = vpack.c.b16 %v262, %v261
    %v269 = vpack.c.b16 %v264, %v263
    %v270 = vpack.c.b16 %v266, %v265
    %275 = vst [vmem:[%s2] sm:$0xff] %v267
    %276 = vst [vmem:[%s2 + $0x8] sm:$0xff] %v268
    %277 = vst [vmem:[%s2 + $0x10] sm:$0xff] %v269
    %278 = vst [vmem:[%s2 + $0x18] sm:$0xff] %v270
    // Predicated region
    $region14: #{_lambda_.5} parent=1 // pred_check
      _
    $region15: #{_lambda_.5} parent=1 // pred_check_branch
      %280 = sbr.rel (0) target = $region17
    $region16: #{_lambda_.5} parent=1 // pred_region
      _
    $region17: #{_lambda_.5} parent=1 // pred_fallthru
      _
    // Predicated region
    $region18: #{_lambda_.5} parent=1 // pred_check
      _
    $region19: #{_lambda_.5} parent=1 // pred_check_branch
      %282 = sbr.rel (0) target = $region21
    $region20: #{_lambda_.5} parent=1 // pred_region
      _
    $region21: #{_lambda_.5} parent=1 // pred_fallthru
      _
    %283 = vsyncpa [#allocation3], 1

// kernel: _lambda_.6
$region0: #{_lambda_.6}
  #allocation0 [shape = 'u32[]', space=smem, size = 0x4, offset = 0x4, fixed_abs, tag = 'smem constant byte address 0x4 - core index']
  #allocation1 [shape = 'u32[144,128]{1,0:T(1,128)}', space=vmem, size = 0x12000, scoped, tag = 'internal scratch']
  %s0 = inlined_call_operand.vmem [shape: bf16[32,64], index: 0, kind: input, shape index: {}]
  %s1 = inlined_call_operand.hbm [shape: bf16[64,512], index: 1, kind: input, shape index: {}]
  %s2 = inlined_call_operand.vmem [shape: bf16[32,512], index: 2, kind: output, shape index: {}]
  %s3 = sld [smem:[#allocation0]]
  $region45: #{_lambda_.6} parent=0
    _
  %s5 = ssub.s32 1, %s3
  %s6 = scalar_select 0, %s5, %s3
  $region1: #{_lambda_.6} parent=0
    #allocation2 [shape = 'u8[65536]{0}', space=vmem, size = 0x10000, scoped, tag = 'input window, operand 1, single buffered']
    #allocation3 [shape = 's32[2]{0}', space=sflag, size = 0x8, scoped, tag = 'scoped memory for _lambda_.6']
    %7 = vsyncpa [#allocation3], 0
    loop: start=0, step=1, limit=4
    $region2: #{_lambda_.6} parent=1 // loop_pre_header
      _
    $region3: #{_lambda_.6} parent=1 // loop_header
      %s9 = sphi 0, %s13
      %p10 = scmp.ge.s32.totalorder %s9, 4
      %s19 = sphi 0, %s21
      %s22 = sphi 0, %s19
      %s23 = sphi 0, %s22
      %s39 = sphi 0, %s23
      %s43 = sphi 0, %s43
      %s45 = sphi 0, %s43
      %s46 = sphi 0, %s45
      %s60 = sphi 0, %s46
      %s66 = sphi 0, %s68
      %s69 = sphi 0, %s66
      %s70 = sphi 0, %s69
      %s86 = sphi 0, %s70
    $region4: #{_lambda_.6} parent=1 // loop_header_branch
      %12 = sbr.rel (%p10) target = $region8
    $region5: #{_lambda_.6} parent=1 // loop_body
      %s14 = ssub.s32 %s9, 1
      %s15 = ssub.s32 %s9, 2
      %s16 = sadd.s32 %s9, 1
      %s17 = ssub.s32 %s9, %s16
      %p18 = scmp.eq.s32.totalorder %s17, 0
      %s20 = sadd.s32 %s19, 1
      %s21 = scalar_select %p18, %s19, %s20
      %p24 = pneg %p18
      %p25 = scmp.eq.s32.totalorder %s9, 1
      %p26 = por %p24, %p25
      %p27 = scmp.ne.s32.totalorder %s19, %s22
      %p28 = scmp.eq.s32.totalorder %s9, 0
      %p29 = por %p27, %p28
      %p30 = scmp.ne.s32.totalorder %s19, %s22
      %p31 = scmp.eq.s32.totalorder %s14, 1
      %p32 = por %p30, %p31
      %p33 = scmp.ne.s32.totalorder %s22, %s23
      %p34 = scmp.eq.s32.totalorder %s14, 0
      %p35 = por %p33, %p34
      %p36 = scmp.ne.s32.totalorder %s22, %s23
      %p37 = scmp.eq.s32.totalorder %s15, 1
      %p38 = por %p36, %p37
      %p40 = scmp.ne.s32.totalorder %s23, %s39
      %p41 = scmp.eq.s32.totalorder %s15, 0
      %p42 = por %p40, %p41
      %s44 = sadd.s32 %s43, 1
      %p47 = scmp.eq.s32.totalorder %s9, 1
      %p48 = scmp.ne.s32.totalorder %s43, %s45
      %p49 = scmp.eq.s32.totalorder %s9, 0
      %p50 = por %p48, %p49
      %p51 = scmp.ne.s32.totalorder %s43, %s45
      %p52 = scmp.eq.s32.totalorder %s14, 1
      %p53 = por %p51, %p52
      %p54 = scmp.ne.s32.totalorder %s45, %s46
      %p55 = scmp.eq.s32.totalorder %s14, 0
      %p56 = por %p54, %p55
      %p57 = scmp.ne.s32.totalorder %s45, %s46
      %p58 = scmp.eq.s32.totalorder %s15, 1
      %p59 = por %p57, %p58
      %p61 = scmp.ne.s32.totalorder %s46, %s60
      %p62 = scmp.eq.s32.totalorder %s15, 0
      %p63 = por %p61, %p62
      %s64 = ssub.s32 %s9, %s16
      %p65 = scmp.eq.s32.totalorder %s64, 0
      %s67 = sadd.s32 %s66, 1
      %s68 = scalar_select %p65, %s66, %s67
      %p71 = pneg %p65
      %p72 = scmp.eq.s32.totalorder %s9, 1
      %p73 = por %p71, %p72
      %p74 = scmp.ne.s32.totalorder %s66, %s69
      %p75 = scmp.eq.s32.totalorder %s9, 0
      %p76 = por %p74, %p75
      %p77 = scmp.ne.s32.totalorder %s66, %s69
      %p78 = scmp.eq.s32.totalorder %s14, 1
      %p79 = por %p77, %p78
      %p80 = scmp.ne.s32.totalorder %s69, %s70
      %p81 = scmp.eq.s32.totalorder %s14, 0
      %p82 = por %p80, %p81
      %p83 = scmp.ne.s32.totalorder %s69, %s70
      %p84 = scmp.eq.s32.totalorder %s15, 1
      %p85 = por %p83, %p84
      %p87 = scmp.ne.s32.totalorder %s70, %s86
      %p88 = scmp.eq.s32.totalorder %s15, 0
      %p89 = por %p87, %p88
      %p90 = scmp.le.s32.totalorder 1, %s9
      %p91 = scmp.lt.s32.totalorder %s9, 3
      %p92 = pnand %p90, %p91
      %p93 = pneg %p92
      // Predicated region
      $region9: #{_lambda_.6} parent=5 // pred_check
        _
      $region10: #{_lambda_.6} parent=5 // pred_check_branch
        %95 = sbr.rel (%p92) target = $region12
      $region11: #{_lambda_.6} parent=5 // pred_region
        %s96 = ssub.s32 %s9, 1
        // Predicated region
        $region13: #{_lambda_.6} parent=11 // pred_check
          %p97 = pneg %p56
        $region14: #{_lambda_.6} parent=11 // pred_check_branch
          %99 = sbr.rel (%p97) target = $region16
        $region15: #{_lambda_.6} parent=11 // pred_region
          %s101 = ssub.s32 2048, 2048
          %102 = vsyncadd [#allocation3], %s101
          %s103 = sshll.u32 [#allocation2], 4
          %s104 = int_to_ptr.vmem [resolvable:$true] %s103
          %109 = dma.hbm_to_vmem [thread:$0]  %s1, 2048, %s104, [#allocation3], 256, 256, 16
        $region16: #{_lambda_.6} parent=11 // pred_fallthru
          _
      $region12: #{_lambda_.6} parent=5 // pred_fallthru
        _
      %p110 = scmp.lt.s32.totalorder %s9, 2
      // Predicated region
      $region17: #{_lambda_.6} parent=5 // pred_check
        %p111 = pneg %p110
      $region18: #{_lambda_.6} parent=5 // pred_check_branch
        %113 = sbr.rel (%p111) target = $region20
      $region19: #{_lambda_.6} parent=5 // pred_region
        // Predicated region
        $region21: #{_lambda_.6} parent=19 // pred_check
          %p114 = pneg %p29
        $region22: #{_lambda_.6} parent=19 // pred_check_branch
          %116 = sbr.rel (%p114) target = $region24
        $region23: #{_lambda_.6} parent=19 // pred_region
          %s117 = smul.u32 2, %s9
          %p118 = scmp.lt.s32.totalorder %s117, 3
          %s119 = scalar_select %p118, %s117, 3
          %s120 = smul.addr %s119, 4
          %s121 = scalar_lea.vmem %s0, %s120
          %s122 = smul.u32 2, %s9
        $region24: #{_lambda_.6} parent=19 // pred_fallthru
          _
      $region20: #{_lambda_.6} parent=5 // pred_fallthru
        _
      %p123 = scmp.le.s32.totalorder 1, %s9
      %p124 = scmp.lt.s32.totalorder %s9, 3
      %p125 = pnand %p123, %p124
      %p126 = pneg %p125
      // Predicated region
      $region25: #{_lambda_.6} parent=5 // pred_check
        _
      $region26: #{_lambda_.6} parent=5 // pred_check_branch
        %128 = sbr.rel (%p125) target = $region28
      $region27: #{_lambda_.6} parent=5 // pred_region
        %s129 = ssub.s32 %s9, 1
        // Predicated region
        $region29: #{_lambda_.6} parent=27 // pred_check
          %p130 = pneg %p56
        $region30: #{_lambda_.6} parent=27 // pred_check_branch
          %132 = sbr.rel (%p130) target = $region32
        $region31: #{_lambda_.6} parent=27 // pred_region
          %133 = dma.done [#allocation3], 2048
        $region32: #{_lambda_.6} parent=27 // pred_fallthru
          _
        %s134 = smul.u32 2, %s14
        %p135 = scmp.lt.s32.totalorder %s134, 3
        %s136 = scalar_select %p135, %s134, 3
        %s137 = smul.addr %s136, 4
        %s138 = scalar_lea.vmem %s0, %s137
        %p139 = pneg %p35
        %p140 = pneg %p32
        %p141 = pneg %p56
        %p142 = pneg %p53
        %p143 = pneg %p82
        %p144 = pneg %p79
        %s145 = smul.u32 2, %s14
        %p146 = scmp.lt.s32.totalorder %s145, 3
        %s147 = scalar_select %p146, %s145, 3
        %s148 = smul.addr %s147, 4
        %s149 = smul.addr %s148, 4
        %s150 = scalar_lea.vmem %s2, %s149
        %s151 = smul.u32 2, %s14
        %p152 = scmp.lt.s32.totalorder %s151, 3
        %s153 = scalar_select %p152, %s151, 3
        %s154 = smul.addr %s153, 4
        %s155 = scalar_lea.vmem %s0, %s154
        %s156 = smul.u32 2, %s14
        %s157 = smul.u32 2, %s14
        %p158 = scmp.lt.s32.totalorder %s157, 3
        %s159 = scalar_select %p158, %s157, 3
        %s160 = smul.addr %s159, 4
        %s161 = smul.addr %s160, 4
        %s162 = scalar_lea.vmem %s2, %s161
        %s163 = smul.u32 2, %s14
        %v165 = vld [vmem:[%s155] sm:$0xf]
        %v166 = vld [vmem:[%s155 + $0x4] sm:$0xf]
        %v167 = vld [vmem:[#allocation2] sm:$0xff]
        %v168 = vld [vmem:[#allocation2 + $0x8] sm:$0xff]
        %v169 = vld [vmem:[#allocation2 + $0x10] sm:$0xff]
        %v170 = vld [vmem:[#allocation2 + $0x18] sm:$0xff]
        %v171 = vld [vmem:[#allocation2 + $0x20] sm:$0xff]
        %v172 = vld [vmem:[#allocation2 + $0x28] sm:$0xff]
        %v173 = vld [vmem:[#allocation2 + $0x30] sm:$0xff]
        %v174 = vld [vmem:[#allocation2 + $0x38] sm:$0xff]
        %v175 = vld [vmem:[#allocation2 + $0x40] sm:$0xff]
        %v176 = vld [vmem:[#allocation2 + $0x48] sm:$0xff]
        %v177 = vld [vmem:[#allocation2 + $0x50] sm:$0xff]
        %v178 = vld [vmem:[#allocation2 + $0x58] sm:$0xff]
        %v179 = vld [vmem:[#allocation2 + $0x60] sm:$0xff]
        %v180 = vld [vmem:[#allocation2 + $0x68] sm:$0xff]
        %v181 = vld [vmem:[#allocation2 + $0x70] sm:$0xff]
        %v182 = vld [vmem:[#allocation2 + $0x78] sm:$0xff]
        %v185 = vunpack.c.l.b16 %v165
        %v186 = vunpack.c.l.b16 %v166
        %v187 = vpack.c.b16 %v186, %v185
        %v204 = vunpack.c.l.b16 %v167
        %v205 = vunpack.c.h.b16 %v167
        %v206 = vunpack.c.l.b16 %v168
        %v207 = vunpack.c.h.b16 %v168
        %v208 = vunpack.c.l.b16 %v169
        %v209 = vunpack.c.h.b16 %v169
        %v210 = vunpack.c.l.b16 %v170
        %v211 = vunpack.c.h.b16 %v170
        %v212 = vunpack.c.l.b16 %v171
        %v213 = vunpack.c.h.b16 %v171
        %v214 = vunpack.c.l.b16 %v172
        %v215 = vunpack.c.h.b16 %v172
        %v216 = vunpack.c.l.b16 %v173
        %v217 = vunpack.c.h.b16 %v173
        %v218 = vunpack.c.l.b16 %v174
        %v219 = vunpack.c.h.b16 %v174
        %v220 = vunpack.c.l.b16 %v175
        %v221 = vunpack.c.h.b16 %v175
        %v222 = vunpack.c.l.b16 %v176
        %v223 = vunpack.c.h.b16 %v176
        %v224 = vunpack.c.l.b16 %v177
        %v225 = vunpack.c.h.b16 %v177
        %v226 = vunpack.c.l.b16 %v178
        %v227 = vunpack.c.h.b16 %v178
        %v228 = vunpack.c.l.b16 %v179
        %v229 = vunpack.c.h.b16 %v179
        %v230 = vunpack.c.l.b16 %v180
        %v231 = vunpack.c.h.b16 %v180
        %v232 = vunpack.c.l.b16 %v181
        %v233 = vunpack.c.h.b16 %v181
        %v234 = vunpack.c.l.b16 %v182
        %v235 = vunpack.c.h.b16 %v182
        %v236 = vpack.c.b16 %v208, %v204
        %v237 = vpack.c.b16 %v209, %v205
        %v238 = vpack.c.b16 %v210, %v206
        %v239 = vpack.c.b16 %v211, %v207
        %v240 = vpack.c.b16 %v216, %v212
        %v241 = vpack.c.b16 %v217, %v213
        %v242 = vpack.c.b16 %v218, %v214
        %v243 = vpack.c.b16 %v219, %v215
        %v244 = vpack.c.b16 %v224, %v220
        %v245 = vpack.c.b16 %v225, %v221
        %v246 = vpack.c.b16 %v226, %v222
        %v247 = vpack.c.b16 %v227, %v223
        %v248 = vpack.c.b16 %v232, %v228
        %v249 = vpack.c.b16 %v233, %v229
        %v250 = vpack.c.b16 %v234, %v230
        %v251 = vpack.c.b16 %v235, %v231
        %vm268 = vcmask 523264
        %v270 = vsel %vm268, %v187, 0
        %272 = vmatprep.subr.bf16.mxu0 0
        %273 = vmatpush1.bf16.msra.mxu0 0
        %274 = vmatprep.subr.bf16.mxu0 0
        %275 = vmatpush1.bf16.msra.mxu0 0
        %276 = vmatprep.subr.bf16.mxu0 0
        %277 = vmatpush1.bf16.msra.mxu0 0
        %278 = vmatprep.subr.bf16.mxu0 0
        %279 = vmatpush1.bf16.msra.mxu0 0
        %280 = vmatprep.subr.bf16.mxu0 %v249
        %281 = vmatpush1.bf16.msra.mxu0 %v248
        %282 = vmatprep.subr.bf16.mxu0 %v245
        %283 = vmatpush1.bf16.msra.mxu0 %v244
        %284 = vmatprep.subr.bf16.mxu0 %v241
        %285 = vmatpush1.bf16.msra.mxu0 %v240
        %286 = vmatprep.subr.bf16.mxu0 %v237
        %287 = vmatpush1.bf16.msra.mxu0 %v236
        %288 = vmatprep.subr.bf16.mxu0 0
        %289 = vmatpush2.bf16.msra.mxu0 0
        %290 = vmatprep.subr.bf16.mxu0 0
        %291 = vmatpush2.bf16.msra.mxu0 0
        %292 = vmatprep.subr.bf16.mxu0 0
        %293 = vmatpush2.bf16.msra.mxu0 0
        %294 = vmatprep.subr.bf16.mxu0 0
        %295 = vmatpush2.bf16.msra.mxu0 0
        %296 = vmatprep.subr.bf16.mxu0 0
        %297 = vmatpush2.bf16.msra.mxu0 0
        %298 = vmatprep.subr.bf16.mxu0 0
        %299 = vmatpush2.bf16.msra.mxu0 0
        %300 = vmatprep.subr.bf16.mxu0 0
        %301 = vmatpush2.bf16.msra.mxu0 0
        %302 = vmatprep.subr.bf16.mxu0 0
        %303 = vmatpush2.bf16.msra.mxu0 0
        %304 = vmatprep.mubr.bf16.mxu0 0
        %305 = vmatmul.mubr.bf16.gmra.mxu0 %v270
        %v306 = vpop.f32.mrf.mxu0
        %v307 = vadd.f32 0.0, %v306
        %v308 = vpop.f32.mrf.mxu0
        %v309 = vadd.f32 0.0, %v308
        %v310 = vpop.f32.mrf.mxu0
        %v311 = vadd.f32 0.0, %v310
        %v312 = vpop.f32.mrf.mxu0
        %v313 = vadd.f32 0.0, %v312
        %314 = vdwg.mxu0
        %315 = vmatprep.subr.bf16.mxu0 0
        %316 = vmatpush1.bf16.msra.mxu0 0
        %317 = vmatprep.subr.bf16.mxu0 0
        %318 = vmatpush1.bf16.msra.mxu0 0
        %319 = vmatprep.subr.bf16.mxu0 0
        %320 = vmatpush1.bf16.msra.mxu0 0
        %321 = vmatprep.subr.bf16.mxu0 0
        %322 = vmatpush1.bf16.msra.mxu0 0
        %323 = vmatprep.subr.bf16.mxu0 %v251
        %324 = vmatpush1.bf16.msra.mxu0 %v250
        %325 = vmatprep.subr.bf16.mxu0 %v247
        %326 = vmatpush1.bf16.msra.mxu0 %v246
        %327 = vmatprep.subr.bf16.mxu0 %v243
        %328 = vmatpush1.bf16.msra.mxu0 %v242
        %329 = vmatprep.subr.bf16.mxu0 %v239
        %330 = vmatpush1.bf16.msra.mxu0 %v238
        %331 = vmatprep.subr.bf16.mxu0 0
        %332 = vmatpush2.bf16.msra.mxu0 0
        %333 = vmatprep.subr.bf16.mxu0 0
        %334 = vmatpush2.bf16.msra.mxu0 0
        %335 = vmatprep.subr.bf16.mxu0 0
        %336 = vmatpush2.bf16.msra.mxu0 0
        %337 = vmatprep.subr.bf16.mxu0 0
        %338 = vmatpush2.bf16.msra.mxu0 0
        %339 = vmatprep.subr.bf16.mxu0 0
        %340 = vmatpush2.bf16.msra.mxu0 0
        %341 = vmatprep.subr.bf16.mxu0 0
        %342 = vmatpush2.bf16.msra.mxu0 0
        %343 = vmatprep.subr.bf16.mxu0 0
        %344 = vmatpush2.bf16.msra.mxu0 0
        %345 = vmatprep.subr.bf16.mxu0 0
        %346 = vmatpush2.bf16.msra.mxu0 0
        %347 = vmatprep.mubr.bf16.mxu0 0
        %348 = vmatmul.mubr.bf16.gmra.mxu0 %v270
        %v349 = vpop.f32.mrf.mxu0
        %v350 = vadd.f32 0.0, %v349
        %v351 = vpop.f32.mrf.mxu0
        %v352 = vadd.f32 0.0, %v351
        %v353 = vpop.f32.mrf.mxu0
        %v354 = vadd.f32 0.0, %v353
        %v355 = vpop.f32.mrf.mxu0
        %v356 = vadd.f32 0.0, %v355
        %357 = vdwg.mxu0
        %v358 = vpack.c.bf16 %v311, %v307
        %v359 = vpack.c.bf16 %v313, %v309
        %v360 = vpack.c.bf16 %v354, %v350
        %v361 = vpack.c.bf16 %v356, %v352
        %v366 = vunpack.c.l.b16 %v358
        %v367 = vunpack.c.l.b16 %v359
        %v368 = vunpack.c.l.b16 %v360
        %v369 = vunpack.c.l.b16 %v361
        %v370 = vunpack.c.h.b16 %v358
        %v371 = vunpack.c.h.b16 %v359
        %v372 = vunpack.c.h.b16 %v360
        %v373 = vunpack.c.h.b16 %v361
        %v374 = vpack.c.b16 %v367, %v366
        %v375 = vpack.c.b16 %v369, %v368
        %v376 = vpack.c.b16 %v371, %v370
        %v377 = vpack.c.b16 %v373, %v372
        %382 = vst [vmem:[%s162] sm:$0xff] %v374
        %383 = vst [vmem:[%s162 + $0x8] sm:$0xff] %v375
        %384 = vst [vmem:[%s162 + $0x10] sm:$0xff] %v376
        %385 = vst [vmem:[%s162 + $0x18] sm:$0xff] %v377
        %s386 = smul.u32 2, %s14
        %p387 = scmp.lt.s32.totalorder %s386, 3
        %s388 = scalar_select %p387, %s386, 3
        %s389 = smul.addr %s388, 4
        %s390 = smul.addr %s389, 4
        %s391 = scalar_lea.vmem %s2, %s390
        // Predicated region
        $region33: #{_lambda_.6} parent=27 // pred_check
          %p392 = pneg %p79
        $region34: #{_lambda_.6} parent=27 // pred_check_branch
          %394 = sbr.rel (%p392) target = $region36
        $region35: #{_lambda_.6} parent=27 // pred_region
          %s395 = smul.u32 2, %s14
        $region36: #{_lambda_.6} parent=27 // pred_fallthru
          _
      $region28: #{_lambda_.6} parent=5 // pred_fallthru
        _
      %p396 = scmp.le.s32.totalorder 2, %s9
      // Predicated region
      $region37: #{_lambda_.6} parent=5 // pred_check
        %p397 = pneg %p396
      $region38: #{_lambda_.6} parent=5 // pred_check_branch
        %399 = sbr.rel (%p397) target = $region40
      $region39: #{_lambda_.6} parent=5 // pred_region
        %s400 = ssub.s32 %s9, 2
        // Predicated region
        $region41: #{_lambda_.6} parent=39 // pred_check
          %p401 = pneg %p85
        $region42: #{_lambda_.6} parent=39 // pred_check_branch
          %403 = sbr.rel (%p401) target = $region44
        $region43: #{_lambda_.6} parent=39 // pred_region
          %s404 = smul.u32 2, %s15
          %p405 = scmp.lt.s32.totalorder %s404, 3
          %s406 = scalar_select %p405, %s404, 3
          %s407 = smul.addr %s406, 4
          %s408 = smul.addr %s407, 4
          %s409 = scalar_lea.vmem %s2, %s408
        $region44: #{_lambda_.6} parent=39 // pred_fallthru
          _
      $region40: #{_lambda_.6} parent=5 // pred_fallthru
        _
    $region6: #{_lambda_.6} parent=1 // loop_footer
      %s13 = sadd.s32 1, %s9
    $region7: #{_lambda_.6} parent=1 // loop_footer_branch
      %8 = sbr.rel target = $region3
    $region8: #{_lambda_.6} parent=1 // loop_exit
      _
    %410 = vsyncpa [#allocation3], 1
    %s411 = scalar_lea.sflag [#allocation3], 1
    %412 = vsyncpa %s411, 1

// kernel: _lambda_.7
$region0: #{_lambda_.7}
  #allocation0 [shape = 'u32[]', space=smem, size = 0x4, offset = 0x4, fixed_abs, tag = 'smem constant byte address 0x4 - core index']
  #allocation1 [shape = 'u32[144,128]{1,0:T(1,128)}', space=vmem, size = 0x12000, scoped, tag = 'internal scratch']
  %s0 = inlined_call_operand.vmem [shape: bf16[128,32], index: 0, kind: input, shape index: {}]
  %s1 = inlined_call_operand.vmem [shape: bf16[32,256], index: 1, kind: input, shape index: {}]
  %s2 = inlined_call_operand.vmem [shape: bf16[128,256], index: 2, kind: output, shape index: {}]
  %s3 = sld [smem:[#allocation0]]
  $region41: #{_lambda_.7} parent=0
    _
  %s5 = ssub.s32 1, %s3
  %s6 = scalar_select 0, %s5, %s3
  loop: start=0, step=1, limit=4
  $region2: #{_lambda_.7} parent=0 // loop_pre_header
    _
  $region3: #{_lambda_.7} parent=0 // loop_header
    %s8 = sphi 0, %s12
    %p9 = scmp.ge.s32.totalorder %s8, 4
    %s18 = sphi 0, %s20
    %s21 = sphi 0, %s18
    %s22 = sphi 0, %s21
    %s38 = sphi 0, %s22
    %s42 = sphi 0, %s42
    %s44 = sphi 0, %s42
    %s45 = sphi 0, %s44
    %s59 = sphi 0, %s45
    %s65 = sphi 0, %s67
    %s68 = sphi 0, %s65
    %s69 = sphi 0, %s68
    %s85 = sphi 0, %s69
  $region4: #{_lambda_.7} parent=0 // loop_header_branch
    %11 = sbr.rel (%p9) target = $region8
  $region5: #{_lambda_.7} parent=0 // loop_body
    %s13 = ssub.s32 %s8, 1
    %s14 = ssub.s32 %s8, 2
    %s15 = sadd.s32 %s8, 1
    %s16 = ssub.s32 %s8, %s15
    %p17 = scmp.eq.s32.totalorder %s16, 0
    %s19 = sadd.s32 %s18, 1
    %s20 = scalar_select %p17, %s18, %s19
    %p23 = pneg %p17
    %p24 = scmp.eq.s32.totalorder %s8, 1
    %p25 = por %p23, %p24
    %p26 = scmp.ne.s32.totalorder %s18, %s21
    %p27 = scmp.eq.s32.totalorder %s8, 0
    %p28 = por %p26, %p27
    %p29 = scmp.ne.s32.totalorder %s18, %s21
    %p30 = scmp.eq.s32.totalorder %s13, 1
    %p31 = por %p29, %p30
    %p32 = scmp.ne.s32.totalorder %s21, %s22
    %p33 = scmp.eq.s32.totalorder %s13, 0
    %p34 = por %p32, %p33
    %p35 = scmp.ne.s32.totalorder %s21, %s22
    %p36 = scmp.eq.s32.totalorder %s14, 1
    %p37 = por %p35, %p36
    %p39 = scmp.ne.s32.totalorder %s22, %s38
    %p40 = scmp.eq.s32.totalorder %s14, 0
    %p41 = por %p39, %p40
    %s43 = sadd.s32 %s42, 1
    %p46 = scmp.eq.s32.totalorder %s8, 1
    %p47 = scmp.ne.s32.totalorder %s42, %s44
    %p48 = scmp.eq.s32.totalorder %s8, 0
    %p49 = por %p47, %p48
    %p50 = scmp.ne.s32.totalorder %s42, %s44
    %p51 = scmp.eq.s32.totalorder %s13, 1
    %p52 = por %p50, %p51
    %p53 = scmp.ne.s32.totalorder %s44, %s45
    %p54 = scmp.eq.s32.totalorder %s13, 0
    %p55 = por %p53, %p54
    %p56 = scmp.ne.s32.totalorder %s44, %s45
    %p57 = scmp.eq.s32.totalorder %s14, 1
    %p58 = por %p56, %p57
    %p60 = scmp.ne.s32.totalorder %s45, %s59
    %p61 = scmp.eq.s32.totalorder %s14, 0
    %p62 = por %p60, %p61
    %s63 = ssub.s32 %s8, %s15
    %p64 = scmp.eq.s32.totalorder %s63, 0
    %s66 = sadd.s32 %s65, 1
    %s67 = scalar_select %p64, %s65, %s66
    %p70 = pneg %p64
    %p71 = scmp.eq.s32.totalorder %s8, 1
    %p72 = por %p70, %p71
    %p73 = scmp.ne.s32.totalorder %s65, %s68
    %p74 = scmp.eq.s32.totalorder %s8, 0
    %p75 = por %p73, %p74
    %p76 = scmp.ne.s32.totalorder %s65, %s68
    %p77 = scmp.eq.s32.totalorder %s13, 1
    %p78 = por %p76, %p77
    %p79 = scmp.ne.s32.totalorder %s68, %s69
    %p80 = scmp.eq.s32.totalorder %s13, 0
    %p81 = por %p79, %p80
    %p82 = scmp.ne.s32.totalorder %s68, %s69
    %p83 = scmp.eq.s32.totalorder %s14, 1
    %p84 = por %p82, %p83
    %p86 = scmp.ne.s32.totalorder %s69, %s85
    %p87 = scmp.eq.s32.totalorder %s14, 0
    %p88 = por %p86, %p87
    %p89 = scmp.le.s32.totalorder 1, %s8
    %p90 = scmp.lt.s32.totalorder %s8, 3
    %p91 = pnand %p89, %p90
    %p92 = pneg %p91
    // Predicated region
    $region9: #{_lambda_.7} parent=5 // pred_check
      _
    $region10: #{_lambda_.7} parent=5 // pred_check_branch
      %94 = sbr.rel (%p91) target = $region12
    $region11: #{_lambda_.7} parent=5 // pred_region
      %s95 = ssub.s32 %s8, 1
      // Predicated region
      $region13: #{_lambda_.7} parent=11 // pred_check
        %p96 = pneg %p55
      $region14: #{_lambda_.7} parent=11 // pred_check_branch
        %98 = sbr.rel (%p96) target = $region16
      $region15: #{_lambda_.7} parent=11 // pred_region
        _
      $region16: #{_lambda_.7} parent=11 // pred_fallthru
        _
    $region12: #{_lambda_.7} parent=5 // pred_fallthru
      _
    %p99 = scmp.lt.s32.totalorder %s8, 2
    // Predicated region
    $region17: #{_lambda_.7} parent=5 // pred_check
      %p100 = pneg %p99
    $region18: #{_lambda_.7} parent=5 // pred_check_branch
      %102 = sbr.rel (%p100) target = $region20
    $region19: #{_lambda_.7} parent=5 // pred_region
      // Predicated region
      $region21: #{_lambda_.7} parent=19 // pred_check
        %p103 = pneg %p28
      $region22: #{_lambda_.7} parent=19 // pred_check_branch
        %105 = sbr.rel (%p103) target = $region24
      $region23: #{_lambda_.7} parent=19 // pred_region
        %s106 = smul.u32 8, %s8
        %p107 = scmp.lt.s32.totalorder %s106, 15
        %s108 = scalar_select %p107, %s106, 15
        %s109 = smul.addr %s108, 4
        %s110 = scalar_lea.vmem %s0, %s109
        %s111 = smul.u32 8, %s8
      $region24: #{_lambda_.7} parent=19 // pred_fallthru
        _
    $region20: #{_lambda_.7} parent=5 // pred_fallthru
      _
    %p112 = scmp.le.s32.totalorder 1, %s8
    %p113 = scmp.lt.s32.totalorder %s8, 3
    %p114 = pnand %p112, %p113
    %p115 = pneg %p114
    // Predicated region
    $region25: #{_lambda_.7} parent=5 // pred_check
      _
    $region26: #{_lambda_.7} parent=5 // pred_check_branch
      %117 = sbr.rel (%p114) target = $region28
    $region27: #{_lambda_.7} parent=5 // pred_region
      %s118 = ssub.s32 %s8, 1
      %s119 = smul.u32 8, %s13
      %p120 = scmp.lt.s32.totalorder %s119, 15
      %s121 = scalar_select %p120, %s119, 15
      %s122 = smul.addr %s121, 4
      %s123 = scalar_lea.vmem %s0, %s122
      %p124 = pneg %p34
      %p125 = pneg %p31
      %p126 = pneg %p55
      %p127 = pneg %p52
      %p128 = pneg %p81
      %p129 = pneg %p78
      %s130 = smul.u32 8, %s13
      %p131 = scmp.lt.s32.totalorder %s130, 15
      %s132 = scalar_select %p131, %s130, 15
      %s133 = smul.addr %s132, 2
      %s134 = smul.addr %s133, 4
      %s135 = scalar_lea.vmem %s2, %s134
      %s136 = smul.u32 8, %s13
      %p137 = scmp.lt.s32.totalorder %s136, 15
      %s138 = scalar_select %p137, %s136, 15
      %s139 = smul.addr %s138, 4
      %s140 = scalar_lea.vmem %s0, %s139
      %s141 = smul.u32 8, %s13
      %s142 = smul.u32 8, %s13
      %p143 = scmp.lt.s32.totalorder %s142, 15
      %s144 = scalar_select %p143, %s142, 15
      %s145 = smul.addr %s144, 2
      %s146 = smul.addr %s145, 4
      %s147 = scalar_lea.vmem %s2, %s146
      %s148 = smul.u32 8, %s13
      %v150 = vld [vmem:[%s140] sm:$0xf]
      %v151 = vld [vmem:[%s140 + $0x4] sm:$0xf]
      %v152 = vld [vmem:[%s140 + $0x8] sm:$0xf]
      %v153 = vld [vmem:[%s140 + $0xc] sm:$0xf]
      %v154 = vld [vmem:[%s140 + $0x10] sm:$0xf]
      %v155 = vld [vmem:[%s140 + $0x14] sm:$0xf]
      %v156 = vld [vmem:[%s140 + $0x18] sm:$0xf]
      %v157 = vld [vmem:[%s140 + $0x1c] sm:$0xf]
      %v158 = vld [vmem:[%s1] sm:$0xff]
      %v159 = vld [vmem:[%s1 + $0x8] sm:$0xff]
      %v160 = vld [vmem:[%s1 + $0x10] sm:$0xff]
      %v161 = vld [vmem:[%s1 + $0x18] sm:$0xff]
      %v170 = vunpack.c.l.b16 %v150
      %v171 = vunpack.c.l.b16 %v151
      %v172 = vunpack.c.l.b16 %v152
      %v173 = vunpack.c.l.b16 %v153
      %v174 = vunpack.c.l.b16 %v154
      %v175 = vunpack.c.l.b16 %v155
      %v176 = vunpack.c.l.b16 %v156
      %v177 = vunpack.c.l.b16 %v157
      %v178 = vpack.c.b16 %v171, %v170
      %v179 = vpack.c.b16 %v173, %v172
      %v180 = vpack.c.b16 %v175, %v174
      %v181 = vpack.c.b16 %v177, %v176
      %v186 = vunpack.c.l.b16 %v158
      %v187 = vunpack.c.h.b16 %v158
      %v188 = vunpack.c.l.b16 %v159
      %v189 = vunpack.c.h.b16 %v159
      %v190 = vunpack.c.l.b16 %v160
      %v191 = vunpack.c.h.b16 %v160
      %v192 = vunpack.c.l.b16 %v161
      %v193 = vunpack.c.h.b16 %v161
      %v194 = vpack.c.b16 %v188, %v186
      %v195 = vpack.c.b16 %v189, %v187
      %v196 = vpack.c.b16 %v192, %v190
      %v197 = vpack.c.b16 %v193, %v191
      %vm202 = vcmask 261120
      %v204 = vsel %vm202, %v178, 0
      %v207 = vsel %vm202, %v179, 0
      %v210 = vsel %vm202, %v180, 0
      %v213 = vsel %vm202, %v181, 0
      %215 = vmatprep.subr.bf16.mxu0 0
      %216 = vmatpush1.bf16.msra.mxu0 0
      %217 = vmatprep.subr.bf16.mxu0 0
      %218 = vmatpush1.bf16.msra.mxu0 0
      %219 = vmatprep.subr.bf16.mxu0 0
      %220 = vmatpush1.bf16.msra.mxu0 0
      %221 = vmatprep.subr.bf16.mxu0 0
      %222 = vmatpush1.bf16.msra.mxu0 0
      %223 = vmatprep.subr.bf16.mxu0 0
      %224 = vmatpush1.bf16.msra.mxu0 0
      %225 = vmatprep.subr.bf16.mxu0 0
      %226 = vmatpush1.bf16.msra.mxu0 0
      %227 = vmatprep.subr.bf16.mxu0 %v197
      %228 = vmatpush1.bf16.msra.mxu0 %v196
      %229 = vmatprep.subr.bf16.mxu0 %v195
      %230 = vmatpush1.bf16.msra.mxu0 %v194
      %231 = vmatprep.subr.bf16.mxu0 0
      %232 = vmatpush2.bf16.msra.mxu0 0
      %233 = vmatprep.subr.bf16.mxu0 0
      %234 = vmatpush2.bf16.msra.mxu0 0
      %235 = vmatprep.subr.bf16.mxu0 0
      %236 = vmatpush2.bf16.msra.mxu0 0
      %237 = vmatprep.subr.bf16.mxu0 0
      %238 = vmatpush2.bf16.msra.mxu0 0
      %239 = vmatprep.subr.bf16.mxu0 0
      %240 = vmatpush2.bf16.msra.mxu0 0
      %241 = vmatprep.subr.bf16.mxu0 0
      %242 = vmatpush2.bf16.msra.mxu0 0
      %243 = vmatprep.subr.bf16.mxu0 0
      %244 = vmatpush2.bf16.msra.mxu0 0
      %245 = vmatprep.subr.bf16.mxu0 0
      %246 = vmatpush2.bf16.msra.mxu0 0
      %247 = vmatprep.mubr.bf16.mxu0 0
      %248 = vmatmul.mubr.bf16.gmra.mxu0 %v204
      %v249 = vpop.f32.mrf.mxu0
      %v250 = vadd.f32 0.0, %v249
      %v251 = vpop.f32.mrf.mxu0
      %v252 = vadd.f32 0.0, %v251
      %v253 = vpop.f32.mrf.mxu0
      %v254 = vadd.f32 0.0, %v253
      %v255 = vpop.f32.mrf.mxu0
      %v256 = vadd.f32 0.0, %v255
      %257 = vmatprep.mubr.bf16.mxu0 0
      %258 = vmatmul.mubr.bf16.gmra.mxu0 %v207
      %v259 = vpop.f32.mrf.mxu0
      %v260 = vadd.f32 0.0, %v259
      %v261 = vpop.f32.mrf.mxu0
      %v262 = vadd.f32 0.0, %v261
      %v263 = vpop.f32.mrf.mxu0
      %v264 = vadd.f32 0.0, %v263
      %v265 = vpop.f32.mrf.mxu0
      %v266 = vadd.f32 0.0, %v265
      %267 = vmatprep.mubr.bf16.mxu0 0
      %268 = vmatmul.mubr.bf16.gmra.mxu0 %v210
      %v269 = vpop.f32.mrf.mxu0
      %v270 = vadd.f32 0.0, %v269
      %v271 = vpop.f32.mrf.mxu0
      %v272 = vadd.f32 0.0, %v271
      %v273 = vpop.f32.mrf.mxu0
      %v274 = vadd.f32 0.0, %v273
      %v275 = vpop.f32.mrf.mxu0
      %v276 = vadd.f32 0.0, %v275
      %277 = vmatprep.mubr.bf16.mxu0 0
      %278 = vmatmul.mubr.bf16.gmra.mxu0 %v213
      %v279 = vpop.f32.mrf.mxu0
      %v280 = vadd.f32 0.0, %v279
      %v281 = vpop.f32.mrf.mxu0
      %v282 = vadd.f32 0.0, %v281
      %v283 = vpop.f32.mrf.mxu0
      %v284 = vadd.f32 0.0, %v283
      %v285 = vpop.f32.mrf.mxu0
      %v286 = vadd.f32 0.0, %v285
      %287 = vdwg.mxu0
      %v288 = vpack.c.bf16 %v254, %v250
      %v289 = vpack.c.bf16 %v256, %v252
      %v290 = vpack.c.bf16 %v264, %v260
      %v291 = vpack.c.bf16 %v266, %v262
      %v292 = vpack.c.bf16 %v274, %v270
      %v293 = vpack.c.bf16 %v276, %v272
      %v294 = vpack.c.bf16 %v284, %v280
      %v295 = vpack.c.bf16 %v286, %v282
      %v304 = vunpack.c.l.b16 %v288
      %v305 = vunpack.c.l.b16 %v289
      %v306 = vunpack.c.h.b16 %v288
      %v307 = vunpack.c.h.b16 %v289
      %v308 = vunpack.c.l.b16 %v290
      %v309 = vunpack.c.l.b16 %v291
      %v310 = vunpack.c.h.b16 %v290
      %v311 = vunpack.c.h.b16 %v291
      %v312 = vunpack.c.l.b16 %v292
      %v313 = vunpack.c.l.b16 %v293
      %v314 = vunpack.c.h.b16 %v292
      %v315 = vunpack.c.h.b16 %v293
      %v316 = vunpack.c.l.b16 %v294
      %v317 = vunpack.c.l.b16 %v295
      %v318 = vunpack.c.h.b16 %v294
      %v319 = vunpack.c.h.b16 %v295
      %v320 = vpack.c.b16 %v305, %v304
      %v321 = vpack.c.b16 %v307, %v306
      %v322 = vpack.c.b16 %v309, %v308
      %v323 = vpack.c.b16 %v311, %v310
      %v324 = vpack.c.b16 %v313, %v312
      %v325 = vpack.c.b16 %v315, %v314
      %v326 = vpack.c.b16 %v317, %v316
      %v327 = vpack.c.b16 %v319, %v318
      %336 = vst [vmem:[%s147] sm:$0xff] %v320
      %337 = vst [vmem:[%s147 + $0x8] sm:$0xff] %v321
      %338 = vst [vmem:[%s147 + $0x10] sm:$0xff] %v322
      %339 = vst [vmem:[%s147 + $0x18] sm:$0xff] %v323
      %340 = vst [vmem:[%s147 + $0x20] sm:$0xff] %v324
      %341 = vst [vmem:[%s147 + $0x28] sm:$0xff] %v325
      %342 = vst [vmem:[%s147 + $0x30] sm:$0xff] %v326
      %343 = vst [vmem:[%s147 + $0x38] sm:$0xff] %v327
      %s344 = smul.u32 8, %s13
      %p345 = scmp.lt.s32.totalorder %s344, 15
      %s346 = scalar_select %p345, %s344, 15
      %s347 = smul.addr %s346, 2
      %s348 = smul.addr %s347, 4
      %s349 = scalar_lea.vmem %s2, %s348
      // Predicated region
      $region29: #{_lambda_.7} parent=27 // pred_check
        %p350 = pneg %p78
      $region30: #{_lambda_.7} parent=27 // pred_check_branch
        %352 = sbr.rel (%p350) target = $region32
      $region31: #{_lambda_.7} parent=27 // pred_region
        %s353 = smul.u32 8, %s13
      $region32: #{_lambda_.7} parent=27 // pred_fallthru
        _
    $region28: #{_lambda_.7} parent=5 // pred_fallthru
      _
    %p354 = scmp.le.s32.totalorder 2, %s8
    // Predicated region
    $region33: #{_lambda_.7} parent=5 // pred_check
      %p355 = pneg %p354
    $region34: #{_lambda_.7} parent=5 // pred_check_branch
      %357 = sbr.rel (%p355) target = $region36
    $region35: #{_lambda_.7} parent=5 // pred_region
      %s358 = ssub.s32 %s8, 2
      // Predicated region
      $region37: #{_lambda_.7} parent=35 // pred_check
        %p359 = pneg %p84
      $region38: #{_lambda_.7} parent=35 // pred_check_branch
        %361 = sbr.rel (%p359) target = $region40
      $region39: #{_lambda_.7} parent=35 // pred_region
        %s362 = smul.u32 8, %s14
        %p363 = scmp.lt.s32.totalorder %s362, 15
        %s364 = scalar_select %p363, %s362, 15
        %s365 = smul.addr %s364, 2
        %s366 = smul.addr %s365, 4
        %s367 = scalar_lea.vmem %s2, %s366
      $region40: #{_lambda_.7} parent=35 // pred_fallthru
        _
    $region36: #{_lambda_.7} parent=5 // pred_fallthru
      _
  $region6: #{_lambda_.7} parent=0 // loop_footer
    %s12 = sadd.s32 1, %s8
  $region7: #{_lambda_.7} parent=0 // loop_footer_branch
    %7 = sbr.rel target = $region3
  $region8: #{_lambda_.7} parent=0 // loop_exit
    _

// kernel: _lambda_.8
$region0: #{_lambda_.8}
  #allocation0 [shape = 'u32[]', space=smem, size = 0x4, offset = 0x4, fixed_abs, tag = 'smem constant byte address 0x4 - core index']
  #allocation1 [shape = 'u32[144,128]{1,0:T(1,128)}', space=vmem, size = 0x12000, scoped, tag = 'internal scratch']
  %s0 = inlined_call_operand.vmem [shape: bf16[512,16], index: 0, kind: input, shape index: {}]
  %s1 = inlined_call_operand.vmem [shape: bf16[16,128], index: 1, kind: input, shape index: {}]
  %s2 = inlined_call_operand.vmem [shape: bf16[512,128], index: 2, kind: output, shape index: {}]
  %s3 = sld [smem:[#allocation0]]
  $region41: #{_lambda_.8} parent=0
    _
  %s5 = ssub.s32 1, %s3
  %s6 = scalar_select 0, %s5, %s3
  loop: start=0, step=1, limit=4
  $region2: #{_lambda_.8} parent=0 // loop_pre_header
    _
  $region3: #{_lambda_.8} parent=0 // loop_header
    %s8 = sphi 0, %s12
    %p9 = scmp.ge.s32.totalorder %s8, 4
    %s18 = sphi 0, %s20
    %s21 = sphi 0, %s18
    %s22 = sphi 0, %s21
    %s38 = sphi 0, %s22
    %s42 = sphi 0, %s42
    %s44 = sphi 0, %s42
    %s45 = sphi 0, %s44
    %s59 = sphi 0, %s45
    %s65 = sphi 0, %s67
    %s68 = sphi 0, %s65
    %s69 = sphi 0, %s68
    %s85 = sphi 0, %s69
  $region4: #{_lambda_.8} parent=0 // loop_header_branch
    %11 = sbr.rel (%p9) target = $region8
  $region5: #{_lambda_.8} parent=0 // loop_body
    %s13 = ssub.s32 %s8, 1
    %s14 = ssub.s32 %s8, 2
    %s15 = sadd.s32 %s8, 1
    %s16 = ssub.s32 %s8, %s15
    %p17 = scmp.eq.s32.totalorder %s16, 0
    %s19 = sadd.s32 %s18, 1
    %s20 = scalar_select %p17, %s18, %s19
    %p23 = pneg %p17
    %p24 = scmp.eq.s32.totalorder %s8, 1
    %p25 = por %p23, %p24
    %p26 = scmp.ne.s32.totalorder %s18, %s21
    %p27 = scmp.eq.s32.totalorder %s8, 0
    %p28 = por %p26, %p27
    %p29 = scmp.ne.s32.totalorder %s18, %s21
    %p30 = scmp.eq.s32.totalorder %s13, 1
    %p31 = por %p29, %p30
    %p32 = scmp.ne.s32.totalorder %s21, %s22
    %p33 = scmp.eq.s32.totalorder %s13, 0
    %p34 = por %p32, %p33
    %p35 = scmp.ne.s32.totalorder %s21, %s22
    %p36 = scmp.eq.s32.totalorder %s14, 1
    %p37 = por %p35, %p36
    %p39 = scmp.ne.s32.totalorder %s22, %s38
    %p40 = scmp.eq.s32.totalorder %s14, 0
    %p41 = por %p39, %p40
    %s43 = sadd.s32 %s42, 1
    %p46 = scmp.eq.s32.totalorder %s8, 1
    %p47 = scmp.ne.s32.totalorder %s42, %s44
    %p48 = scmp.eq.s32.totalorder %s8, 0
    %p49 = por %p47, %p48
    %p50 = scmp.ne.s32.totalorder %s42, %s44
    %p51 = scmp.eq.s32.totalorder %s13, 1
    %p52 = por %p50, %p51
    %p53 = scmp.ne.s32.totalorder %s44, %s45
    %p54 = scmp.eq.s32.totalorder %s13, 0
    %p55 = por %p53, %p54
    %p56 = scmp.ne.s32.totalorder %s44, %s45
    %p57 = scmp.eq.s32.totalorder %s14, 1
    %p58 = por %p56, %p57
    %p60 = scmp.ne.s32.totalorder %s45, %s59
    %p61 = scmp.eq.s32.totalorder %s14, 0
    %p62 = por %p60, %p61
    %s63 = ssub.s32 %s8, %s15
    %p64 = scmp.eq.s32.totalorder %s63, 0
    %s66 = sadd.s32 %s65, 1
    %s67 = scalar_select %p64, %s65, %s66
    %p70 = pneg %p64
    %p71 = scmp.eq.s32.totalorder %s8, 1
    %p72 = por %p70, %p71
    %p73 = scmp.ne.s32.totalorder %s65, %s68
    %p74 = scmp.eq.s32.totalorder %s8, 0
    %p75 = por %p73, %p74
    %p76 = scmp.ne.s32.totalorder %s65, %s68
    %p77 = scmp.eq.s32.totalorder %s13, 1
    %p78 = por %p76, %p77
    %p79 = scmp.ne.s32.totalorder %s68, %s69
    %p80 = scmp.eq.s32.totalorder %s13, 0
    %p81 = por %p79, %p80
    %p82 = scmp.ne.s32.totalorder %s68, %s69
    %p83 = scmp.eq.s32.totalorder %s14, 1
    %p84 = por %p82, %p83
    %p86 = scmp.ne.s32.totalorder %s69, %s85
    %p87 = scmp.eq.s32.totalorder %s14, 0
    %p88 = por %p86, %p87
    %p89 = scmp.le.s32.totalorder 1, %s8
    %p90 = scmp.lt.s32.totalorder %s8, 3
    %p91 = pnand %p89, %p90
    %p92 = pneg %p91
    // Predicated region
    $region9: #{_lambda_.8} parent=5 // pred_check
      _
    $region10: #{_lambda_.8} parent=5 // pred_check_branch
      %94 = sbr.rel (%p91) target = $region12
    $region11: #{_lambda_.8} parent=5 // pred_region
      %s95 = ssub.s32 %s8, 1
      // Predicated region
      $region13: #{_lambda_.8} parent=11 // pred_check
        %p96 = pneg %p55
      $region14: #{_lambda_.8} parent=11 // pred_check_branch
        %98 = sbr.rel (%p96) target = $region16
      $region15: #{_lambda_.8} parent=11 // pred_region
        _
      $region16: #{_lambda_.8} parent=11 // pred_fallthru
        _
    $region12: #{_lambda_.8} parent=5 // pred_fallthru
      _
    %p99 = scmp.lt.s32.totalorder %s8, 2
    // Predicated region
    $region17: #{_lambda_.8} parent=5 // pred_check
      %p100 = pneg %p99
    $region18: #{_lambda_.8} parent=5 // pred_check_branch
      %102 = sbr.rel (%p100) target = $region20
    $region19: #{_lambda_.8} parent=5 // pred_region
      // Predicated region
      $region21: #{_lambda_.8} parent=19 // pred_check
        %p103 = pneg %p28
      $region22: #{_lambda_.8} parent=19 // pred_check_branch
        %105 = sbr.rel (%p103) target = $region24
      $region23: #{_lambda_.8} parent=19 // pred_region
        %s106 = smul.u32 32, %s8
        %p107 = scmp.lt.s32.totalorder %s106, 63
        %s108 = scalar_select %p107, %s106, 63
        %s109 = smul.addr %s108, 4
        %s110 = scalar_lea.vmem %s0, %s109
        %s111 = smul.u32 32, %s8
      $region24: #{_lambda_.8} parent=19 // pred_fallthru
        _
    $region20: #{_lambda_.8} parent=5 // pred_fallthru
      _
    %p112 = scmp.le.s32.totalorder 1, %s8
    %p113 = scmp.lt.s32.totalorder %s8, 3
    %p114 = pnand %p112, %p113
    %p115 = pneg %p114
    // Predicated region
    $region25: #{_lambda_.8} parent=5 // pred_check
      _
    $region26: #{_lambda_.8} parent=5 // pred_check_branch
      %117 = sbr.rel (%p114) target = $region28
    $region27: #{_lambda_.8} parent=5 // pred_region
      %s118 = ssub.s32 %s8, 1
      %s119 = smul.u32 32, %s13
      %p120 = scmp.lt.s32.totalorder %s119, 63
      %s121 = scalar_select %p120, %s119, 63
      %s122 = smul.addr %s121, 4
      %s123 = scalar_lea.vmem %s0, %s122
      %p124 = pneg %p34
      %p125 = pneg %p31
      %p126 = pneg %p55
      %p127 = pneg %p52
      %p128 = pneg %p81
      %p129 = pneg %p78
      %s130 = smul.u32 32, %s13
      %p131 = scmp.lt.s32.totalorder %s130, 63
      %s132 = scalar_select %p131, %s130, 63
      %s133 = smul.addr %s132, 4
      %s134 = scalar_lea.vmem %s2, %s133
      %s135 = smul.u32 32, %s13
      %p136 = scmp.lt.s32.totalorder %s135, 63
      %s137 = scalar_select %p136, %s135, 63
      %s138 = smul.addr %s137, 4
      %s139 = scalar_lea.vmem %s0, %s138
      %s140 = smul.u32 32, %s13
      %s141 = smul.u32 32, %s13
      %p142 = scmp.lt.s32.totalorder %s141, 63
      %s143 = scalar_select %p142, %s141, 63
      %s144 = smul.addr %s143, 4
      %s145 = scalar_lea.vmem %s2, %s144
      %s146 = smul.u32 32, %s13
      %v148 = vld [vmem:[%s139] sm:$0xf]
      %v149 = vld [vmem:[%s139 + $0x4] sm:$0xf]
      %v150 = vld [vmem:[%s139 + $0x8] sm:$0xf]
      %v151 = vld [vmem:[%s139 + $0xc] sm:$0xf]
      %v152 = vld [vmem:[%s139 + $0x10] sm:$0xf]
      %v153 = vld [vmem:[%s139 + $0x14] sm:$0xf]
      %v154 = vld [vmem:[%s139 + $0x18] sm:$0xf]
      %v155 = vld [vmem:[%s139 + $0x1c] sm:$0xf]
      %v156 = vld [vmem:[%s139 + $0x20] sm:$0xf]
      %v157 = vld [vmem:[%s139 + $0x24] sm:$0xf]
      %v158 = vld [vmem:[%s139 + $0x28] sm:$0xf]
      %v159 = vld [vmem:[%s139 + $0x2c] sm:$0xf]
      %v160 = vld [vmem:[%s139 + $0x30] sm:$0xf]
      %v161 = vld [vmem:[%s139 + $0x34] sm:$0xf]
      %v162 = vld [vmem:[%s139 + $0x38] sm:$0xf]
      %v163 = vld [vmem:[%s139 + $0x3c] sm:$0xf]
      %v164 = vld [vmem:[%s139 + $0x40] sm:$0xf]
      %v165 = vld [vmem:[%s139 + $0x44] sm:$0xf]
      %v166 = vld [vmem:[%s139 + $0x48] sm:$0xf]
      %v167 = vld [vmem:[%s139 + $0x4c] sm:$0xf]
      %v168 = vld [vmem:[%s139 + $0x50] sm:$0xf]
      %v169 = vld [vmem:[%s139 + $0x54] sm:$0xf]
      %v170 = vld [vmem:[%s139 + $0x58] sm:$0xf]
      %v171 = vld [vmem:[%s139 + $0x5c] sm:$0xf]
      %v172 = vld [vmem:[%s139 + $0x60] sm:$0xf]
      %v173 = vld [vmem:[%s139 + $0x64] sm:$0xf]
      %v174 = vld [vmem:[%s139 + $0x68] sm:$0xf]
      %v175 = vld [vmem:[%s139 + $0x6c] sm:$0xf]
      %v176 = vld [vmem:[%s139 + $0x70] sm:$0xf]
      %v177 = vld [vmem:[%s139 + $0x74] sm:$0xf]
      %v178 = vld [vmem:[%s139 + $0x78] sm:$0xf]
      %v179 = vld [vmem:[%s139 + $0x7c] sm:$0xf]
      %v180 = vld [vmem:[%s1] sm:$0xf]
      %v181 = vld [vmem:[%s1 + $0x4] sm:$0xf]
      %v214 = vunpack.c.l.b16 %v148
      %v215 = vunpack.c.l.b16 %v149
      %v216 = vunpack.c.l.b16 %v150
      %v217 = vunpack.c.l.b16 %v151
      %v218 = vunpack.c.l.b16 %v152
      %v219 = vunpack.c.l.b16 %v153
      %v220 = vunpack.c.l.b16 %v154
      %v221 = vunpack.c.l.b16 %v155
      %v222 = vunpack.c.l.b16 %v156
      %v223 = vunpack.c.l.b16 %v157
      %v224 = vunpack.c.l.b16 %v158
      %v225 = vunpack.c.l.b16 %v159
      %v226 = vunpack.c.l.b16 %v160
      %v227 = vunpack.c.l.b16 %v161
      %v228 = vunpack.c.l.b16 %v162
      %v229 = vunpack.c.l.b16 %v163
      %v230 = vunpack.c.l.b16 %v164
      %v231 = vunpack.c.l.b16 %v165
      %v232 = vunpack.c.l.b16 %v166
      %v233 = vunpack.c.l.b16 %v167
      %v234 = vunpack.c.l.b16 %v168
      %v235 = vunpack.c.l.b16 %v169
      %v236 = vunpack.c.l.b16 %v170
      %v237 = vunpack.c.l.b16 %v171
      %v238 = vunpack.c.l.b16 %v172
      %v239 = vunpack.c.l.b16 %v173
      %v240 = vunpack.c.l.b16 %v174
      %v241 = vunpack.c.l.b16 %v175
      %v242 = vunpack.c.l.b16 %v176
      %v243 = vunpack.c.l.b16 %v177
      %v244 = vunpack.c.l.b16 %v178
      %v245 = vunpack.c.l.b16 %v179
      %v246 = vpack.c.b16 %v215, %v214
      %v247 = vpack.c.b16 %v217, %v216
      %v248 = vpack.c.b16 %v219, %v218
      %v249 = vpack.c.b16 %v221, %v220
      %v250 = vpack.c.b16 %v223, %v222
      %v251 = vpack.c.b16 %v225, %v224
      %v252 = vpack.c.b16 %v227, %v226
      %v253 = vpack.c.b16 %v229, %v228
      %v254 = vpack.c.b16 %v231, %v230
      %v255 = vpack.c.b16 %v233, %v232
      %v256 = vpack.c.b16 %v235, %v234
      %v257 = vpack.c.b16 %v237, %v236
      %v258 = vpack.c.b16 %v239, %v238
      %v259 = vpack.c.b16 %v241, %v240
      %v260 = vpack.c.b16 %v243, %v242
      %v261 = vpack.c.b16 %v245, %v244
      %v264 = vunpack.c.l.b16 %v180
      %v265 = vunpack.c.l.b16 %v181
      %v266 = vpack.c.b16 %v265, %v264
      %vm268 = vcmask 130048
      %v270 = vsel %vm268, %v246, 0
      %v273 = vsel %vm268, %v247, 0
      %v276 = vsel %vm268, %v248, 0
      %v279 = vsel %vm268, %v249, 0
      %v282 = vsel %vm268, %v250, 0
      %v285 = vsel %vm268, %v251, 0
      %v288 = vsel %vm268, %v252, 0
      %v291 = vsel %vm268, %v253, 0
      %v294 = vsel %vm268, %v254, 0
      %v297 = vsel %vm268, %v255, 0
      %v300 = vsel %vm268, %v256, 0
      %v303 = vsel %vm268, %v257, 0
      %v306 = vsel %vm268, %v258, 0
      %v309 = vsel %vm268, %v259, 0
      %v312 = vsel %vm268, %v260, 0
      %v315 = vsel %vm268, %v261, 0
      %317 = vmatprep.subr.bf16.mxu0 0
      %318 = vmatpush1.bf16.msra.mxu0 0
      %319 = vmatprep.subr.bf16.mxu0 0
      %320 = vmatpush1.bf16.msra.mxu0 0
      %321 = vmatprep.subr.bf16.mxu0 0
      %322 = vmatpush1.bf16.msra.mxu0 0
      %323 = vmatprep.subr.bf16.mxu0 0
      %324 = vmatpush1.bf16.msra.mxu0 0
      %325 = vmatprep.subr.bf16.mxu0 0
      %326 = vmatpush1.bf16.msra.mxu0 0
      %327 = vmatprep.subr.bf16.mxu0 0
      %328 = vmatpush1.bf16.msra.mxu0 0
      %329 = vmatprep.subr.bf16.mxu0 0
      %330 = vmatpush1.bf16.msra.mxu0 0
      %331 = vmatprep.subr.bf16.mxu0 0
      %332 = vmatpush1.bf16.msra.mxu0 %v266
      %333 = vmatprep.subr.bf16.mxu0 0
      %334 = vmatpush2.bf16.msra.mxu0 0
      %335 = vmatprep.subr.bf16.mxu0 0
      %336 = vmatpush2.bf16.msra.mxu0 0
      %337 = vmatprep.subr.bf16.mxu0 0
      %338 = vmatpush2.bf16.msra.mxu0 0
      %339 = vmatprep.subr.bf16.mxu0 0
      %340 = vmatpush2.bf16.msra.mxu0 0
      %341 = vmatprep.subr.bf16.mxu0 0
      %342 = vmatpush2.bf16.msra.mxu0 0
      %343 = vmatprep.subr.bf16.mxu0 0
      %344 = vmatpush2.bf16.msra.mxu0 0
      %345 = vmatprep.subr.bf16.mxu0 0
      %346 = vmatpush2.bf16.msra.mxu0 0
      %347 = vmatprep.subr.bf16.mxu0 0
      %348 = vmatpush2.bf16.msra.mxu0 0
      %349 = vmatprep.mubr.bf16.mxu0 0
      %350 = vmatmul.mubr.bf16.gmra.mxu0 %v270
      %v351 = vpop.f32.mrf.mxu0
      %v352 = vadd.f32 0.0, %v351
      %v353 = vpop.f32.mrf.mxu0
      %v354 = vpop.f32.mrf.mxu0
      %v355 = vadd.f32 0.0, %v354
      %v356 = vpop.f32.mrf.mxu0
      %357 = vmatprep.mubr.bf16.mxu0 0
      %358 = vmatmul.mubr.bf16.gmra.mxu0 %v273
      %v359 = vpop.f32.mrf.mxu0
      %v360 = vadd.f32 0.0, %v359
      %v361 = vpop.f32.mrf.mxu0
      %v362 = vpop.f32.mrf.mxu0
      %v363 = vadd.f32 0.0, %v362
      %v364 = vpop.f32.mrf.mxu0
      %365 = vmatprep.mubr.bf16.mxu0 0
      %366 = vmatmul.mubr.bf16.gmra.mxu0 %v276
      %v367 = vpop.f32.mrf.mxu0
      %v368 = vadd.f32 0.0, %v367
      %v369 = vpop.f32.mrf.mxu0
      %v370 = vpop.f32.mrf.mxu0
      %v371 = vadd.f32 0.0, %v370
      %v372 = vpop.f32.mrf.mxu0
      %373 = vmatprep.mubr.bf16.mxu0 0
      %374 = vmatmul.mubr.bf16.gmra.mxu0 %v279
      %v375 = vpop.f32.mrf.mxu0
      %v376 = vadd.f32 0.0, %v375
      %v377 = vpop.f32.mrf.mxu0
      %v378 = vpop.f32.mrf.mxu0
      %v379 = vadd.f32 0.0, %v378
      %v380 = vpop.f32.mrf.mxu0
      %381 = vmatprep.mubr.bf16.mxu0 0
      %382 = vmatmul.mubr.bf16.gmra.mxu0 %v282
      %v383 = vpop.f32.mrf.mxu0
      %v384 = vadd.f32 0.0, %v383
      %v385 = vpop.f32.mrf.mxu0
      %v386 = vpop.f32.mrf.mxu0
      %v387 = vadd.f32 0.0, %v386
      %v388 = vpop.f32.mrf.mxu0
      %389 = vmatprep.mubr.bf16.mxu0 0
      %390 = vmatmul.mubr.bf16.gmra.mxu0 %v285
      %v391 = vpop.f32.mrf.mxu0
      %v392 = vadd.f32 0.0, %v391
      %v393 = vpop.f32.mrf.mxu0
      %v394 = vpop.f32.mrf.mxu0
      %v395 = vadd.f32 0.0, %v394
      %v396 = vpop.f32.mrf.mxu0
      %397 = vmatprep.mubr.bf16.mxu0 0
      %398 = vmatmul.mubr.bf16.gmra.mxu0 %v288
      %v399 = vpop.f32.mrf.mxu0
      %v400 = vadd.f32 0.0, %v399
      %v401 = vpop.f32.mrf.mxu0
      %v402 = vpop.f32.mrf.mxu0
      %v403 = vadd.f32 0.0, %v402
      %v404 = vpop.f32.mrf.mxu0
      %405 = vmatprep.mubr.bf16.mxu0 0
      %406 = vmatmul.mubr.bf16.gmra.mxu0 %v291
      %v407 = vpop.f32.mrf.mxu0
      %v408 = vadd.f32 0.0, %v407
      %v409 = vpop.f32.mrf.mxu0
      %v410 = vpop.f32.mrf.mxu0
      %v411 = vadd.f32 0.0, %v410
      %v412 = vpop.f32.mrf.mxu0
      %413 = vmatprep.mubr.bf16.mxu0 0
      %414 = vmatmul.mubr.bf16.gmra.mxu0 %v294
      %v415 = vpop.f32.mrf.mxu0
      %v416 = vadd.f32 0.0, %v415
      %v417 = vpop.f32.mrf.mxu0
      %v418 = vpop.f32.mrf.mxu0
      %v419 = vadd.f32 0.0, %v418
      %v420 = vpop.f32.mrf.mxu0
      %421 = vmatprep.mubr.bf16.mxu0 0
      %422 = vmatmul.mubr.bf16.gmra.mxu0 %v297
      %v423 = vpop.f32.mrf.mxu0
      %v424 = vadd.f32 0.0, %v423
      %v425 = vpop.f32.mrf.mxu0
      %v426 = vpop.f32.mrf.mxu0
      %v427 = vadd.f32 0.0, %v426
      %v428 = vpop.f32.mrf.mxu0
      %429 = vmatprep.mubr.bf16.mxu0 0
      %430 = vmatmul.mubr.bf16.gmra.mxu0 %v300
      %v431 = vpop.f32.mrf.mxu0
      %v432 = vadd.f32 0.0, %v431
      %v433 = vpop.f32.mrf.mxu0
      %v434 = vpop.f32.mrf.mxu0
      %v435 = vadd.f32 0.0, %v434
      %v436 = vpop.f32.mrf.mxu0
      %437 = vmatprep.mubr.bf16.mxu0 0
      %438 = vmatmul.mubr.bf16.gmra.mxu0 %v303
      %v439 = vpop.f32.mrf.mxu0
      %v440 = vadd.f32 0.0, %v439
      %v441 = vpop.f32.mrf.mxu0
      %v442 = vpop.f32.mrf.mxu0
      %v443 = vadd.f32 0.0, %v442
      %v444 = vpop.f32.mrf.mxu0
      %445 = vmatprep.mubr.bf16.mxu0 0
      %446 = vmatmul.mubr.bf16.gmra.mxu0 %v306
      %v447 = vpop.f32.mrf.mxu0
      %v448 = vadd.f32 0.0, %v447
      %v449 = vpop.f32.mrf.mxu0
      %v450 = vpop.f32.mrf.mxu0
      %v451 = vadd.f32 0.0, %v450
      %v452 = vpop.f32.mrf.mxu0
      %453 = vmatprep.mubr.bf16.mxu0 0
      %454 = vmatmul.mubr.bf16.gmra.mxu0 %v309
      %v455 = vpop.f32.mrf.mxu0
      %v456 = vadd.f32 0.0, %v455
      %v457 = vpop.f32.mrf.mxu0
      %v458 = vpop.f32.mrf.mxu0
      %v459 = vadd.f32 0.0, %v458
      %v460 = vpop.f32.mrf.mxu0
      %461 = vmatprep.mubr.bf16.mxu0 0
      %462 = vmatmul.mubr.bf16.gmra.mxu0 %v312
      %v463 = vpop.f32.mrf.mxu0
      %v464 = vadd.f32 0.0, %v463
      %v465 = vpop.f32.mrf.mxu0
      %v466 = vpop.f32.mrf.mxu0
      %v467 = vadd.f32 0.0, %v466
      %v468 = vpop.f32.mrf.mxu0
      %469 = vmatprep.mubr.bf16.mxu0 0
      %470 = vmatmul.mubr.bf16.gmra.mxu0 %v315
      %v471 = vpop.f32.mrf.mxu0
      %v472 = vadd.f32 0.0, %v471
      %v473 = vpop.f32.mrf.mxu0
      %v474 = vpop.f32.mrf.mxu0
      %v475 = vadd.f32 0.0, %v474
      %v476 = vpop.f32.mrf.mxu0
      %477 = vdwg.mxu0
      %v478 = vpack.c.bf16 %v355, %v352
      %v479 = vpack.c.bf16 %v363, %v360
      %v480 = vpack.c.bf16 %v371, %v368
      %v481 = vpack.c.bf16 %v379, %v376
      %v482 = vpack.c.bf16 %v387, %v384
      %v483 = vpack.c.bf16 %v395, %v392
      %v484 = vpack.c.bf16 %v403, %v400
      %v485 = vpack.c.bf16 %v411, %v408
      %v486 = vpack.c.bf16 %v419, %v416
      %v487 = vpack.c.bf16 %v427, %v424
      %v488 = vpack.c.bf16 %v435, %v432
      %v489 = vpack.c.bf16 %v443, %v440
      %v490 = vpack.c.bf16 %v451, %v448
      %v491 = vpack.c.bf16 %v459, %v456
      %v492 = vpack.c.bf16 %v467, %v464
      %v493 = vpack.c.bf16 %v475, %v472
      %v510 = vunpack.c.l.b16 %v478
      %v511 = vunpack.c.h.b16 %v478
      %v512 = vunpack.c.l.b16 %v479
      %v513 = vunpack.c.h.b16 %v479
      %v514 = vunpack.c.l.b16 %v480
      %v515 = vunpack.c.h.b16 %v480
      %v516 = vunpack.c.l.b16 %v481
      %v517 = vunpack.c.h.b16 %v481
      %v518 = vunpack.c.l.b16 %v482
      %v519 = vunpack.c.h.b16 %v482
      %v520 = vunpack.c.l.b16 %v483
      %v521 = vunpack.c.h.b16 %v483
      %v522 = vunpack.c.l.b16 %v484
      %v523 = vunpack.c.h.b16 %v484
      %v524 = vunpack.c.l.b16 %v485
      %v525 = vunpack.c.h.b16 %v485
      %v526 = vunpack.c.l.b16 %v486
      %v527 = vunpack.c.h.b16 %v486
      %v528 = vunpack.c.l.b16 %v487
      %v529 = vunpack.c.h.b16 %v487
      %v530 = vunpack.c.l.b16 %v488
      %v531 = vunpack.c.h.b16 %v488
      %v532 = vunpack.c.l.b16 %v489
      %v533 = vunpack.c.h.b16 %v489
      %v534 = vunpack.c.l.b16 %v490
      %v535 = vunpack.c.h.b16 %v490
      %v536 = vunpack.c.l.b16 %v491
      %v537 = vunpack.c.h.b16 %v491
      %v538 = vunpack.c.l.b16 %v492
      %v539 = vunpack.c.h.b16 %v492
      %v540 = vunpack.c.l.b16 %v493
      %v541 = vunpack.c.h.b16 %v493
      %v542 = vpack.c.b16 %v510, %v510
      %v543 = vpack.c.b16 %v511, %v511
      %v544 = vpack.c.b16 %v512, %v512
      %v545 = vpack.c.b16 %v513, %v513
      %v546 = vpack.c.b16 %v514, %v514
      %v547 = vpack.c.b16 %v515, %v515
      %v548 = vpack.c.b16 %v516, %v516
      %v549 = vpack.c.b16 %v517, %v517
      %v550 = vpack.c.b16 %v518, %v518
      %v551 = vpack.c.b16 %v519, %v519
      %v552 = vpack.c.b16 %v520, %v520
      %v553 = vpack.c.b16 %v521, %v521
      %v554 = vpack.c.b16 %v522, %v522
      %v555 = vpack.c.b16 %v523, %v523
      %v556 = vpack.c.b16 %v524, %v524
      %v557 = vpack.c.b16 %v525, %v525
      %v558 = vpack.c.b16 %v526, %v526
      %v559 = vpack.c.b16 %v527, %v527
      %v560 = vpack.c.b16 %v528, %v528
      %v561 = vpack.c.b16 %v529, %v529
      %v562 = vpack.c.b16 %v530, %v530
      %v563 = vpack.c.b16 %v531, %v531
      %v564 = vpack.c.b16 %v532, %v532
      %v565 = vpack.c.b16 %v533, %v533
      %v566 = vpack.c.b16 %v534, %v534
      %v567 = vpack.c.b16 %v535, %v535
      %v568 = vpack.c.b16 %v536, %v536
      %v569 = vpack.c.b16 %v537, %v537
      %v570 = vpack.c.b16 %v538, %v538
      %v571 = vpack.c.b16 %v539, %v539
      %v572 = vpack.c.b16 %v540, %v540
      %v573 = vpack.c.b16 %v541, %v541
      %606 = vst [vmem:[%s145] sm:$0xf] %v542
      %607 = vst [vmem:[%s145 + $0x4] sm:$0xf] %v543
      %608 = vst [vmem:[%s145 + $0x8] sm:$0xf] %v544
      %609 = vst [vmem:[%s145 + $0xc] sm:$0xf] %v545
      %610 = vst [vmem:[%s145 + $0x10] sm:$0xf] %v546
      %611 = vst [vmem:[%s145 + $0x14] sm:$0xf] %v547
      %612 = vst [vmem:[%s145 + $0x18] sm:$0xf] %v548
      %613 = vst [vmem:[%s145 + $0x1c] sm:$0xf] %v549
      %614 = vst [vmem:[%s145 + $0x20] sm:$0xf] %v550
      %615 = vst [vmem:[%s145 + $0x24] sm:$0xf] %v551
      %616 = vst [vmem:[%s145 + $0x28] sm:$0xf] %v552
      %617 = vst [vmem:[%s145 + $0x2c] sm:$0xf] %v553
      %618 = vst [vmem:[%s145 + $0x30] sm:$0xf] %v554
      %619 = vst [vmem:[%s145 + $0x34] sm:$0xf] %v555
      %620 = vst [vmem:[%s145 + $0x38] sm:$0xf] %v556
      %621 = vst [vmem:[%s145 + $0x3c] sm:$0xf] %v557
      %622 = vst [vmem:[%s145 + $0x40] sm:$0xf] %v558
      %623 = vst [vmem:[%s145 + $0x44] sm:$0xf] %v559
      %624 = vst [vmem:[%s145 + $0x48] sm:$0xf] %v560
      %625 = vst [vmem:[%s145 + $0x4c] sm:$0xf] %v561
      %626 = vst [vmem:[%s145 + $0x50] sm:$0xf] %v562
      %627 = vst [vmem:[%s145 + $0x54] sm:$0xf] %v563
      %628 = vst [vmem:[%s145 + $0x58] sm:$0xf] %v564
      %629 = vst [vmem:[%s145 + $0x5c] sm:$0xf] %v565
      %630 = vst [vmem:[%s145 + $0x60] sm:$0xf] %v566
      %631 = vst [vmem:[%s145 + $0x64] sm:$0xf] %v567
      %632 = vst [vmem:[%s145 + $0x68] sm:$0xf] %v568
      %633 = vst [vmem:[%s145 + $0x6c] sm:$0xf] %v569
      %634 = vst [vmem:[%s145 + $0x70] sm:$0xf] %v570
      %635 = vst [vmem:[%s145 + $0x74] sm:$0xf] %v571
      %636 = vst [vmem:[%s145 + $0x78] sm:$0xf] %v572
      %637 = vst [vmem:[%s145 + $0x7c] sm:$0xf] %v573
      %s638 = smul.u32 32, %s13
      %p639 = scmp.lt.s32.totalorder %s638, 63
      %s640 = scalar_select %p639, %s638, 63
      %s641 = smul.addr %s640, 4
      %s642 = scalar_lea.vmem %s2, %s641
      // Predicated region
      $region29: #{_lambda_.8} parent=27 // pred_check
        %p643 = pneg %p78
      $region30: #{_lambda_.8} parent=27 // pred_check_branch
        %645 = sbr.rel (%p643) target = $region32
      $region31: #{_lambda_.8} parent=27 // pred_region
        %s646 = smul.u32 32, %s13
      $region32: #{_lambda_.8} parent=27 // pred_fallthru
        _
    $region28: #{_lambda_.8} parent=5 // pred_fallthru
      _
    %p647 = scmp.le.s32.totalorder 2, %s8
    // Predicated region
    $region33: #{_lambda_.8} parent=5 // pred_check
      %p648 = pneg %p647
    $region34: #{_lambda_.8} parent=5 // pred_check_branch
      %650 = sbr.rel (%p648) target = $region36
    $region35: #{_lambda_.8} parent=5 // pred_region
      %s651 = ssub.s32 %s8, 2
      // Predicated region
      $region37: #{_lambda_.8} parent=35 // pred_check
        %p652 = pneg %p84
      $region38: #{_lambda_.8} parent=35 // pred_check_branch
        %654 = sbr.rel (%p652) target = $region40
      $region39: #{_lambda_.8} parent=35 // pred_region
        %s655 = smul.u32 32, %s14
        %p656 = scmp.lt.s32.totalorder %s655, 63
        %s657 = scalar_select %p656, %s655, 63
        %s658 = smul.addr %s657, 4
        %s659 = scalar_lea.vmem %s2, %s658
      $region40: #{_lambda_.8} parent=35 // pred_fallthru
        _
    $region36: #{_lambda_.8} parent=5 // pred_fallthru
      _
  $region6: #{_lambda_.8} parent=0 // loop_footer
    %s12 = sadd.s32 1, %s8
  $region7: #{_lambda_.8} parent=0 // loop_footer_branch
    %7 = sbr.rel target = $region3
  $region8: #{_lambda_.8} parent=0 // loop_exit
    _

// kernel: _lambda_.9
$region0: #{_lambda_.9}
  #allocation0 [shape = 'u32[]', space=smem, size = 0x4, offset = 0x4, fixed_abs, tag = 'smem constant byte address 0x4 - core index']
  #allocation1 [shape = 'u32[144,128]{1,0:T(1,128)}', space=vmem, size = 0x12000, scoped, tag = 'internal scratch']
  %s0 = inlined_call_operand.vmem [shape: bf16[2048,8], index: 0, kind: input, shape index: {}]
  %s1 = inlined_call_operand.vmem [shape: bf16[8,128], index: 1, kind: input, shape index: {}]
  %s2 = inlined_call_operand.vmem [shape: bf16[2048,128], index: 2, kind: output, shape index: {}]
  %s3 = sld [smem:[#allocation0]]
  $region41: #{_lambda_.9} parent=0
    _
  %s5 = ssub.s32 1, %s3
  %s6 = scalar_select 0, %s5, %s3
  loop: start=0, step=1, limit=4
  $region2: #{_lambda_.9} parent=0 // loop_pre_header
    _
  $region3: #{_lambda_.9} parent=0 // loop_header
    %s8 = sphi 0, %s12
    %p9 = scmp.ge.s32.totalorder %s8, 4
    %s18 = sphi 0, %s20
    %s21 = sphi 0, %s18
    %s22 = sphi 0, %s21
    %s38 = sphi 0, %s22
    %s42 = sphi 0, %s42
    %s44 = sphi 0, %s42
    %s45 = sphi 0, %s44
    %s59 = sphi 0, %s45
    %s65 = sphi 0, %s67
    %s68 = sphi 0, %s65
    %s69 = sphi 0, %s68
    %s85 = sphi 0, %s69
  $region4: #{_lambda_.9} parent=0 // loop_header_branch
    %11 = sbr.rel (%p9) target = $region8
  $region5: #{_lambda_.9} parent=0 // loop_body
    %s13 = ssub.s32 %s8, 1
    %s14 = ssub.s32 %s8, 2
    %s15 = sadd.s32 %s8, 1
    %s16 = ssub.s32 %s8, %s15
    %p17 = scmp.eq.s32.totalorder %s16, 0
    %s19 = sadd.s32 %s18, 1
    %s20 = scalar_select %p17, %s18, %s19
    %p23 = pneg %p17
    %p24 = scmp.eq.s32.totalorder %s8, 1
    %p25 = por %p23, %p24
    %p26 = scmp.ne.s32.totalorder %s18, %s21
    %p27 = scmp.eq.s32.totalorder %s8, 0
    %p28 = por %p26, %p27
    %p29 = scmp.ne.s32.totalorder %s18, %s21
    %p30 = scmp.eq.s32.totalorder %s13, 1
    %p31 = por %p29, %p30
    %p32 = scmp.ne.s32.totalorder %s21, %s22
    %p33 = scmp.eq.s32.totalorder %s13, 0
    %p34 = por %p32, %p33
    %p35 = scmp.ne.s32.totalorder %s21, %s22
    %p36 = scmp.eq.s32.totalorder %s14, 1
    %p37 = por %p35, %p36
    %p39 = scmp.ne.s32.totalorder %s22, %s38
    %p40 = scmp.eq.s32.totalorder %s14, 0
    %p41 = por %p39, %p40
    %s43 = sadd.s32 %s42, 1
    %p46 = scmp.eq.s32.totalorder %s8, 1
    %p47 = scmp.ne.s32.totalorder %s42, %s44
    %p48 = scmp.eq.s32.totalorder %s8, 0
    %p49 = por %p47, %p48
    %p50 = scmp.ne.s32.totalorder %s42, %s44
    %p51 = scmp.eq.s32.totalorder %s13, 1
    %p52 = por %p50, %p51
    %p53 = scmp.ne.s32.totalorder %s44, %s45
    %p54 = scmp.eq.s32.totalorder %s13, 0
    %p55 = por %p53, %p54
    %p56 = scmp.ne.s32.totalorder %s44, %s45
    %p57 = scmp.eq.s32.totalorder %s14, 1
    %p58 = por %p56, %p57
    %p60 = scmp.ne.s32.totalorder %s45, %s59
    %p61 = scmp.eq.s32.totalorder %s14, 0
    %p62 = por %p60, %p61
    %s63 = ssub.s32 %s8, %s15
    %p64 = scmp.eq.s32.totalorder %s63, 0
    %s66 = sadd.s32 %s65, 1
    %s67 = scalar_select %p64, %s65, %s66
    %p70 = pneg %p64
    %p71 = scmp.eq.s32.totalorder %s8, 1
    %p72 = por %p70, %p71
    %p73 = scmp.ne.s32.totalorder %s65, %s68
    %p74 = scmp.eq.s32.totalorder %s8, 0
    %p75 = por %p73, %p74
    %p76 = scmp.ne.s32.totalorder %s65, %s68
    %p77 = scmp.eq.s32.totalorder %s13, 1
    %p78 = por %p76, %p77
    %p79 = scmp.ne.s32.totalorder %s68, %s69
    %p80 = scmp.eq.s32.totalorder %s13, 0
    %p81 = por %p79, %p80
    %p82 = scmp.ne.s32.totalorder %s68, %s69
    %p83 = scmp.eq.s32.totalorder %s14, 1
    %p84 = por %p82, %p83
    %p86 = scmp.ne.s32.totalorder %s69, %s85
    %p87 = scmp.eq.s32.totalorder %s14, 0
    %p88 = por %p86, %p87
    %p89 = scmp.le.s32.totalorder 1, %s8
    %p90 = scmp.lt.s32.totalorder %s8, 3
    %p91 = pnand %p89, %p90
    %p92 = pneg %p91
    // Predicated region
    $region9: #{_lambda_.9} parent=5 // pred_check
      _
    $region10: #{_lambda_.9} parent=5 // pred_check_branch
      %94 = sbr.rel (%p91) target = $region12
    $region11: #{_lambda_.9} parent=5 // pred_region
      %s95 = ssub.s32 %s8, 1
      // Predicated region
      $region13: #{_lambda_.9} parent=11 // pred_check
        %p96 = pneg %p55
      $region14: #{_lambda_.9} parent=11 // pred_check_branch
        %98 = sbr.rel (%p96) target = $region16
      $region15: #{_lambda_.9} parent=11 // pred_region
        _
      $region16: #{_lambda_.9} parent=11 // pred_fallthru
        _
    $region12: #{_lambda_.9} parent=5 // pred_fallthru
      _
    %p99 = scmp.lt.s32.totalorder %s8, 2
    // Predicated region
    $region17: #{_lambda_.9} parent=5 // pred_check
      %p100 = pneg %p99
    $region18: #{_lambda_.9} parent=5 // pred_check_branch
      %102 = sbr.rel (%p100) target = $region20
    $region19: #{_lambda_.9} parent=5 // pred_region
      // Predicated region
      $region21: #{_lambda_.9} parent=19 // pred_check
        %p103 = pneg %p28
      $region22: #{_lambda_.9} parent=19 // pred_check_branch
        %105 = sbr.rel (%p103) target = $region24
      $region23: #{_lambda_.9} parent=19 // pred_region
        %s106 = smul.u32 128, %s8
        %p107 = scmp.lt.s32.totalorder %s106, 255
        %s108 = scalar_select %p107, %s106, 255
        %s109 = smul.addr %s108, 4
        %s110 = scalar_lea.vmem %s0, %s109
        %s111 = smul.u32 128, %s8
      $region24: #{_lambda_.9} parent=19 // pred_fallthru
        _
    $region20: #{_lambda_.9} parent=5 // pred_fallthru
      _
    %p112 = scmp.le.s32.totalorder 1, %s8
    %p113 = scmp.lt.s32.totalorder %s8, 3
    %p114 = pnand %p112, %p113
    %p115 = pneg %p114
    // Predicated region
    $region25: #{_lambda_.9} parent=5 // pred_check
      _
    $region26: #{_lambda_.9} parent=5 // pred_check_branch
      %117 = sbr.rel (%p114) target = $region28
    $region27: #{_lambda_.9} parent=5 // pred_region
      %s118 = ssub.s32 %s8, 1
      %s119 = smul.u32 128, %s13
      %p120 = scmp.lt.s32.totalorder %s119, 255
      %s121 = scalar_select %p120, %s119, 255
      %s122 = smul.addr %s121, 4
      %s123 = scalar_lea.vmem %s0, %s122
      %p124 = pneg %p34
      %p125 = pneg %p31
      %p126 = pneg %p55
      %p127 = pneg %p52
      %p128 = pneg %p81
      %p129 = pneg %p78
      %s130 = smul.u32 128, %s13
      %p131 = scmp.lt.s32.totalorder %s130, 255
      %s132 = scalar_select %p131, %s130, 255
      %s133 = smul.addr %s132, 4
      %s134 = scalar_lea.vmem %s2, %s133
      %s135 = smul.u32 128, %s13
      %p136 = scmp.lt.s32.totalorder %s135, 255
      %s137 = scalar_select %p136, %s135, 255
      %s138 = smul.addr %s137, 4
      %s139 = scalar_lea.vmem %s0, %s138
      %s140 = smul.u32 128, %s13
      %s141 = smul.u32 128, %s13
      %p142 = scmp.lt.s32.totalorder %s141, 255
      %s143 = scalar_select %p142, %s141, 255
      %s144 = smul.addr %s143, 4
      %s145 = scalar_lea.vmem %s2, %s144
      %s146 = smul.u32 128, %s13
      %v148 = vld [vmem:[%s139] sm:$0xf]
      %v149 = vld [vmem:[%s139 + $0x4] sm:$0xf]
      %v150 = vld [vmem:[%s139 + $0x8] sm:$0xf]
      %v151 = vld [vmem:[%s139 + $0xc] sm:$0xf]
      %v152 = vld [vmem:[%s139 + $0x10] sm:$0xf]
      %v153 = vld [vmem:[%s139 + $0x14] sm:$0xf]
      %v154 = vld [vmem:[%s139 + $0x18] sm:$0xf]
      %v155 = vld [vmem:[%s139 + $0x1c] sm:$0xf]
      %v156 = vld [vmem:[%s139 + $0x20] sm:$0xf]
      %v157 = vld [vmem:[%s139 + $0x24] sm:$0xf]
      %v158 = vld [vmem:[%s139 + $0x28] sm:$0xf]
      %v159 = vld [vmem:[%s139 + $0x2c] sm:$0xf]
      %v160 = vld [vmem:[%s139 + $0x30] sm:$0xf]
      %v161 = vld [vmem:[%s139 + $0x34] sm:$0xf]
      %v162 = vld [vmem:[%s139 + $0x38] sm:$0xf]
      %v163 = vld [vmem:[%s139 + $0x3c] sm:$0xf]
      %v164 = vld [vmem:[%s139 + $0x40] sm:$0xf]
      %v165 = vld [vmem:[%s139 + $0x44] sm:$0xf]
      %v166 = vld [vmem:[%s139 + $0x48] sm:$0xf]
      %v167 = vld [vmem:[%s139 + $0x4c] sm:$0xf]
      %v168 = vld [vmem:[%s139 + $0x50] sm:$0xf]
      %v169 = vld [vmem:[%s139 + $0x54] sm:$0xf]
      %v170 = vld [vmem:[%s139 + $0x58] sm:$0xf]
      %v171 = vld [vmem:[%s139 + $0x5c] sm:$0xf]
      %v172 = vld [vmem:[%s139 + $0x60] sm:$0xf]
      %v173 = vld [vmem:[%s139 + $0x64] sm:$0xf]
      %v174 = vld [vmem:[%s139 + $0x68] sm:$0xf]
      %v175 = vld [vmem:[%s139 + $0x6c] sm:$0xf]
      %v176 = vld [vmem:[%s139 + $0x70] sm:$0xf]
      %v177 = vld [vmem:[%s139 + $0x74] sm:$0xf]
      %v178 = vld [vmem:[%s139 + $0x78] sm:$0xf]
      %v179 = vld [vmem:[%s139 + $0x7c] sm:$0xf]
      %v180 = vld [vmem:[%s139 + $0x80] sm:$0xf]
      %v181 = vld [vmem:[%s139 + $0x84] sm:$0xf]
      %v182 = vld [vmem:[%s139 + $0x88] sm:$0xf]
      %v183 = vld [vmem:[%s139 + $0x8c] sm:$0xf]
      %v184 = vld [vmem:[%s139 + $0x90] sm:$0xf]
      %v185 = vld [vmem:[%s139 + $0x94] sm:$0xf]
      %v186 = vld [vmem:[%s139 + $0x98] sm:$0xf]
      %v187 = vld [vmem:[%s139 + $0x9c] sm:$0xf]
      %v188 = vld [vmem:[%s139 + $0xa0] sm:$0xf]
      %v189 = vld [vmem:[%s139 + $0xa4] sm:$0xf]
      %v190 = vld [vmem:[%s139 + $0xa8] sm:$0xf]
      %v191 = vld [vmem:[%s139 + $0xac] sm:$0xf]
      %v192 = vld [vmem:[%s139 + $0xb0] sm:$0xf]
      %v193 = vld [vmem:[%s139 + $0xb4] sm:$0xf]
      %v194 = vld [vmem:[%s139 + $0xb8] sm:$0xf]
      %v195 = vld [vmem:[%s139 + $0xbc] sm:$0xf]
      %v196 = vld [vmem:[%s139 + $0xc0] sm:$0xf]
      %v197 = vld [vmem:[%s139 + $0xc4] sm:$0xf]
      %v198 = vld [vmem:[%s139 + $0xc8] sm:$0xf]
      %v199 = vld [vmem:[%s139 + $0xcc] sm:$0xf]
      %v200 = vld [vmem:[%s139 + $0xd0] sm:$0xf]
      %v201 = vld [vmem:[%s139 + $0xd4] sm:$0xf]
      %v202 = vld [vmem:[%s139 + $0xd8] sm:$0xf]
      %v203 = vld [vmem:[%s139 + $0xdc] sm:$0xf]
      %v204 = vld [vmem:[%s139 + $0xe0] sm:$0xf]
      %v205 = vld [vmem:[%s139 + $0xe4] sm:$0xf]
      %v206 = vld [vmem:[%s139 + $0xe8] sm:$0xf]
      %v207 = vld [vmem:[%s139 + $0xec] sm:$0xf]
      %v208 = vld [vmem:[%s139 + $0xf0] sm:$0xf]
      %v209 = vld [vmem:[%s139 + $0xf4] sm:$0xf]
      %v210 = vld [vmem:[%s139 + $0xf8] sm:$0xf]
      %v211 = vld [vmem:[%s139 + $0xfc] sm:$0xf]
      %v212 = vld [vmem:[%s139 + $0x100] sm:$0xf]
      %v213 = vld [vmem:[%s139 + $0x104] sm:$0xf]
      %v214 = vld [vmem:[%s139 + $0x108] sm:$0xf]
      %v215 = vld [vmem:[%s139 + $0x10c] sm:$0xf]
      %v216 = vld [vmem:[%s139 + $0x110] sm:$0xf]
      %v217 = vld [vmem:[%s139 + $0x114] sm:$0xf]
      %v218 = vld [vmem:[%s139 + $0x118] sm:$0xf]
      %v219 = vld [vmem:[%s139 + $0x11c] sm:$0xf]
      %v220 = vld [vmem:[%s139 + $0x120] sm:$0xf]
      %v221 = vld [vmem:[%s139 + $0x124] sm:$0xf]
      %v222 = vld [vmem:[%s139 + $0x128] sm:$0xf]
      %v223 = vld [vmem:[%s139 + $0x12c] sm:$0xf]
      %v224 = vld [vmem:[%s139 + $0x130] sm:$0xf]
      %v225 = vld [vmem:[%s139 + $0x134] sm:$0xf]
      %v226 = vld [vmem:[%s139 + $0x138] sm:$0xf]
      %v227 = vld [vmem:[%s139 + $0x13c] sm:$0xf]
      %v228 = vld [vmem:[%s139 + $0x140] sm:$0xf]
      %v229 = vld [vmem:[%s139 + $0x144] sm:$0xf]
      %v230 = vld [vmem:[%s139 + $0x148] sm:$0xf]
      %v231 = vld [vmem:[%s139 + $0x14c] sm:$0xf]
      %v232 = vld [vmem:[%s139 + $0x150] sm:$0xf]
      %v233 = vld [vmem:[%s139 + $0x154] sm:$0xf]
      %v234 = vld [vmem:[%s139 + $0x158] sm:$0xf]
      %v235 = vld [vmem:[%s139 + $0x15c] sm:$0xf]
      %v236 = vld [vmem:[%s139 + $0x160] sm:$0xf]
      %v237 = vld [vmem:[%s139 + $0x164] sm:$0xf]
      %v238 = vld [vmem:[%s139 + $0x168] sm:$0xf]
      %v239 = vld [vmem:[%s139 + $0x16c] sm:$0xf]
      %v240 = vld [vmem:[%s139 + $0x170] sm:$0xf]
      %v241 = vld [vmem:[%s139 + $0x174] sm:$0xf]
      %v242 = vld [vmem:[%s139 + $0x178] sm:$0xf]
      %v243 = vld [vmem:[%s139 + $0x17c] sm:$0xf]
      %v244 = vld [vmem:[%s139 + $0x180] sm:$0xf]
      %v245 = vld [vmem:[%s139 + $0x184] sm:$0xf]
      %v246 = vld [vmem:[%s139 + $0x188] sm:$0xf]
      %v247 = vld [vmem:[%s139 + $0x18c] sm:$0xf]
      %v248 = vld [vmem:[%s139 + $0x190] sm:$0xf]
      %v249 = vld [vmem:[%s139 + $0x194] sm:$0xf]
      %v250 = vld [vmem:[%s139 + $0x198] sm:$0xf]
      %v251 = vld [vmem:[%s139 + $0x19c] sm:$0xf]
      %v252 = vld [vmem:[%s139 + $0x1a0] sm:$0xf]
      %v253 = vld [vmem:[%s139 + $0x1a4] sm:$0xf]
      %v254 = vld [vmem:[%s139 + $0x1a8] sm:$0xf]
      %v255 = vld [vmem:[%s139 + $0x1ac] sm:$0xf]
      %v256 = vld [vmem:[%s139 + $0x1b0] sm:$0xf]
      %v257 = vld [vmem:[%s139 + $0x1b4] sm:$0xf]
      %v258 = vld [vmem:[%s139 + $0x1b8] sm:$0xf]
      %v259 = vld [vmem:[%s139 + $0x1bc] sm:$0xf]
      %v260 = vld [vmem:[%s139 + $0x1c0] sm:$0xf]
      %v261 = vld [vmem:[%s139 + $0x1c4] sm:$0xf]
      %v262 = vld [vmem:[%s139 + $0x1c8] sm:$0xf]
      %v263 = vld [vmem:[%s139 + $0x1cc] sm:$0xf]
      %v264 = vld [vmem:[%s139 + $0x1d0] sm:$0xf]
      %v265 = vld [vmem:[%s139 + $0x1d4] sm:$0xf]
      %v266 = vld [vmem:[%s139 + $0x1d8] sm:$0xf]
      %v267 = vld [vmem:[%s139 + $0x1dc] sm:$0xf]
      %v268 = vld [vmem:[%s139 + $0x1e0] sm:$0xf]
      %v269 = vld [vmem:[%s139 + $0x1e4] sm:$0xf]
      %v270 = vld [vmem:[%s139 + $0x1e8] sm:$0xf]
      %v271 = vld [vmem:[%s139 + $0x1ec] sm:$0xf]
      %v272 = vld [vmem:[%s139 + $0x1f0] sm:$0xf]
      %v273 = vld [vmem:[%s139 + $0x1f4] sm:$0xf]
      %v274 = vld [vmem:[%s139 + $0x1f8] sm:$0xf]
      %v275 = vld [vmem:[%s139 + $0x1fc] sm:$0xf]
      %v276 = vld [vmem:[%s1] sm:$0xf]
      %v405 = vunpack.c.l.b16 %v148
      %v406 = vunpack.c.l.b16 %v149
      %v407 = vunpack.c.l.b16 %v150
      %v408 = vunpack.c.l.b16 %v151
      %v409 = vunpack.c.l.b16 %v152
      %v410 = vunpack.c.l.b16 %v153
      %v411 = vunpack.c.l.b16 %v154
      %v412 = vunpack.c.l.b16 %v155
      %v413 = vunpack.c.l.b16 %v156
      %v414 = vunpack.c.l.b16 %v157
      %v415 = vunpack.c.l.b16 %v158
      %v416 = vunpack.c.l.b16 %v159
      %v417 = vunpack.c.l.b16 %v160
      %v418 = vunpack.c.l.b16 %v161
      %v419 = vunpack.c.l.b16 %v162
      %v420 = vunpack.c.l.b16 %v163
      %v421 = vunpack.c.l.b16 %v164
      %v422 = vunpack.c.l.b16 %v165
      %v423 = vunpack.c.l.b16 %v166
      %v424 = vunpack.c.l.b16 %v167
      %v425 = vunpack.c.l.b16 %v168
      %v426 = vunpack.c.l.b16 %v169
      %v427 = vunpack.c.l.b16 %v170
      %v428 = vunpack.c.l.b16 %v171
      %v429 = vunpack.c.l.b16 %v172
      %v430 = vunpack.c.l.b16 %v173
      %v431 = vunpack.c.l.b16 %v174
      %v432 = vunpack.c.l.b16 %v175
      %v433 = vunpack.c.l.b16 %v176
      %v434 = vunpack.c.l.b16 %v177
      %v435 = vunpack.c.l.b16 %v178
      %v436 = vunpack.c.l.b16 %v179
      %v437 = vunpack.c.l.b16 %v180
      %v438 = vunpack.c.l.b16 %v181
      %v439 = vunpack.c.l.b16 %v182
      %v440 = vunpack.c.l.b16 %v183
      %v441 = vunpack.c.l.b16 %v184
      %v442 = vunpack.c.l.b16 %v185
      %v443 = vunpack.c.l.b16 %v186
      %v444 = vunpack.c.l.b16 %v187
      %v445 = vunpack.c.l.b16 %v188
      %v446 = vunpack.c.l.b16 %v189
      %v447 = vunpack.c.l.b16 %v190
      %v448 = vunpack.c.l.b16 %v191
      %v449 = vunpack.c.l.b16 %v192
      %v450 = vunpack.c.l.b16 %v193
      %v451 = vunpack.c.l.b16 %v194
      %v452 = vunpack.c.l.b16 %v195
      %v453 = vunpack.c.l.b16 %v196
      %v454 = vunpack.c.l.b16 %v197
      %v455 = vunpack.c.l.b16 %v198
      %v456 = vunpack.c.l.b16 %v199
      %v457 = vunpack.c.l.b16 %v200
      %v458 = vunpack.c.l.b16 %v201
      %v459 = vunpack.c.l.b16 %v202
      %v460 = vunpack.c.l.b16 %v203
      %v461 = vunpack.c.l.b16 %v204
      %v462 = vunpack.c.l.b16 %v205
      %v463 = vunpack.c.l.b16 %v206
      %v464 = vunpack.c.l.b16 %v207
      %v465 = vunpack.c.l.b16 %v208
      %v466 = vunpack.c.l.b16 %v209
      %v467 = vunpack.c.l.b16 %v210
      %v468 = vunpack.c.l.b16 %v211
      %v469 = vunpack.c.l.b16 %v212
      %v470 = vunpack.c.l.b16 %v213
      %v471 = vunpack.c.l.b16 %v214
      %v472 = vunpack.c.l.b16 %v215
      %v473 = vunpack.c.l.b16 %v216
      %v474 = vunpack.c.l.b16 %v217
      %v475 = vunpack.c.l.b16 %v218
      %v476 = vunpack.c.l.b16 %v219
      %v477 = vunpack.c.l.b16 %v220
      %v478 = vunpack.c.l.b16 %v221
      %v479 = vunpack.c.l.b16 %v222
      %v480 = vunpack.c.l.b16 %v223
      %v481 = vunpack.c.l.b16 %v224
      %v482 = vunpack.c.l.b16 %v225
      %v483 = vunpack.c.l.b16 %v226
      %v484 = vunpack.c.l.b16 %v227
      %v485 = vunpack.c.l.b16 %v228
      %v486 = vunpack.c.l.b16 %v229
      %v487 = vunpack.c.l.b16 %v230
      %v488 = vunpack.c.l.b16 %v231
      %v489 = vunpack.c.l.b16 %v232
      %v490 = vunpack.c.l.b16 %v233
      %v491 = vunpack.c.l.b16 %v234
      %v492 = vunpack.c.l.b16 %v235
      %v493 = vunpack.c.l.b16 %v236
      %v494 = vunpack.c.l.b16 %v237
      %v495 = vunpack.c.l.b16 %v238
      %v496 = vunpack.c.l.b16 %v239
      %v497 = vunpack.c.l.b16 %v240
      %v498 = vunpack.c.l.b16 %v241
      %v499 = vunpack.c.l.b16 %v242
      %v500 = vunpack.c.l.b16 %v243
      %v501 = vunpack.c.l.b16 %v244
      %v502 = vunpack.c.l.b16 %v245
      %v503 = vunpack.c.l.b16 %v246
      %v504 = vunpack.c.l.b16 %v247
      %v505 = vunpack.c.l.b16 %v248
      %v506 = vunpack.c.l.b16 %v249
      %v507 = vunpack.c.l.b16 %v250
      %v508 = vunpack.c.l.b16 %v251
      %v509 = vunpack.c.l.b16 %v252
      %v510 = vunpack.c.l.b16 %v253
      %v511 = vunpack.c.l.b16 %v254
      %v512 = vunpack.c.l.b16 %v255
      %v513 = vunpack.c.l.b16 %v256
      %v514 = vunpack.c.l.b16 %v257
      %v515 = vunpack.c.l.b16 %v258
      %v516 = vunpack.c.l.b16 %v259
      %v517 = vunpack.c.l.b16 %v260
      %v518 = vunpack.c.l.b16 %v261
      %v519 = vunpack.c.l.b16 %v262
      %v520 = vunpack.c.l.b16 %v263
      %v521 = vunpack.c.l.b16 %v264
      %v522 = vunpack.c.l.b16 %v265
      %v523 = vunpack.c.l.b16 %v266
      %v524 = vunpack.c.l.b16 %v267
      %v525 = vunpack.c.l.b16 %v268
      %v526 = vunpack.c.l.b16 %v269
      %v527 = vunpack.c.l.b16 %v270
      %v528 = vunpack.c.l.b16 %v271
      %v529 = vunpack.c.l.b16 %v272
      %v530 = vunpack.c.l.b16 %v273
      %v531 = vunpack.c.l.b16 %v274
      %v532 = vunpack.c.l.b16 %v275
      %v533 = vpack.c.b16 %v406, %v405
      %v534 = vpack.c.b16 %v408, %v407
      %v535 = vpack.c.b16 %v410, %v409
      %v536 = vpack.c.b16 %v412, %v411
      %v537 = vpack.c.b16 %v414, %v413
      %v538 = vpack.c.b16 %v416, %v415
      %v539 = vpack.c.b16 %v418, %v417
      %v540 = vpack.c.b16 %v420, %v419
      %v541 = vpack.c.b16 %v422, %v421
      %v542 = vpack.c.b16 %v424, %v423
      %v543 = vpack.c.b16 %v426, %v425
      %v544 = vpack.c.b16 %v428, %v427
      %v545 = vpack.c.b16 %v430, %v429
      %v546 = vpack.c.b16 %v432, %v431
      %v547 = vpack.c.b16 %v434, %v433
      %v548 = vpack.c.b16 %v436, %v435
      %v549 = vpack.c.b16 %v438, %v437
      %v550 = vpack.c.b16 %v440, %v439
      %v551 = vpack.c.b16 %v442, %v441
      %v552 = vpack.c.b16 %v444, %v443
      %v553 = vpack.c.b16 %v446, %v445
      %v554 = vpack.c.b16 %v448, %v447
      %v555 = vpack.c.b16 %v450, %v449
      %v556 = vpack.c.b16 %v452, %v451
      %v557 = vpack.c.b16 %v454, %v453
      %v558 = vpack.c.b16 %v456, %v455
      %v559 = vpack.c.b16 %v458, %v457
      %v560 = vpack.c.b16 %v460, %v459
      %v561 = vpack.c.b16 %v462, %v461
      %v562 = vpack.c.b16 %v464, %v463
      %v563 = vpack.c.b16 %v466, %v465
      %v564 = vpack.c.b16 %v468, %v467
      %v565 = vpack.c.b16 %v470, %v469
      %v566 = vpack.c.b16 %v472, %v471
      %v567 = vpack.c.b16 %v474, %v473
      %v568 = vpack.c.b16 %v476, %v475
      %v569 = vpack.c.b16 %v478, %v477
      %v570 = vpack.c.b16 %v480, %v479
      %v571 = vpack.c.b16 %v482, %v481
      %v572 = vpack.c.b16 %v484, %v483
      %v573 = vpack.c.b16 %v486, %v485
      %v574 = vpack.c.b16 %v488, %v487
      %v575 = vpack.c.b16 %v490, %v489
      %v576 = vpack.c.b16 %v492, %v491
      %v577 = vpack.c.b16 %v494, %v493
      %v578 = vpack.c.b16 %v496, %v495
      %v579 = vpack.c.b16 %v498, %v497
      %v580 = vpack.c.b16 %v500, %v499
      %v581 = vpack.c.b16 %v502, %v501
      %v582 = vpack.c.b16 %v504, %v503
      %v583 = vpack.c.b16 %v506, %v505
      %v584 = vpack.c.b16 %v508, %v507
      %v585 = vpack.c.b16 %v510, %v509
      %v586 = vpack.c.b16 %v512, %v511
      %v587 = vpack.c.b16 %v514, %v513
      %v588 = vpack.c.b16 %v516, %v515
      %v589 = vpack.c.b16 %v518, %v517
      %v590 = vpack.c.b16 %v520, %v519
      %v591 = vpack.c.b16 %v522, %v521
      %v592 = vpack.c.b16 %v524, %v523
      %v593 = vpack.c.b16 %v526, %v525
      %v594 = vpack.c.b16 %v528, %v527
      %v595 = vpack.c.b16 %v530, %v529
      %v596 = vpack.c.b16 %v532, %v531
      %vm597 = vcmask 64512
      %v599 = vsel %vm597, %v533, 0
      %v602 = vsel %vm597, %v534, 0
      %v605 = vsel %vm597, %v535, 0
      %v608 = vsel %vm597, %v536, 0
      %v611 = vsel %vm597, %v537, 0
      %v614 = vsel %vm597, %v538, 0
      %v617 = vsel %vm597, %v539, 0
      %v620 = vsel %vm597, %v540, 0
      %v623 = vsel %vm597, %v541, 0
      %v626 = vsel %vm597, %v542, 0
      %v629 = vsel %vm597, %v543, 0
      %v632 = vsel %vm597, %v544, 0
      %v635 = vsel %vm597, %v545, 0
      %v638 = vsel %vm597, %v546, 0
      %v641 = vsel %vm597, %v547, 0
      %v644 = vsel %vm597, %v548, 0
      %v647 = vsel %vm597, %v549, 0
      %v650 = vsel %vm597, %v550, 0
      %v653 = vsel %vm597, %v551, 0
      %v656 = vsel %vm597, %v552, 0
      %v659 = vsel %vm597, %v553, 0
      %v662 = vsel %vm597, %v554, 0
      %v665 = vsel %vm597, %v555, 0
      %v668 = vsel %vm597, %v556, 0
      %v671 = vsel %vm597, %v557, 0
      %v674 = vsel %vm597, %v558, 0
      %v677 = vsel %vm597, %v559, 0
      %v680 = vsel %vm597, %v560, 0
      %v683 = vsel %vm597, %v561, 0
      %v686 = vsel %vm597, %v562, 0
      %v689 = vsel %vm597, %v563, 0
      %v692 = vsel %vm597, %v564, 0
      %v695 = vsel %vm597, %v565, 0
      %v698 = vsel %vm597, %v566, 0
      %v701 = vsel %vm597, %v567, 0
      %v704 = vsel %vm597, %v568, 0
      %v707 = vsel %vm597, %v569, 0
      %v710 = vsel %vm597, %v570, 0
      %v713 = vsel %vm597, %v571, 0
      %v716 = vsel %vm597, %v572, 0
      %v719 = vsel %vm597, %v573, 0
      %v722 = vsel %vm597, %v574, 0
      %v725 = vsel %vm597, %v575, 0
      %v728 = vsel %vm597, %v576, 0
      %v731 = vsel %vm597, %v577, 0
      %v734 = vsel %vm597, %v578, 0
      %v737 = vsel %vm597, %v579, 0
      %v740 = vsel %vm597, %v580, 0
      %v743 = vsel %vm597, %v581, 0
      %v746 = vsel %vm597, %v582, 0
      %v749 = vsel %vm597, %v583, 0
      %v752 = vsel %vm597, %v584, 0
      %v755 = vsel %vm597, %v585, 0
      %v758 = vsel %vm597, %v586, 0
      %v761 = vsel %vm597, %v587, 0
      %v764 = vsel %vm597, %v588, 0
      %v767 = vsel %vm597, %v589, 0
      %v770 = vsel %vm597, %v590, 0
      %v773 = vsel %vm597, %v591, 0
      %v776 = vsel %vm597, %v592, 0
      %v779 = vsel %vm597, %v593, 0
      %v782 = vsel %vm597, %v594, 0
      %v785 = vsel %vm597, %v595, 0
      %v788 = vsel %vm597, %v596, 0
      %vm790 = vcmask 1043456
      %v792 = vsel %vm790, %v276, 0
      %794 = vmatprep.subr.bf16.mxu0 0
      %795 = vmatpush1.bf16.msra.mxu0 0
      %796 = vmatprep.subr.bf16.mxu0 0
      %797 = vmatpush1.bf16.msra.mxu0 0
      %798 = vmatprep.subr.bf16.mxu0 0
      %799 = vmatpush1.bf16.msra.mxu0 0
      %800 = vmatprep.subr.bf16.mxu0 0
      %801 = vmatpush1.bf16.msra.mxu0 0
      %802 = vmatprep.subr.bf16.mxu0 0
      %803 = vmatpush1.bf16.msra.mxu0 0
      %804 = vmatprep.subr.bf16.mxu0 0
      %805 = vmatpush1.bf16.msra.mxu0 0
      %806 = vmatprep.subr.bf16.mxu0 0
      %807 = vmatpush1.bf16.msra.mxu0 0
      %808 = vmatprep.subr.bf16.mxu0 0
      %809 = vmatpush1.bf16.msra.mxu0 %v792
      %810 = vmatprep.subr.bf16.mxu0 0
      %811 = vmatpush2.bf16.msra.mxu0 0
      %812 = vmatprep.subr.bf16.mxu0 0
      %813 = vmatpush2.bf16.msra.mxu0 0
      %814 = vmatprep.subr.bf16.mxu0 0
      %815 = vmatpush2.bf16.msra.mxu0 0
      %816 = vmatprep.subr.bf16.mxu0 0
      %817 = vmatpush2.bf16.msra.mxu0 0
      %818 = vmatprep.subr.bf16.mxu0 0
      %819 = vmatpush2.bf16.msra.mxu0 0
      %820 = vmatprep.subr.bf16.mxu0 0
      %821 = vmatpush2.bf16.msra.mxu0 0
      %822 = vmatprep.subr.bf16.mxu0 0
      %823 = vmatpush2.bf16.msra.mxu0 0
      %824 = vmatprep.subr.bf16.mxu0 0
      %825 = vmatpush2.bf16.msra.mxu0 0
      %826 = vmatprep.mubr.bf16.mxu0 0
      %827 = vmatmul.mubr.bf16.gmra.mxu0 %v599
      %v828 = vpop.f32.mrf.mxu0
      %v829 = vadd.f32 0.0, %v828
      %v830 = vpop.f32.mrf.mxu0
      %v831 = vpop.f32.mrf.mxu0
      %v832 = vadd.f32 0.0, %v831
      %v833 = vpop.f32.mrf.mxu0
      %834 = vmatprep.mubr.bf16.mxu0 0
      %835 = vmatmul.mubr.bf16.gmra.mxu0 %v602
      %v836 = vpop.f32.mrf.mxu0
      %v837 = vadd.f32 0.0, %v836
      %v838 = vpop.f32.mrf.mxu0
      %v839 = vpop.f32.mrf.mxu0
      %v840 = vadd.f32 0.0, %v839
      %v841 = vpop.f32.mrf.mxu0
      %842 = vmatprep.mubr.bf16.mxu0 0
      %843 = vmatmul.mubr.bf16.gmra.mxu0 %v605
      %v844 = vpop.f32.mrf.mxu0
      %v845 = vadd.f32 0.0, %v844
      %v846 = vpop.f32.mrf.mxu0
      %v847 = vpop.f32.mrf.mxu0
      %v848 = vadd.f32 0.0, %v847
      %v849 = vpop.f32.mrf.mxu0
      %850 = vmatprep.mubr.bf16.mxu0 0
      %851 = vmatmul.mubr.bf16.gmra.mxu0 %v608
      %v852 = vpop.f32.mrf.mxu0
      %v853 = vadd.f32 0.0, %v852
      %v854 = vpop.f32.mrf.mxu0
      %v855 = vpop.f32.mrf.mxu0
      %v856 = vadd.f32 0.0, %v855
      %v857 = vpop.f32.mrf.mxu0
      %858 = vmatprep.mubr.bf16.mxu0 0
      %859 = vmatmul.mubr.bf16.gmra.mxu0 %v611
      %v860 = vpop.f32.mrf.mxu0
      %v861 = vadd.f32 0.0, %v860
      %v862 = vpop.f32.mrf.mxu0
      %v863 = vpop.f32.mrf.mxu0
      %v864 = vadd.f32 0.0, %v863
      %v865 = vpop.f32.mrf.mxu0
      %866 = vmatprep.mubr.bf16.mxu0 0
      %867 = vmatmul.mubr.bf16.gmra.mxu0 %v614
      %v868 = vpop.f32.mrf.mxu0
      %v869 = vadd.f32 0.0, %v868
      %v870 = vpop.f32.mrf.mxu0
      %v871 = vpop.f32.mrf.mxu0
      %v872 = vadd.f32 0.0, %v871
      %v873 = vpop.f32.mrf.mxu0
      %874 = vmatprep.mubr.bf16.mxu0 0
      %875 = vmatmul.mubr.bf16.gmra.mxu0 %v617
      %v876 = vpop.f32.mrf.mxu0
      %v877 = vadd.f32 0.0, %v876
      %v878 = vpop.f32.mrf.mxu0
      %v879 = vpop.f32.mrf.mxu0
      %v880 = vadd.f32 0.0, %v879
      %v881 = vpop.f32.mrf.mxu0
      %882 = vmatprep.mubr.bf16.mxu0 0
      %883 = vmatmul.mubr.bf16.gmra.mxu0 %v620
      %v884 = vpop.f32.mrf.mxu0
      %v885 = vadd.f32 0.0, %v884
      %v886 = vpop.f32.mrf.mxu0
      %v887 = vpop.f32.mrf.mxu0
      %v888 = vadd.f32 0.0, %v887
      %v889 = vpop.f32.mrf.mxu0
      %890 = vmatprep.mubr.bf16.mxu0 0
      %891 = vmatmul.mubr.bf16.gmra.mxu0 %v623
      %v892 = vpop.f32.mrf.mxu0
      %v893 = vadd.f32 0.0, %v892
      %v894 = vpop.f32.mrf.mxu0
      %v895 = vpop.f32.mrf.mxu0
      %v896 = vadd.f32 0.0, %v895
      %v897 = vpop.f32.mrf.mxu0
      %898 = vmatprep.mubr.bf16.mxu0 0
      %899 = vmatmul.mubr.bf16.gmra.mxu0 %v626
      %v900 = vpop.f32.mrf.mxu0
      %v901 = vadd.f32 0.0, %v900
      %v902 = vpop.f32.mrf.mxu0
      %v903 = vpop.f32.mrf.mxu0
      %v904 = vadd.f32 0.0, %v903
      %v905 = vpop.f32.mrf.mxu0
      %906 = vmatprep.mubr.bf16.mxu0 0
      %907 = vmatmul.mubr.bf16.gmra.mxu0 %v629
      %v908 = vpop.f32.mrf.mxu0
      %v909 = vadd.f32 0.0, %v908
      %v910 = vpop.f32.mrf.mxu0
      %v911 = vpop.f32.mrf.mxu0
      %v912 = vadd.f32 0.0, %v911
      %v913 = vpop.f32.mrf.mxu0
      %914 = vmatprep.mubr.bf16.mxu0 0
      %915 = vmatmul.mubr.bf16.gmra.mxu0 %v632
      %v916 = vpop.f32.mrf.mxu0
      %v917 = vadd.f32 0.0, %v916
      %v918 = vpop.f32.mrf.mxu0
      %v919 = vpop.f32.mrf.mxu0
      %v920 = vadd.f32 0.0, %v919
      %v921 = vpop.f32.mrf.mxu0
      %922 = vmatprep.mubr.bf16.mxu0 0
      %923 = vmatmul.mubr.bf16.gmra.mxu0 %v635
      %v924 = vpop.f32.mrf.mxu0
      %v925 = vadd.f32 0.0, %v924
      %v926 = vpop.f32.mrf.mxu0
      %v927 = vpop.f32.mrf.mxu0
      %v928 = vadd.f32 0.0, %v927
      %v929 = vpop.f32.mrf.mxu0
      %930 = vmatprep.mubr.bf16.mxu0 0
      %931 = vmatmul.mubr.bf16.gmra.mxu0 %v638
      %v932 = vpop.f32.mrf.mxu0
      %v933 = vadd.f32 0.0, %v932
      %v934 = vpop.f32.mrf.mxu0
      %v935 = vpop.f32.mrf.mxu0
      %v936 = vadd.f32 0.0, %v935
      %v937 = vpop.f32.mrf.mxu0
      %938 = vmatprep.mubr.bf16.mxu0 0
      %939 = vmatmul.mubr.bf16.gmra.mxu0 %v641
      %v940 = vpop.f32.mrf.mxu0
      %v941 = vadd.f32 0.0, %v940
      %v942 = vpop.f32.mrf.mxu0
      %v943 = vpop.f32.mrf.mxu0
      %v944 = vadd.f32 0.0, %v943
      %v945 = vpop.f32.mrf.mxu0
      %946 = vmatprep.mubr.bf16.mxu0 0
      %947 = vmatmul.mubr.bf16.gmra.mxu0 %v644
      %v948 = vpop.f32.mrf.mxu0
      %v949 = vadd.f32 0.0, %v948
      %v950 = vpop.f32.mrf.mxu0
      %v951 = vpop.f32.mrf.mxu0
      %v952 = vadd.f32 0.0, %v951
      %v953 = vpop.f32.mrf.mxu0
      %954 = vmatprep.mubr.bf16.mxu0 0
      %955 = vmatmul.mubr.bf16.gmra.mxu0 %v647
      %v956 = vpop.f32.mrf.mxu0
      %v957 = vadd.f32 0.0, %v956
      %v958 = vpop.f32.mrf.mxu0
      %v959 = vpop.f32.mrf.mxu0
      %v960 = vadd.f32 0.0, %v959
      %v961 = vpop.f32.mrf.mxu0
      %962 = vmatprep.mubr.bf16.mxu0 0
      %963 = vmatmul.mubr.bf16.gmra.mxu0 %v650
      %v964 = vpop.f32.mrf.mxu0
      %v965 = vadd.f32 0.0, %v964
      %v966 = vpop.f32.mrf.mxu0
      %v967 = vpop.f32.mrf.mxu0
      %v968 = vadd.f32 0.0, %v967
      %v969 = vpop.f32.mrf.mxu0
      %970 = vmatprep.mubr.bf16.mxu0 0
      %971 = vmatmul.mubr.bf16.gmra.mxu0 %v653
      %v972 = vpop.f32.mrf.mxu0
      %v973 = vadd.f32 0.0, %v972
      %v974 = vpop.f32.mrf.mxu0
      %v975 = vpop.f32.mrf.mxu0
      %v976 = vadd.f32 0.0, %v975
      %v977 = vpop.f32.mrf.mxu0
      %978 = vmatprep.mubr.bf16.mxu0 0
      %979 = vmatmul.mubr.bf16.gmra.mxu0 %v656
      %v980 = vpop.f32.mrf.mxu0
      %v981 = vadd.f32 0.0, %v980
      %v982 = vpop.f32.mrf.mxu0
      %v983 = vpop.f32.mrf.mxu0
      %v984 = vadd.f32 0.0, %v983
      %v985 = vpop.f32.mrf.mxu0
      %986 = vmatprep.mubr.bf16.mxu0 0
      %987 = vmatmul.mubr.bf16.gmra.mxu0 %v659
      %v988 = vpop.f32.mrf.mxu0
      %v989 = vadd.f32 0.0, %v988
      %v990 = vpop.f32.mrf.mxu0
      %v991 = vpop.f32.mrf.mxu0
      %v992 = vadd.f32 0.0, %v991
      %v993 = vpop.f32.mrf.mxu0
      %994 = vmatprep.mubr.bf16.mxu0 0
      %995 = vmatmul.mubr.bf16.gmra.mxu0 %v662
      %v996 = vpop.f32.mrf.mxu0
      %v997 = vadd.f32 0.0, %v996
      %v998 = vpop.f32.mrf.mxu0
      %v999 = vpop.f32.mrf.mxu0
      %v1000 = vadd.f32 0.0, %v999
      %v1001 = vpop.f32.mrf.mxu0
      %1002 = vmatprep.mubr.bf16.mxu0 0
      %1003 = vmatmul.mubr.bf16.gmra.mxu0 %v665
      %v1004 = vpop.f32.mrf.mxu0
      %v1005 = vadd.f32 0.0, %v1004
      %v1006 = vpop.f32.mrf.mxu0
      %v1007 = vpop.f32.mrf.mxu0
      %v1008 = vadd.f32 0.0, %v1007
      %v1009 = vpop.f32.mrf.mxu0
      %1010 = vmatprep.mubr.bf16.mxu0 0
      %1011 = vmatmul.mubr.bf16.gmra.mxu0 %v668
      %v1012 = vpop.f32.mrf.mxu0
      %v1013 = vadd.f32 0.0, %v1012
      %v1014 = vpop.f32.mrf.mxu0
      %v1015 = vpop.f32.mrf.mxu0
      %v1016 = vadd.f32 0.0, %v1015
      %v1017 = vpop.f32.mrf.mxu0
      %1018 = vmatprep.mubr.bf16.mxu0 0
      %1019 = vmatmul.mubr.bf16.gmra.mxu0 %v671
      %v1020 = vpop.f32.mrf.mxu0
      %v1021 = vadd.f32 0.0, %v1020
      %v1022 = vpop.f32.mrf.mxu0
      %v1023 = vpop.f32.mrf.mxu0
      %v1024 = vadd.f32 0.0, %v1023
      %v1025 = vpop.f32.mrf.mxu0
      %1026 = vmatprep.mubr.bf16.mxu0 0
      %1027 = vmatmul.mubr.bf16.gmra.mxu0 %v674
      %v1028 = vpop.f32.mrf.mxu0
      %v1029 = vadd.f32 0.0, %v1028
      %v1030 = vpop.f32.mrf.mxu0
      %v1031 = vpop.f32.mrf.mxu0
      %v1032 = vadd.f32 0.0, %v1031
      %v1033 = vpop.f32.mrf.mxu0
      %1034 = vmatprep.mubr.bf16.mxu0 0
      %1035 = vmatmul.mubr.bf16.gmra.mxu0 %v677
      %v1036 = vpop.f32.mrf.mxu0
      %v1037 = vadd.f32 0.0, %v1036
      %v1038 = vpop.f32.mrf.mxu0
      %v1039 = vpop.f32.mrf.mxu0
      %v1040 = vadd.f32 0.0, %v1039
      %v1041 = vpop.f32.mrf.mxu0
      %1042 = vmatprep.mubr.bf16.mxu0 0
      %1043 = vmatmul.mubr.bf16.gmra.mxu0 %v680
      %v1044 = vpop.f32.mrf.mxu0
      %v1045 = vadd.f32 0.0, %v1044
      %v1046 = vpop.f32.mrf.mxu0
      %v1047 = vpop.f32.mrf.mxu0
      %v1048 = vadd.f32 0.0, %v1047
      %v1049 = vpop.f32.mrf.mxu0
      %1050 = vmatprep.mubr.bf16.mxu0 0
      %1051 = vmatmul.mubr.bf16.gmra.mxu0 %v683
      %v1052 = vpop.f32.mrf.mxu0
      %v1053 = vadd.f32 0.0, %v1052
      %v1054 = vpop.f32.mrf.mxu0
      %v1055 = vpop.f32.mrf.mxu0
      %v1056 = vadd.f32 0.0, %v1055
      %v1057 = vpop.f32.mrf.mxu0
      %1058 = vmatprep.mubr.bf16.mxu0 0
      %1059 = vmatmul.mubr.bf16.gmra.mxu0 %v686
      %v1060 = vpop.f32.mrf.mxu0
      %v1061 = vadd.f32 0.0, %v1060
      %v1062 = vpop.f32.mrf.mxu0
      %v1063 = vpop.f32.mrf.mxu0
      %v1064 = vadd.f32 0.0, %v1063
      %v1065 = vpop.f32.mrf.mxu0
      %1066 = vmatprep.mubr.bf16.mxu0 0
      %1067 = vmatmul.mubr.bf16.gmra.mxu0 %v689
      %v1068 = vpop.f32.mrf.mxu0
      %v1069 = vadd.f32 0.0, %v1068
      %v1070 = vpop.f32.mrf.mxu0
      %v1071 = vpop.f32.mrf.mxu0
      %v1072 = vadd.f32 0.0, %v1071
      %v1073 = vpop.f32.mrf.mxu0
      %1074 = vmatprep.mubr.bf16.mxu0 0
      %1075 = vmatmul.mubr.bf16.gmra.mxu0 %v692
      %v1076 = vpop.f32.mrf.mxu0
      %v1077 = vadd.f32 0.0, %v1076
      %v1078 = vpop.f32.mrf.mxu0
      %v1079 = vpop.f32.mrf.mxu0
      %v1080 = vadd.f32 0.0, %v1079
      %v1081 = vpop.f32.mrf.mxu0
      %1082 = vmatprep.mubr.bf16.mxu0 0
      %1083 = vmatmul.mubr.bf16.gmra.mxu0 %v695
      %v1084 = vpop.f32.mrf.mxu0
      %v1085 = vadd.f32 0.0, %v1084
      %v1086 = vpop.f32.mrf.mxu0
      %v1087 = vpop.f32.mrf.mxu0
      %v1088 = vadd.f32 0.0, %v1087
      %v1089 = vpop.f32.mrf.mxu0
      %1090 = vmatprep.mubr.bf16.mxu0 0
      %1091 = vmatmul.mubr.bf16.gmra.mxu0 %v698
      %v1092 = vpop.f32.mrf.mxu0
      %v1093 = vadd.f32 0.0, %v1092
      %v1094 = vpop.f32.mrf.mxu0
      %v1095 = vpop.f32.mrf.mxu0
      %v1096 = vadd.f32 0.0, %v1095
      %v1097 = vpop.f32.mrf.mxu0
      %1098 = vmatprep.mubr.bf16.mxu0 0
      %1099 = vmatmul.mubr.bf16.gmra.mxu0 %v701
      %v1100 = vpop.f32.mrf.mxu0
      %v1101 = vadd.f32 0.0, %v1100
      %v1102 = vpop.f32.mrf.mxu0
      %v1103 = vpop.f32.mrf.mxu0
      %v1104 = vadd.f32 0.0, %v1103
      %v1105 = vpop.f32.mrf.mxu0
      %1106 = vmatprep.mubr.bf16.mxu0 0
      %1107 = vmatmul.mubr.bf16.gmra.mxu0 %v704
      %v1108 = vpop.f32.mrf.mxu0
      %v1109 = vadd.f32 0.0, %v1108
      %v1110 = vpop.f32.mrf.mxu0
      %v1111 = vpop.f32.mrf.mxu0
      %v1112 = vadd.f32 0.0, %v1111
      %v1113 = vpop.f32.mrf.mxu0
      %1114 = vmatprep.mubr.bf16.mxu0 0
      %1115 = vmatmul.mubr.bf16.gmra.mxu0 %v707
      %v1116 = vpop.f32.mrf.mxu0
      %v1117 = vadd.f32 0.0, %v1116
      %v1118 = vpop.f32.mrf.mxu0
      %v1119 = vpop.f32.mrf.mxu0
      %v1120 = vadd.f32 0.0, %v1119
      %v1121 = vpop.f32.mrf.mxu0
      %1122 = vmatprep.mubr.bf16.mxu0 0
      %1123 = vmatmul.mubr.bf16.gmra.mxu0 %v710
      %v1124 = vpop.f32.mrf.mxu0
      %v1125 = vadd.f32 0.0, %v1124
      %v1126 = vpop.f32.mrf.mxu0
      %v1127 = vpop.f32.mrf.mxu0
      %v1128 = vadd.f32 0.0, %v1127
      %v1129 = vpop.f32.mrf.mxu0
      %1130 = vmatprep.mubr.bf16.mxu0 0
      %1131 = vmatmul.mubr.bf16.gmra.mxu0 %v713
      %v1132 = vpop.f32.mrf.mxu0
      %v1133 = vadd.f32 0.0, %v1132
      %v1134 = vpop.f32.mrf.mxu0
      %v1135 = vpop.f32.mrf.mxu0
      %v1136 = vadd.f32 0.0, %v1135
      %v1137 = vpop.f32.mrf.mxu0
      %1138 = vmatprep.mubr.bf16.mxu0 0
      %1139 = vmatmul.mubr.bf16.gmra.mxu0 %v716
      %v1140 = vpop.f32.mrf.mxu0
      %v1141 = vadd.f32 0.0, %v1140
      %v1142 = vpop.f32.mrf.mxu0
      %v1143 = vpop.f32.mrf.mxu0
      %v1144 = vadd.f32 0.0, %v1143
      %v1145 = vpop.f32.mrf.mxu0
      %1146 = vmatprep.mubr.bf16.mxu0 0
      %1147 = vmatmul.mubr.bf16.gmra.mxu0 %v719
      %v1148 = vpop.f32.mrf.mxu0
      %v1149 = vadd.f32 0.0, %v1148
      %v1150 = vpop.f32.mrf.mxu0
      %v1151 = vpop.f32.mrf.mxu0
      %v1152 = vadd.f32 0.0, %v1151
      %v1153 = vpop.f32.mrf.mxu0
      %1154 = vmatprep.mubr.bf16.mxu0 0
      %1155 = vmatmul.mubr.bf16.gmra.mxu0 %v722
      %v1156 = vpop.f32.mrf.mxu0
      %v1157 = vadd.f32 0.0, %v1156
      %v1158 = vpop.f32.mrf.mxu0
      %v1159 = vpop.f32.mrf.mxu0
      %v1160 = vadd.f32 0.0, %v1159
      %v1161 = vpop.f32.mrf.mxu0
      %1162 = vmatprep.mubr.bf16.mxu0 0
      %1163 = vmatmul.mubr.bf16.gmra.mxu0 %v725
      %v1164 = vpop.f32.mrf.mxu0
      %v1165 = vadd.f32 0.0, %v1164
      %v1166 = vpop.f32.mrf.mxu0
      %v1167 = vpop.f32.mrf.mxu0
      %v1168 = vadd.f32 0.0, %v1167
      %v1169 = vpop.f32.mrf.mxu0
      %1170 = vmatprep.mubr.bf16.mxu0 0
      %1171 = vmatmul.mubr.bf16.gmra.mxu0 %v728
      %v1172 = vpop.f32.mrf.mxu0
      %v1173 = vadd.f32 0.0, %v1172
      %v1174 = vpop.f32.mrf.mxu0
      %v1175 = vpop.f32.mrf.mxu0
      %v1176 = vadd.f32 0.0, %v1175
      %v1177 = vpop.f32.mrf.mxu0
      %1178 = vmatprep.mubr.bf16.mxu0 0
      %1179 = vmatmul.mubr.bf16.gmra.mxu0 %v731
      %v1180 = vpop.f32.mrf.mxu0
      %v1181 = vadd.f32 0.0, %v1180
      %v1182 = vpop.f32.mrf.mxu0
      %v1183 = vpop.f32.mrf.mxu0
      %v1184 = vadd.f32 0.0, %v1183
      %v1185 = vpop.f32.mrf.mxu0
      %1186 = vmatprep.mubr.bf16.mxu0 0
      %1187 = vmatmul.mubr.bf16.gmra.mxu0 %v734
      %v1188 = vpop.f32.mrf.mxu0
      %v1189 = vadd.f32 0.0, %v1188
      %v1190 = vpop.f32.mrf.mxu0
      %v1191 = vpop.f32.mrf.mxu0
      %v1192 = vadd.f32 0.0, %v1191
      %v1193 = vpop.f32.mrf.mxu0
      %1194 = vmatprep.mubr.bf16.mxu0 0
      %1195 = vmatmul.mubr.bf16.gmra.mxu0 %v737
      %v1196 = vpop.f32.mrf.mxu0
      %v1197 = vadd.f32 0.0, %v1196
      %v1198 = vpop.f32.mrf.mxu0
      %v1199 = vpop.f32.mrf.mxu0
      %v1200 = vadd.f32 0.0, %v1199
      %v1201 = vpop.f32.mrf.mxu0
      %1202 = vmatprep.mubr.bf16.mxu0 0
      %1203 = vmatmul.mubr.bf16.gmra.mxu0 %v740
      %v1204 = vpop.f32.mrf.mxu0
      %v1205 = vadd.f32 0.0, %v1204
      %v1206 = vpop.f32.mrf.mxu0
      %v1207 = vpop.f32.mrf.mxu0
      %v1208 = vadd.f32 0.0, %v1207
      %v1209 = vpop.f32.mrf.mxu0
      %1210 = vmatprep.mubr.bf16.mxu0 0
      %1211 = vmatmul.mubr.bf16.gmra.mxu0 %v743
      %v1212 = vpop.f32.mrf.mxu0
      %v1213 = vadd.f32 0.0, %v1212
      %v1214 = vpop.f32.mrf.mxu0
      %v1215 = vpop.f32.mrf.mxu0
      %v1216 = vadd.f32 0.0, %v1215
      %v1217 = vpop.f32.mrf.mxu0
      %1218 = vmatprep.mubr.bf16.mxu0 0
      %1219 = vmatmul.mubr.bf16.gmra.mxu0 %v746
      %v1220 = vpop.f32.mrf.mxu0
      %v1221 = vadd.f32 0.0, %v1220
      %v1222 = vpop.f32.mrf.mxu0
      %v1223 = vpop.f32.mrf.mxu0
      %v1224 = vadd.f32 0.0, %v1223
      %v1225 = vpop.f32.mrf.mxu0
      %1226 = vmatprep.mubr.bf16.mxu0 0
      %1227 = vmatmul.mubr.bf16.gmra.mxu0 %v749
      %v1228 = vpop.f32.mrf.mxu0
      %v1229 = vadd.f32 0.0, %v1228
      %v1230 = vpop.f32.mrf.mxu0
      %v1231 = vpop.f32.mrf.mxu0
      %v1232 = vadd.f32 0.0, %v1231
      %v1233 = vpop.f32.mrf.mxu0
      %1234 = vmatprep.mubr.bf16.mxu0 0
      %1235 = vmatmul.mubr.bf16.gmra.mxu0 %v752
      %v1236 = vpop.f32.mrf.mxu0
      %v1237 = vadd.f32 0.0, %v1236
      %v1238 = vpop.f32.mrf.mxu0
      %v1239 = vpop.f32.mrf.mxu0
      %v1240 = vadd.f32 0.0, %v1239
      %v1241 = vpop.f32.mrf.mxu0
      %1242 = vmatprep.mubr.bf16.mxu0 0
      %1243 = vmatmul.mubr.bf16.gmra.mxu0 %v755
      %v1244 = vpop.f32.mrf.mxu0
      %v1245 = vadd.f32 0.0, %v1244
      %v1246 = vpop.f32.mrf.mxu0
      %v1247 = vpop.f32.mrf.mxu0
      %v1248 = vadd.f32 0.0, %v1247
      %v1249 = vpop.f32.mrf.mxu0
      %1250 = vmatprep.mubr.bf16.mxu0 0
      %1251 = vmatmul.mubr.bf16.gmra.mxu0 %v758
      %v1252 = vpop.f32.mrf.mxu0
      %v1253 = vadd.f32 0.0, %v1252
      %v1254 = vpop.f32.mrf.mxu0
      %v1255 = vpop.f32.mrf.mxu0
      %v1256 = vadd.f32 0.0, %v1255
      %v1257 = vpop.f32.mrf.mxu0
      %1258 = vmatprep.mubr.bf16.mxu0 0
      %1259 = vmatmul.mubr.bf16.gmra.mxu0 %v761
      %v1260 = vpop.f32.mrf.mxu0
      %v1261 = vadd.f32 0.0, %v1260
      %v1262 = vpop.f32.mrf.mxu0
      %v1263 = vpop.f32.mrf.mxu0
      %v1264 = vadd.f32 0.0, %v1263
      %v1265 = vpop.f32.mrf.mxu0
      %1266 = vmatprep.mubr.bf16.mxu0 0
      %1267 = vmatmul.mubr.bf16.gmra.mxu0 %v764
      %v1268 = vpop.f32.mrf.mxu0
      %v1269 = vadd.f32 0.0, %v1268
      %v1270 = vpop.f32.mrf.mxu0
      %v1271 = vpop.f32.mrf.mxu0
      %v1272 = vadd.f32 0.0, %v1271
      %v1273 = vpop.f32.mrf.mxu0
      %1274 = vmatprep.mubr.bf16.mxu0 0
      %1275 = vmatmul.mubr.bf16.gmra.mxu0 %v767
      %v1276 = vpop.f32.mrf.mxu0
      %v1277 = vadd.f32 0.0, %v1276
      %v1278 = vpop.f32.mrf.mxu0
      %v1279 = vpop.f32.mrf.mxu0
      %v1280 = vadd.f32 0.0, %v1279
      %v1281 = vpop.f32.mrf.mxu0
      %1282 = vmatprep.mubr.bf16.mxu0 0
      %1283 = vmatmul.mubr.bf16.gmra.mxu0 %v770
      %v1284 = vpop.f32.mrf.mxu0
      %v1285 = vadd.f32 0.0, %v1284
      %v1286 = vpop.f32.mrf.mxu0
      %v1287 = vpop.f32.mrf.mxu0
      %v1288 = vadd.f32 0.0, %v1287
      %v1289 = vpop.f32.mrf.mxu0
      %1290 = vmatprep.mubr.bf16.mxu0 0
      %1291 = vmatmul.mubr.bf16.gmra.mxu0 %v773
      %v1292 = vpop.f32.mrf.mxu0
      %v1293 = vadd.f32 0.0, %v1292
      %v1294 = vpop.f32.mrf.mxu0
      %v1295 = vpop.f32.mrf.mxu0
      %v1296 = vadd.f32 0.0, %v1295
      %v1297 = vpop.f32.mrf.mxu0
      %1298 = vmatprep.mubr.bf16.mxu0 0
      %1299 = vmatmul.mubr.bf16.gmra.mxu0 %v776
      %v1300 = vpop.f32.mrf.mxu0
      %v1301 = vadd.f32 0.0, %v1300
      %v1302 = vpop.f32.mrf.mxu0
      %v1303 = vpop.f32.mrf.mxu0
      %v1304 = vadd.f32 0.0, %v1303
      %v1305 = vpop.f32.mrf.mxu0
      %1306 = vmatprep.mubr.bf16.mxu0 0
      %1307 = vmatmul.mubr.bf16.gmra.mxu0 %v779
      %v1308 = vpop.f32.mrf.mxu0
      %v1309 = vadd.f32 0.0, %v1308
      %v1310 = vpop.f32.mrf.mxu0
      %v1311 = vpop.f32.mrf.mxu0
      %v1312 = vadd.f32 0.0, %v1311
      %v1313 = vpop.f32.mrf.mxu0
      %1314 = vmatprep.mubr.bf16.mxu0 0
      %1315 = vmatmul.mubr.bf16.gmra.mxu0 %v782
      %v1316 = vpop.f32.mrf.mxu0
      %v1317 = vadd.f32 0.0, %v1316
      %v1318 = vpop.f32.mrf.mxu0
      %v1319 = vpop.f32.mrf.mxu0
      %v1320 = vadd.f32 0.0, %v1319
      %v1321 = vpop.f32.mrf.mxu0
      %1322 = vmatprep.mubr.bf16.mxu0 0
      %1323 = vmatmul.mubr.bf16.gmra.mxu0 %v785
      %v1324 = vpop.f32.mrf.mxu0
      %v1325 = vadd.f32 0.0, %v1324
      %v1326 = vpop.f32.mrf.mxu0
      %v1327 = vpop.f32.mrf.mxu0
      %v1328 = vadd.f32 0.0, %v1327
      %v1329 = vpop.f32.mrf.mxu0
      %1330 = vmatprep.mubr.bf16.mxu0 0
      %1331 = vmatmul.mubr.bf16.gmra.mxu0 %v788
      %v1332 = vpop.f32.mrf.mxu0
      %v1333 = vadd.f32 0.0, %v1332
      %v1334 = vpop.f32.mrf.mxu0
      %v1335 = vpop.f32.mrf.mxu0
      %v1336 = vadd.f32 0.0, %v1335
      %v1337 = vpop.f32.mrf.mxu0
      %1338 = vdwg.mxu0
      %v1339 = vpack.c.bf16 %v832, %v829
      %v1340 = vpack.c.bf16 %v840, %v837
      %v1341 = vpack.c.bf16 %v848, %v845
      %v1342 = vpack.c.bf16 %v856, %v853
      %v1343 = vpack.c.bf16 %v864, %v861
      %v1344 = vpack.c.bf16 %v872, %v869
      %v1345 = vpack.c.bf16 %v880, %v877
      %v1346 = vpack.c.bf16 %v888, %v885
      %v1347 = vpack.c.bf16 %v896, %v893
      %v1348 = vpack.c.bf16 %v904, %v901
      %v1349 = vpack.c.bf16 %v912, %v909
      %v1350 = vpack.c.bf16 %v920, %v917
      %v1351 = vpack.c.bf16 %v928, %v925
      %v1352 = vpack.c.bf16 %v936, %v933
      %v1353 = vpack.c.bf16 %v944, %v941
      %v1354 = vpack.c.bf16 %v952, %v949
      %v1355 = vpack.c.bf16 %v960, %v957
      %v1356 = vpack.c.bf16 %v968, %v965
      %v1357 = vpack.c.bf16 %v976, %v973
      %v1358 = vpack.c.bf16 %v984, %v981
      %v1359 = vpack.c.bf16 %v992, %v989
      %v1360 = vpack.c.bf16 %v1000, %v997
      %v1361 = vpack.c.bf16 %v1008, %v1005
      %v1362 = vpack.c.bf16 %v1016, %v1013
      %v1363 = vpack.c.bf16 %v1024, %v1021
      %v1364 = vpack.c.bf16 %v1032, %v1029
      %v1365 = vpack.c.bf16 %v1040, %v1037
      %v1366 = vpack.c.bf16 %v1048, %v1045
      %v1367 = vpack.c.bf16 %v1056, %v1053
      %v1368 = vpack.c.bf16 %v1064, %v1061
      %v1369 = vpack.c.bf16 %v1072, %v1069
      %v1370 = vpack.c.bf16 %v1080, %v1077
      %v1371 = vpack.c.bf16 %v1088, %v1085
      %v1372 = vpack.c.bf16 %v1096, %v1093
      %v1373 = vpack.c.bf16 %v1104, %v1101
      %v1374 = vpack.c.bf16 %v1112, %v1109
      %v1375 = vpack.c.bf16 %v1120, %v1117
      %v1376 = vpack.c.bf16 %v1128, %v1125
      %v1377 = vpack.c.bf16 %v1136, %v1133
      %v1378 = vpack.c.bf16 %v1144, %v1141
      %v1379 = vpack.c.bf16 %v1152, %v1149
      %v1380 = vpack.c.bf16 %v1160, %v1157
      %v1381 = vpack.c.bf16 %v1168, %v1165
      %v1382 = vpack.c.bf16 %v1176, %v1173
      %v1383 = vpack.c.bf16 %v1184, %v1181
      %v1384 = vpack.c.bf16 %v1192, %v1189
      %v1385 = vpack.c.bf16 %v1200, %v1197
      %v1386 = vpack.c.bf16 %v1208, %v1205
      %v1387 = vpack.c.bf16 %v1216, %v1213
      %v1388 = vpack.c.bf16 %v1224, %v1221
      %v1389 = vpack.c.bf16 %v1232, %v1229
      %v1390 = vpack.c.bf16 %v1240, %v1237
      %v1391 = vpack.c.bf16 %v1248, %v1245
      %v1392 = vpack.c.bf16 %v1256, %v1253
      %v1393 = vpack.c.bf16 %v1264, %v1261
      %v1394 = vpack.c.bf16 %v1272, %v1269
      %v1395 = vpack.c.bf16 %v1280, %v1277
      %v1396 = vpack.c.bf16 %v1288, %v1285
      %v1397 = vpack.c.bf16 %v1296, %v1293
      %v1398 = vpack.c.bf16 %v1304, %v1301
      %v1399 = vpack.c.bf16 %v1312, %v1309
      %v1400 = vpack.c.bf16 %v1320, %v1317
      %v1401 = vpack.c.bf16 %v1328, %v1325
      %v1402 = vpack.c.bf16 %v1336, %v1333
      %v1467 = vunpack.c.l.b16 %v1339
      %v1468 = vunpack.c.h.b16 %v1339
      %v1469 = vunpack.c.l.b16 %v1340
      %v1470 = vunpack.c.h.b16 %v1340
      %v1471 = vunpack.c.l.b16 %v1341
      %v1472 = vunpack.c.h.b16 %v1341
      %v1473 = vunpack.c.l.b16 %v1342
      %v1474 = vunpack.c.h.b16 %v1342
      %v1475 = vunpack.c.l.b16 %v1343
      %v1476 = vunpack.c.h.b16 %v1343
      %v1477 = vunpack.c.l.b16 %v1344
      %v1478 = vunpack.c.h.b16 %v1344
      %v1479 = vunpack.c.l.b16 %v1345
      %v1480 = vunpack.c.h.b16 %v1345
      %v1481 = vunpack.c.l.b16 %v1346
      %v1482 = vunpack.c.h.b16 %v1346
      %v1483 = vunpack.c.l.b16 %v1347
      %v1484 = vunpack.c.h.b16 %v1347
      %v1485 = vunpack.c.l.b16 %v1348
      %v1486 = vunpack.c.h.b16 %v1348
      %v1487 = vunpack.c.l.b16 %v1349
      %v1488 = vunpack.c.h.b16 %v1349
      %v1489 = vunpack.c.l.b16 %v1350
      %v1490 = vunpack.c.h.b16 %v1350
      %v1491 = vunpack.c.l.b16 %v1351
      %v1492 = vunpack.c.h.b16 %v1351
      %v1493 = vunpack.c.l.b16 %v1352
      %v1494 = vunpack.c.h.b16 %v1352
      %v1495 = vunpack.c.l.b16 %v1353
      %v1496 = vunpack.c.h.b16 %v1353
      %v1497 = vunpack.c.l.b16 %v1354
      %v1498 = vunpack.c.h.b16 %v1354
      %v1499 = vunpack.c.l.b16 %v1355
      %v1500 = vunpack.c.h.b16 %v1355
      %v1501 = vunpack.c.l.b16 %v1356
      %v1502 = vunpack.c.h.b16 %v1356
      %v1503 = vunpack.c.l.b16 %v1357
      %v1504 = vunpack.c.h.b16 %v1357
      %v1505 = vunpack.c.l.b16 %v1358
      %v1506 = vunpack.c.h.b16 %v1358
      %v1507 = vunpack.c.l.b16 %v1359
      %v1508 = vunpack.c.h.b16 %v1359
      %v1509 = vunpack.c.l.b16 %v1360
      %v1510 = vunpack.c.h.b16 %v1360
      %v1511 = vunpack.c.l.b16 %v1361
      %v1512 = vunpack.c.h.b16 %v1361
      %v1513 = vunpack.c.l.b16 %v1362
      %v1514 = vunpack.c.h.b16 %v1362
      %v1515 = vunpack.c.l.b16 %v1363
      %v1516 = vunpack.c.h.b16 %v1363
      %v1517 = vunpack.c.l.b16 %v1364
      %v1518 = vunpack.c.h.b16 %v1364
      %v1519 = vunpack.c.l.b16 %v1365
      %v1520 = vunpack.c.h.b16 %v1365
      %v1521 = vunpack.c.l.b16 %v1366
      %v1522 = vunpack.c.h.b16 %v1366
      %v1523 = vunpack.c.l.b16 %v1367
      %v1524 = vunpack.c.h.b16 %v1367
      %v1525 = vunpack.c.l.b16 %v1368
      %v1526 = vunpack.c.h.b16 %v1368
      %v1527 = vunpack.c.l.b16 %v1369
      %v1528 = vunpack.c.h.b16 %v1369
      %v1529 = vunpack.c.l.b16 %v1370
      %v1530 = vunpack.c.h.b16 %v1370
      %v1531 = vunpack.c.l.b16 %v1371
      %v1532 = vunpack.c.h.b16 %v1371
      %v1533 = vunpack.c.l.b16 %v1372
      %v1534 = vunpack.c.h.b16 %v1372
      %v1535 = vunpack.c.l.b16 %v1373
      %v1536 = vunpack.c.h.b16 %v1373
      %v1537 = vunpack.c.l.b16 %v1374
      %v1538 = vunpack.c.h.b16 %v1374
      %v1539 = vunpack.c.l.b16 %v1375
      %v1540 = vunpack.c.h.b16 %v1375
      %v1541 = vunpack.c.l.b16 %v1376
      %v1542 = vunpack.c.h.b16 %v1376
      %v1543 = vunpack.c.l.b16 %v1377
      %v1544 = vunpack.c.h.b16 %v1377
      %v1545 = vunpack.c.l.b16 %v1378
      %v1546 = vunpack.c.h.b16 %v1378
      %v1547 = vunpack.c.l.b16 %v1379
      %v1548 = vunpack.c.h.b16 %v1379
      %v1549 = vunpack.c.l.b16 %v1380
      %v1550 = vunpack.c.h.b16 %v1380
      %v1551 = vunpack.c.l.b16 %v1381
      %v1552 = vunpack.c.h.b16 %v1381
      %v1553 = vunpack.c.l.b16 %v1382
      %v1554 = vunpack.c.h.b16 %v1382
      %v1555 = vunpack.c.l.b16 %v1383
      %v1556 = vunpack.c.h.b16 %v1383
      %v1557 = vunpack.c.l.b16 %v1384
      %v1558 = vunpack.c.h.b16 %v1384
      %v1559 = vunpack.c.l.b16 %v1385
      %v1560 = vunpack.c.h.b16 %v1385
      %v1561 = vunpack.c.l.b16 %v1386
      %v1562 = vunpack.c.h.b16 %v1386
      %v1563 = vunpack.c.l.b16 %v1387
      %v1564 = vunpack.c.h.b16 %v1387
      %v1565 = vunpack.c.l.b16 %v1388
      %v1566 = vunpack.c.h.b16 %v1388
      %v1567 = vunpack.c.l.b16 %v1389
      %v1568 = vunpack.c.h.b16 %v1389
      %v1569 = vunpack.c.l.b16 %v1390
      %v1570 = vunpack.c.h.b16 %v1390
      %v1571 = vunpack.c.l.b16 %v1391
      %v1572 = vunpack.c.h.b16 %v1391
      %v1573 = vunpack.c.l.b16 %v1392
      %v1574 = vunpack.c.h.b16 %v1392
      %v1575 = vunpack.c.l.b16 %v1393
      %v1576 = vunpack.c.h.b16 %v1393
      %v1577 = vunpack.c.l.b16 %v1394
      %v1578 = vunpack.c.h.b16 %v1394
      %v1579 = vunpack.c.l.b16 %v1395
      %v1580 = vunpack.c.h.b16 %v1395
      %v1581 = vunpack.c.l.b16 %v1396
      %v1582 = vunpack.c.h.b16 %v1396
      %v1583 = vunpack.c.l.b16 %v1397
      %v1584 = vunpack.c.h.b16 %v1397
      %v1585 = vunpack.c.l.b16 %v1398
      %v1586 = vunpack.c.h.b16 %v1398
      %v1587 = vunpack.c.l.b16 %v1399
      %v1588 = vunpack.c.h.b16 %v1399
      %v1589 = vunpack.c.l.b16 %v1400
      %v1590 = vunpack.c.h.b16 %v1400
      %v1591 = vunpack.c.l.b16 %v1401
      %v1592 = vunpack.c.h.b16 %v1401
      %v1593 = vunpack.c.l.b16 %v1402
      %v1594 = vunpack.c.h.b16 %v1402
      %v1595 = vpack.c.b16 %v1467, %v1467
      %v1596 = vpack.c.b16 %v1468, %v1468
      %v1597 = vpack.c.b16 %v1469, %v1469
      %v1598 = vpack.c.b16 %v1470, %v1470
      %v1599 = vpack.c.b16 %v1471, %v1471
      %v1600 = vpack.c.b16 %v1472, %v1472
      %v1601 = vpack.c.b16 %v1473, %v1473
      %v1602 = vpack.c.b16 %v1474, %v1474
      %v1603 = vpack.c.b16 %v1475, %v1475
      %v1604 = vpack.c.b16 %v1476, %v1476
      %v1605 = vpack.c.b16 %v1477, %v1477
      %v1606 = vpack.c.b16 %v1478, %v1478
      %v1607 = vpack.c.b16 %v1479, %v1479
      %v1608 = vpack.c.b16 %v1480, %v1480
      %v1609 = vpack.c.b16 %v1481, %v1481
      %v1610 = vpack.c.b16 %v1482, %v1482
      %v1611 = vpack.c.b16 %v1483, %v1483
      %v1612 = vpack.c.b16 %v1484, %v1484
      %v1613 = vpack.c.b16 %v1485, %v1485
      %v1614 = vpack.c.b16 %v1486, %v1486
      %v1615 = vpack.c.b16 %v1487, %v1487
      %v1616 = vpack.c.b16 %v1488, %v1488
      %v1617 = vpack.c.b16 %v1489, %v1489
      %v1618 = vpack.c.b16 %v1490, %v1490
      %v1619 = vpack.c.b16 %v1491, %v1491
      %v1620 = vpack.c.b16 %v1492, %v1492
      %v1621 = vpack.c.b16 %v1493, %v1493
      %v1622 = vpack.c.b16 %v1494, %v1494
      %v1623 = vpack.c.b16 %v1495, %v1495
      %v1624 = vpack.c.b16 %v1496, %v1496
      %v1625 = vpack.c.b16 %v1497, %v1497
      %v1626 = vpack.c.b16 %v1498, %v1498
      %v1627 = vpack.c.b16 %v1499, %v1499
      %v1628 = vpack.c.b16 %v1500, %v1500
      %v1629 = vpack.c.b16 %v1501, %v1501
      %v1630 = vpack.c.b16 %v1502, %v1502
      %v1631 = vpack.c.b16 %v1503, %v1503
      %v1632 = vpack.c.b16 %v1504, %v1504
      %v1633 = vpack.c.b16 %v1505, %v1505
      %v1634 = vpack.c.b16 %v1506, %v1506
      %v1635 = vpack.c.b16 %v1507, %v1507
      %v1636 = vpack.c.b16 %v1508, %v1508
      %v1637 = vpack.c.b16 %v1509, %v1509
      %v1638 = vpack.c.b16 %v1510, %v1510
      %v1639 = vpack.c.b16 %v1511, %v1511
      %v1640 = vpack.c.b16 %v1512, %v1512
      %v1641 = vpack.c.b16 %v1513, %v1513
      %v1642 = vpack.c.b16 %v1514, %v1514
      %v1643 = vpack.c.b16 %v1515, %v1515
      %v1644 = vpack.c.b16 %v1516, %v1516
      %v1645 = vpack.c.b16 %v1517, %v1517
      %v1646 = vpack.c.b16 %v1518, %v1518
      %v1647 = vpack.c.b16 %v1519, %v1519
      %v1648 = vpack.c.b16 %v1520, %v1520
      %v1649 = vpack.c.b16 %v1521, %v1521
      %v1650 = vpack.c.b16 %v1522, %v1522
      %v1651 = vpack.c.b16 %v1523, %v1523
      %v1652 = vpack.c.b16 %v1524, %v1524
      %v1653 = vpack.c.b16 %v1525, %v1525
      %v1654 = vpack.c.b16 %v1526, %v1526
      %v1655 = vpack.c.b16 %v1527, %v1527
      %v1656 = vpack.c.b16 %v1528, %v1528
      %v1657 = vpack.c.b16 %v1529, %v1529
      %v1658 = vpack.c.b16 %v1530, %v1530
      %v1659 = vpack.c.b16 %v1531, %v1531
      %v1660 = vpack.c.b16 %v1532, %v1532
      %v1661 = vpack.c.b16 %v1533, %v1533
      %v1662 = vpack.c.b16 %v1534, %v1534
      %v1663 = vpack.c.b16 %v1535, %v1535
      %v1664 = vpack.c.b16 %v1536, %v1536
      %v1665 = vpack.c.b16 %v1537, %v1537
      %v1666 = vpack.c.b16 %v1538, %v1538
      %v1667 = vpack.c.b16 %v1539, %v1539
      %v1668 = vpack.c.b16 %v1540, %v1540
      %v1669 = vpack.c.b16 %v1541, %v1541
      %v1670 = vpack.c.b16 %v1542, %v1542
      %v1671 = vpack.c.b16 %v1543, %v1543
      %v1672 = vpack.c.b16 %v1544, %v1544
      %v1673 = vpack.c.b16 %v1545, %v1545
      %v1674 = vpack.c.b16 %v1546, %v1546
      %v1675 = vpack.c.b16 %v1547, %v1547
      %v1676 = vpack.c.b16 %v1548, %v1548
      %v1677 = vpack.c.b16 %v1549, %v1549
      %v1678 = vpack.c.b16 %v1550, %v1550
      %v1679 = vpack.c.b16 %v1551, %v1551
      %v1680 = vpack.c.b16 %v1552, %v1552
      %v1681 = vpack.c.b16 %v1553, %v1553
      %v1682 = vpack.c.b16 %v1554, %v1554
      %v1683 = vpack.c.b16 %v1555, %v1555
      %v1684 = vpack.c.b16 %v1556, %v1556
      %v1685 = vpack.c.b16 %v1557, %v1557
      %v1686 = vpack.c.b16 %v1558, %v1558
      %v1687 = vpack.c.b16 %v1559, %v1559
      %v1688 = vpack.c.b16 %v1560, %v1560
      %v1689 = vpack.c.b16 %v1561, %v1561
      %v1690 = vpack.c.b16 %v1562, %v1562
      %v1691 = vpack.c.b16 %v1563, %v1563
      %v1692 = vpack.c.b16 %v1564, %v1564
      %v1693 = vpack.c.b16 %v1565, %v1565
      %v1694 = vpack.c.b16 %v1566, %v1566
      %v1695 = vpack.c.b16 %v1567, %v1567
      %v1696 = vpack.c.b16 %v1568, %v1568
      %v1697 = vpack.c.b16 %v1569, %v1569
      %v1698 = vpack.c.b16 %v1570, %v1570
      %v1699 = vpack.c.b16 %v1571, %v1571
      %v1700 = vpack.c.b16 %v1572, %v1572
      %v1701 = vpack.c.b16 %v1573, %v1573
      %v1702 = vpack.c.b16 %v1574, %v1574
      %v1703 = vpack.c.b16 %v1575, %v1575
      %v1704 = vpack.c.b16 %v1576, %v1576
      %v1705 = vpack.c.b16 %v1577, %v1577
      %v1706 = vpack.c.b16 %v1578, %v1578
      %v1707 = vpack.c.b16 %v1579, %v1579
      %v1708 = vpack.c.b16 %v1580, %v1580
      %v1709 = vpack.c.b16 %v1581, %v1581
      %v1710 = vpack.c.b16 %v1582, %v1582
      %v1711 = vpack.c.b16 %v1583, %v1583
      %v1712 = vpack.c.b16 %v1584, %v1584
      %v1713 = vpack.c.b16 %v1585, %v1585
      %v1714 = vpack.c.b16 %v1586, %v1586
      %v1715 = vpack.c.b16 %v1587, %v1587
      %v1716 = vpack.c.b16 %v1588, %v1588
      %v1717 = vpack.c.b16 %v1589, %v1589
      %v1718 = vpack.c.b16 %v1590, %v1590
      %v1719 = vpack.c.b16 %v1591, %v1591
      %v1720 = vpack.c.b16 %v1592, %v1592
      %v1721 = vpack.c.b16 %v1593, %v1593
      %v1722 = vpack.c.b16 %v1594, %v1594
      %1851 = vst [vmem:[%s145] sm:$0xf] %v1595
      %1852 = vst [vmem:[%s145 + $0x4] sm:$0xf] %v1596
      %1853 = vst [vmem:[%s145 + $0x8] sm:$0xf] %v1597
      %1854 = vst [vmem:[%s145 + $0xc] sm:$0xf] %v1598
      %1855 = vst [vmem:[%s145 + $0x10] sm:$0xf] %v1599
      %1856 = vst [vmem:[%s145 + $0x14] sm:$0xf] %v1600
      %1857 = vst [vmem:[%s145 + $0x18] sm:$0xf] %v1601
      %1858 = vst [vmem:[%s145 + $0x1c] sm:$0xf] %v1602
      %1859 = vst [vmem:[%s145 + $0x20] sm:$0xf] %v1603
      %1860 = vst [vmem:[%s145 + $0x24] sm:$0xf] %v1604
      %1861 = vst [vmem:[%s145 + $0x28] sm:$0xf] %v1605
      %1862 = vst [vmem:[%s145 + $0x2c] sm:$0xf] %v1606
      %1863 = vst [vmem:[%s145 + $0x30] sm:$0xf] %v1607
      %1864 = vst [vmem:[%s145 + $0x34] sm:$0xf] %v1608
      %1865 = vst [vmem:[%s145 + $0x38] sm:$0xf] %v1609
      %1866 = vst [vmem:[%s145 + $0x3c] sm:$0xf] %v1610
      %1867 = vst [vmem:[%s145 + $0x40] sm:$0xf] %v1611
      %1868 = vst [vmem:[%s145 + $0x44] sm:$0xf] %v1612
      %1869 = vst [vmem:[%s145 + $0x48] sm:$0xf] %v1613
      %1870 = vst [vmem:[%s145 + $0x4c] sm:$0xf] %v1614
      %1871 = vst [vmem:[%s145 + $0x50] sm:$0xf] %v1615
      %1872 = vst [vmem:[%s145 + $0x54] sm:$0xf] %v1616
      %1873 = vst [vmem:[%s145 + $0x58] sm:$0xf] %v1617
      %1874 = vst [vmem:[%s145 + $0x5c] sm:$0xf] %v1618
      %1875 = vst [vmem:[%s145 + $0x60] sm:$0xf] %v1619
      %1876 = vst [vmem:[%s145 + $0x64] sm:$0xf] %v1620
      %1877 = vst [vmem:[%s145 + $0x68] sm:$0xf] %v1621
      %1878 = vst [vmem:[%s145 + $0x6c] sm:$0xf] %v1622
      %1879 = vst [vmem:[%s145 + $0x70] sm:$0xf] %v1623
      %1880 = vst [vmem:[%s145 + $0x74] sm:$0xf] %v1624
      %1881 = vst [vmem:[%s145 + $0x78] sm:$0xf] %v1625
      %1882 = vst [vmem:[%s145 + $0x7c] sm:$0xf] %v1626
      %1883 = vst [vmem:[%s145 + $0x80] sm:$0xf] %v1627
      %1884 = vst [vmem:[%s145 + $0x84] sm:$0xf] %v1628
      %1885 = vst [vmem:[%s145 + $0x88] sm:$0xf] %v1629
      %1886 = vst [vmem:[%s145 + $0x8c] sm:$0xf] %v1630
      %1887 = vst [vmem:[%s145 + $0x90] sm:$0xf] %v1631
      %1888 = vst [vmem:[%s145 + $0x94] sm:$0xf] %v1632
      %1889 = vst [vmem:[%s145 + $0x98] sm:$0xf] %v1633
      %1890 = vst [vmem:[%s145 + $0x9c] sm:$0xf] %v1634
      %1891 = vst [vmem:[%s145 + $0xa0] sm:$0xf] %v1635
      %1892 = vst [vmem:[%s145 + $0xa4] sm:$0xf] %v1636
      %1893 = vst [vmem:[%s145 + $0xa8] sm:$0xf] %v1637
      %1894 = vst [vmem:[%s145 + $0xac] sm:$0xf] %v1638
      %1895 = vst [vmem:[%s145 + $0xb0] sm:$0xf] %v1639
      %1896 = vst [vmem:[%s145 + $0xb4] sm:$0xf] %v1640
      %1897 = vst [vmem:[%s145 + $0xb8] sm:$0xf] %v1641
      %1898 = vst [vmem:[%s145 + $0xbc] sm:$0xf] %v1642
      %1899 = vst [vmem:[%s145 + $0xc0] sm:$0xf] %v1643
      %1900 = vst [vmem:[%s145 + $0xc4] sm:$0xf] %v1644
      %1901 = vst [vmem:[%s145 + $0xc8] sm:$0xf] %v1645
      %1902 = vst [vmem:[%s145 + $0xcc] sm:$0xf] %v1646
      %1903 = vst [vmem:[%s145 + $0xd0] sm:$0xf] %v1647
      %1904 = vst [vmem:[%s145 + $0xd4] sm:$0xf] %v1648
      %1905 = vst [vmem:[%s145 + $0xd8] sm:$0xf] %v1649
      %1906 = vst [vmem:[%s145 + $0xdc] sm:$0xf] %v1650
      %1907 = vst [vmem:[%s145 + $0xe0] sm:$0xf] %v1651
      %1908 = vst [vmem:[%s145 + $0xe4] sm:$0xf] %v1652
      %1909 = vst [vmem:[%s145 + $0xe8] sm:$0xf] %v1653
      %1910 = vst [vmem:[%s145 + $0xec] sm:$0xf] %v1654
      %1911 = vst [vmem:[%s145 + $0xf0] sm:$0xf] %v1655
      %1912 = vst [vmem:[%s145 + $0xf4] sm:$0xf] %v1656
      %1913 = vst [vmem:[%s145 + $0xf8] sm:$0xf] %v1657
      %1914 = vst [vmem:[%s145 + $0xfc] sm:$0xf] %v1658
      %1915 = vst [vmem:[%s145 + $0x100] sm:$0xf] %v1659
      %1916 = vst [vmem:[%s145 + $0x104] sm:$0xf] %v1660
      %1917 = vst [vmem:[%s145 + $0x108] sm:$0xf] %v1661
      %1918 = vst [vmem:[%s145 + $0x10c] sm:$0xf] %v1662
      %1919 = vst [vmem:[%s145 + $0x110] sm:$0xf] %v1663
      %1920 = vst [vmem:[%s145 + $0x114] sm:$0xf] %v1664
      %1921 = vst [vmem:[%s145 + $0x118] sm:$0xf] %v1665
      %1922 = vst [vmem:[%s145 + $0x11c] sm:$0xf] %v1666
      %1923 = vst [vmem:[%s145 + $0x120] sm:$0xf] %v1667
      %1924 = vst [vmem:[%s145 + $0x124] sm:$0xf] %v1668
      %1925 = vst [vmem:[%s145 + $0x128] sm:$0xf] %v1669
      %1926 = vst [vmem:[%s145 + $0x12c] sm:$0xf] %v1670
      %1927 = vst [vmem:[%s145 + $0x130] sm:$0xf] %v1671
      %1928 = vst [vmem:[%s145 + $0x134] sm:$0xf] %v1672
      %1929 = vst [vmem:[%s145 + $0x138] sm:$0xf] %v1673
      %1930 = vst [vmem:[%s145 + $0x13c] sm:$0xf] %v1674
      %1931 = vst [vmem:[%s145 + $0x140] sm:$0xf] %v1675
      %1932 = vst [vmem:[%s145 + $0x144] sm:$0xf] %v1676
      %1933 = vst [vmem:[%s145 + $0x148] sm:$0xf] %v1677
      %1934 = vst [vmem:[%s145 + $0x14c] sm:$0xf] %v1678
      %1935 = vst [vmem:[%s145 + $0x150] sm:$0xf] %v1679
      %1936 = vst [vmem:[%s145 + $0x154] sm:$0xf] %v1680
      %1937 = vst [vmem:[%s145 + $0x158] sm:$0xf] %v1681
      %1938 = vst [vmem:[%s145 + $0x15c] sm:$0xf] %v1682
      %1939 = vst [vmem:[%s145 + $0x160] sm:$0xf] %v1683
      %1940 = vst [vmem:[%s145 + $0x164] sm:$0xf] %v1684
      %1941 = vst [vmem:[%s145 + $0x168] sm:$0xf] %v1685
      %1942 = vst [vmem:[%s145 + $0x16c] sm:$0xf] %v1686
      %1943 = vst [vmem:[%s145 + $0x170] sm:$0xf] %v1687
      %1944 = vst [vmem:[%s145 + $0x174] sm:$0xf] %v1688
      %1945 = vst [vmem:[%s145 + $0x178] sm:$0xf] %v1689
      %1946 = vst [vmem:[%s145 + $0x17c] sm:$0xf] %v1690
      %1947 = vst [vmem:[%s145 + $0x180] sm:$0xf] %v1691
      %1948 = vst [vmem:[%s145 + $0x184] sm:$0xf] %v1692
      %1949 = vst [vmem:[%s145 + $0x188] sm:$0xf] %v1693
      %1950 = vst [vmem:[%s145 + $0x18c] sm:$0xf] %v1694
      %1951 = vst [vmem:[%s145 + $0x190] sm:$0xf] %v1695
      %1952 = vst [vmem:[%s145 + $0x194] sm:$0xf] %v1696
      %1953 = vst [vmem:[%s145 + $0x198] sm:$0xf] %v1697
      %1954 = vst [vmem:[%s145 + $0x19c] sm:$0xf] %v1698
      %1955 = vst [vmem:[%s145 + $0x1a0] sm:$0xf] %v1699
      %1956 = vst [vmem:[%s145 + $0x1a4] sm:$0xf] %v1700
      %1957 = vst [vmem:[%s145 + $0x1a8] sm:$0xf] %v1701
      %1958 = vst [vmem:[%s145 + $0x1ac] sm:$0xf] %v1702
      %1959 = vst [vmem:[%s145 + $0x1b0] sm:$0xf] %v1703
      %1960 = vst [vmem:[%s145 + $0x1b4] sm:$0xf] %v1704
      %1961 = vst [vmem:[%s145 + $0x1b8] sm:$0xf] %v1705
      %1962 = vst [vmem:[%s145 + $0x1bc] sm:$0xf] %v1706
      %1963 = vst [vmem:[%s145 + $0x1c0] sm:$0xf] %v1707
      %1964 = vst [vmem:[%s145 + $0x1c4] sm:$0xf] %v1708
      %1965 = vst [vmem:[%s145 + $0x1c8] sm:$0xf] %v1709
      %1966 = vst [vmem:[%s145 + $0x1cc] sm:$0xf] %v1710
      %1967 = vst [vmem:[%s145 + $0x1d0] sm:$0xf] %v1711
      %1968 = vst [vmem:[%s145 + $0x1d4] sm:$0xf] %v1712
      %1969 = vst [vmem:[%s145 + $0x1d8] sm:$0xf] %v1713
      %1970 = vst [vmem:[%s145 + $0x1dc] sm:$0xf] %v1714
      %1971 = vst [vmem:[%s145 + $0x1e0] sm:$0xf] %v1715
      %1972 = vst [vmem:[%s145 + $0x1e4] sm:$0xf] %v1716
      %1973 = vst [vmem:[%s145 + $0x1e8] sm:$0xf] %v1717
      %1974 = vst [vmem:[%s145 + $0x1ec] sm:$0xf] %v1718
      %1975 = vst [vmem:[%s145 + $0x1f0] sm:$0xf] %v1719
      %1976 = vst [vmem:[%s145 + $0x1f4] sm:$0xf] %v1720
      %1977 = vst [vmem:[%s145 + $0x1f8] sm:$0xf] %v1721
      %1978 = vst [vmem:[%s145 + $0x1fc] sm:$0xf] %v1722
      %s1979 = smul.u32 128, %s13
      %p1980 = scmp.lt.s32.totalorder %s1979, 255
      %s1981 = scalar_select %p1980, %s1979, 255
      %s1982 = smul.addr %s1981, 4
      %s1983 = scalar_lea.vmem %s2, %s1982
      // Predicated region
      $region29: #{_lambda_.9} parent=27 // pred_check
        %p1984 = pneg %p78
      $region30: #{_lambda_.9} parent=27 // pred_check_branch
        %1986 = sbr.rel (%p1984) target = $region32
      $region31: #{_lambda_.9} parent=27 // pred_region
        %s1987 = smul.u32 128, %s13
      $region32: #{_lambda_.9} parent=27 // pred_fallthru
        _
    $region28: #{_lambda_.9} parent=5 // pred_fallthru
      _
    %p1988 = scmp.le.s32.totalorder 2, %s8
    // Predicated region
    $region33: #{_lambda_.9} parent=5 // pred_check
      %p1989 = pneg %p1988
    $region34: #{_lambda_.9} parent=5 // pred_check_branch
      %1991 = sbr.rel (%p1989) target = $region36
    $region35: #{_lambda_.9} parent=5 // pred_region
      %s1992 = ssub.s32 %s8, 2
      // Predicated region
      $region37: #{_lambda_.9} parent=35 // pred_check
        %p1993 = pneg %p84
      $region38: #{_lambda_.9} parent=35 // pred_check_branch
        %1995 = sbr.rel (%p1993) target = $region40
      $region39: #{_lambda_.9} parent=35 // pred_region
        %s1996 = smul.u32 128, %s14
        %p1997 = scmp.lt.s32.totalorder %s1996, 255
        %s1998 = scalar_select %p1997, %s1996, 255
        %s1999 = smul.addr %s1998, 4
        %s2000 = scalar_lea.vmem %s2, %s1999
      $region40: #{_lambda_.9} parent=35 // pred_fallthru
        _
    $region36: #{_lambda_.9} parent=5 // pred_fallthru
      _
  $region6: #{_lambda_.9} parent=0 // loop_footer
    %s12 = sadd.s32 1, %s8
  $region7: #{_lambda_.9} parent=0 // loop_footer_branch
    %7 = sbr.rel target = $region3
  $region8: #{_lambda_.9} parent=0 // loop_exit
    _

</llo_original>
